<compile_context>
chip_gen: v5e
topology: v5e:2x2
jax: 0.10.0
libtpu: 0.0.40
codegen_flags: <defaults>
</compile_context>

<pallas_src>
import functools

import jax
import jax.numpy as jnp
import numpy as np
from jax import lax
from jax.experimental import pallas as pl
from jax.experimental.pallas import tpu as pltpu

EPS = 1e-5
_VMEM_LIMIT = 32 * 1024 * 1024


def _compiler_params(n_axes=1):
    return pltpu.CompilerParams(
        dimension_semantics=("parallel",) * n_axes,
        vmem_limit_bytes=_VMEM_LIMIT,
    )


def _row_tile(m):
    # Largest convenient row tile that divides M exactly (avoids garbage rows in the
    # per-tile BN partial sums). ~512 rows reaches ~85% of HBM roofline when M is big.
    if m >= 1024 and m % 512 == 0:
        return 512
    for t in (256, 128, 64, 32, 16, 8):
        if m % t == 0:
            return t
    return m


# ----------------------------- Pallas kernels -----------------------------

def _pw_stats_kernel(x_ref, w_ref, y_ref, stats_ref):
    # 1x1 conv as matmul over a row tile; emit per-tile per-channel sum / sum-of-squares.
    y = jnp.dot(x_ref[...], w_ref[...], preferred_element_type=jnp.float32)
    y_ref[...] = y.astype(y_ref.dtype)
    c = y.shape[1]
    stats_ref[:, 0:1, :] = jnp.sum(y, axis=0, keepdims=True).reshape(1, 1, c)
    stats_ref[:, 1:2, :] = jnp.sum(y * y, axis=0, keepdims=True).reshape(1, 1, c)


def _pw_bnrelu_stats_kernel(x_ref, bn_ref, w_ref, y_ref, stats_ref):
    # Fused prologue: BN-apply + ReLU6 on the input tile, then 1x1 conv matmul + stats.
    xn = x_ref[...] * bn_ref[0:1, :] + bn_ref[1:2, :]
    xn = jnp.minimum(jnp.maximum(xn, 0.0), 6.0)
    y = jnp.dot(xn, w_ref[...], preferred_element_type=jnp.float32)
    y_ref[...] = y.astype(y_ref.dtype)
    c = y.shape[1]
    stats_ref[:, 0:1, :] = jnp.sum(y, axis=0, keepdims=True).reshape(1, 1, c)
    stats_ref[:, 1:2, :] = jnp.sum(y * y, axis=0, keepdims=True).reshape(1, 1, c)


def _dw_kernel(x_ref, bn_ref, w_ref, y_ref, stats_ref, xp_ref, *, stride):
    # x: (1, H, W, C) raw expand-conv output; bn: (2, C) [scale; shift] for BN1+ReLU6;
    # w: (3, 3, C); y: (1, Hout, Wout, C) raw depthwise output; stats: (1, 2, C) partials.
    # xp_ref: VMEM scratch (H+2, W+2, C) holding the zero-padded, BN1-applied activation.
    H, W = x_ref.shape[1], x_ref.shape[2]
    Hout, Wout, C = y_ref.shape[1], y_ref.shape[2], y_ref.shape[3]

    scale = bn_ref[0:1, :]          # (1, C) broadcasts over (H, W, C)
    shift = bn_ref[1:2, :]
    xn = x_ref[0] * scale + shift
    xn = jnp.minimum(jnp.maximum(xn, 0.0), 6.0)

    # In-kernel zero padding: no padded copy ever hits HBM.
    xp_ref[...] = jnp.zeros_like(xp_ref)
    xp_ref[1:H + 1, 1:W + 1, :] = xn

    # 9-tap depthwise accumulate, computing only the strided output positions.
    acc = jnp.zeros((Hout, Wout, C), jnp.float32)
    for kh in range(3):
        for kw in range(3):
            if stride == 1:
                win = xp_ref[kh:kh + Hout, kw:kw + Wout, :]
            else:
                win = xp_ref[pl.ds(kh, Hout, stride=stride),
                             pl.ds(kw, Wout, stride=stride), :]
            acc = acc + win * w_ref[kh:kh + 1, kw:kw + 1, :]

    y_ref[0] = acc.astype(y_ref.dtype)

    s = jnp.sum(jnp.sum(acc, axis=1, keepdims=True), axis=0, keepdims=True)      # (1,1,C)
    sq = acc * acc
    ss = jnp.sum(jnp.sum(sq, axis=1, keepdims=True), axis=0, keepdims=True)      # (1,1,C)
    stats_ref[:, 0:1, :] = s
    stats_ref[:, 1:2, :] = ss


def _bn_epilogue_kernel(x_ref, bn_ref, o_ref):
    o_ref[...] = (x_ref[...] * bn_ref[0:1, :] + bn_ref[1:2, :]).astype(o_ref.dtype)


def _bn_res_epilogue_kernel(x_ref, bn_ref, r_ref, o_ref):
    o_ref[...] = (x_ref[...] * bn_ref[0:1, :] + bn_ref[1:2, :] + r_ref[...]).astype(o_ref.dtype)


# ----------------------------- Pallas wrappers -----------------------------

def pointwise_conv_stats(x_flat, w):
    M, Cin = x_flat.shape
    Cout = w.shape[1]
    tm = _row_tile(M)
    nt = M // tm
    return pl.pallas_call(
        _pw_stats_kernel,
        out_shape=(jax.ShapeDtypeStruct((M, Cout), jnp.float32),
                   jax.ShapeDtypeStruct((nt, 2, Cout), jnp.float32)),
        grid=(nt,),
        in_specs=[pl.BlockSpec((tm, Cin), lambda i: (i, 0)),
                  pl.BlockSpec((Cin, Cout), lambda i: (0, 0))],
        out_specs=(pl.BlockSpec((tm, Cout), lambda i: (i, 0)),
                   pl.BlockSpec((1, 2, Cout), lambda i: (i, 0, 0))),
        compiler_params=_compiler_params(1),
    )(x_flat, w)


def pointwise_bnrelu_conv_stats(x_flat, bn, w):
    M, Cin = x_flat.shape
    Cout = w.shape[1]
    tm = _row_tile(M)
    nt = M // tm
    return pl.pallas_call(
        _pw_bnrelu_stats_kernel,
        out_shape=(jax.ShapeDtypeStruct((M, Cout), jnp.float32),
                   jax.ShapeDtypeStruct((nt, 2, Cout), jnp.float32)),
        grid=(nt,),
        in_specs=[pl.BlockSpec((tm, Cin), lambda i: (i, 0)),
                  pl.BlockSpec((2, Cin), lambda i: (0, 0)),
                  pl.BlockSpec((Cin, Cout), lambda i: (0, 0))],
        out_specs=(pl.BlockSpec((tm, Cout), lambda i: (i, 0)),
                   pl.BlockSpec((1, 2, Cout), lambda i: (i, 0, 0))),
        compiler_params=_compiler_params(1),
    )(x_flat, bn, w)


def depthwise_conv_stats(x_nhwc, bn, w, stride):
    N, H, W, C = x_nhwc.shape
    Hout = (H - 1) // stride + 1
    Wout = (W - 1) // stride + 1
    kern = functools.partial(_dw_kernel, stride=stride)
    return pl.pallas_call(
        kern,
        out_shape=(jax.ShapeDtypeStruct((N, Hout, Wout, C), jnp.float32),
                   jax.ShapeDtypeStruct((N, 2, C), jnp.float32)),
        grid=(N,),
        in_specs=[pl.BlockSpec((1, H, W, C), lambda n: (n, 0, 0, 0)),
                  pl.BlockSpec((2, C), lambda n: (0, 0)),
                  pl.BlockSpec((3, 3, C), lambda n: (0, 0, 0))],
        out_specs=(pl.BlockSpec((1, Hout, Wout, C), lambda n: (n, 0, 0, 0)),
                   pl.BlockSpec((1, 2, C), lambda n: (n, 0, 0))),
        scratch_shapes=[pltpu.VMEM((H + 2, W + 2, C), jnp.float32)],
        compiler_params=_compiler_params(1),
    )(x_nhwc, bn, w)


def bn_epilogue(y_flat, bn, residual=None):
    M, C = y_flat.shape
    tm = _row_tile(M)
    nt = M // tm
    if residual is None:
        return pl.pallas_call(
            _bn_epilogue_kernel,
            out_shape=jax.ShapeDtypeStruct((M, C), jnp.float32),
            grid=(nt,),
            in_specs=[pl.BlockSpec((tm, C), lambda i: (i, 0)),
                      pl.BlockSpec((2, C), lambda i: (0, 0))],
            out_specs=pl.BlockSpec((tm, C), lambda i: (i, 0)),
            input_output_aliases={0: 0},
            compiler_params=_compiler_params(1),
        )(y_flat, bn)
    return pl.pallas_call(
        _bn_res_epilogue_kernel,
        out_shape=jax.ShapeDtypeStruct((M, C), jnp.float32),
        grid=(nt,),
        in_specs=[pl.BlockSpec((tm, C), lambda i: (i, 0)),
                  pl.BlockSpec((2, C), lambda i: (0, 0)),
                  pl.BlockSpec((tm, C), lambda i: (i, 0))],
        out_specs=pl.BlockSpec((tm, C), lambda i: (i, 0)),
        input_output_aliases={0: 0},
        compiler_params=_compiler_params(1),
    )(y_flat, bn, residual)


# ----------------------------- BN folding (tiny, JAX glue) -----------------------------

def _bn_scale_shift(stats, count, gamma, beta):
    # stats: (num_tiles, 2, C) per-tile [sum, sum_sq]; biased variance (train-mode BN).
    s = jnp.sum(stats[:, 0, :], axis=0)
    ss = jnp.sum(stats[:, 1, :], axis=0)
    mean = s / count
    var = jnp.maximum(ss / count - mean * mean, 0.0)
    scale = gamma / jnp.sqrt(var + EPS)
    shift = beta - mean * scale
    return jnp.stack([scale, shift], axis=0)      # (2, C)


# ----------------------------- Module forward -----------------------------

def linear_bottleneck_forward(x_nchw, p, *, stride, in_features, out_features, t=6):
    N, Cin, H, W = x_nchw.shape
    assert Cin == in_features
    Cexp = t * in_features

    x = jnp.transpose(x_nchw, (0, 2, 3, 1)).astype(jnp.float32)      # NCHW -> NHWC
    x_flat = x.reshape(N * H * W, Cin)

    # --- 1x1 expand conv (conv bias cancels under train-mode BN; omitted) ---
    y1, st1 = pointwise_conv_stats(x_flat, p["w1"])                  # (M, Cexp)
    bn1 = _bn_scale_shift(st1, N * H * W, p["g1"], p["be1"])

    # --- 3x3 depthwise conv: fused BN1+ReLU6 prologue, in-kernel pad & stride ---
    y1 = y1.reshape(N, H, W, Cexp)
    y2, st2 = depthwise_conv_stats(y1, bn1, p["wdw"], stride)
    Hout, Wout = y2.shape[1], y2.shape[2]
    bn2 = _bn_scale_shift(st2, N * Hout * Wout, p["g2"], p["be2"])

    # --- 1x1 project conv: fused BN2+ReLU6 prologue ---
    y2f = y2.reshape(N * Hout * Wout, Cexp)
    y3, st3 = pointwise_bnrelu_conv_stats(y2f, bn2, p["w3"])         # (M', Cout)
    bn3 = _bn_scale_shift(st3, N * Hout * Wout, p["g3"], p["be3"])

    # --- BN3 apply (+ residual), in-place on y3's buffer ---
    res = x_flat if (stride == 1 and in_features == out_features) else None
    out = bn_epilogue(y3, bn3, residual=res)

    out = out.reshape(N, Hout, Wout, out_features)
    return jnp.transpose(out, (0, 3, 1, 2))                          # back to NCHW


# ----------------------------- Parameters -----------------------------

def init_params(key, in_features, out_features, t=6):
    Cexp = t * in_features
    ks = jax.random.split(key, 12)
    f32 = jnp.float32
    return {
        "w1": 0.1 * jax.random.normal(ks[0], (in_features, Cexp), f32),
        "b1": 0.05 * jax.random.normal(ks[1], (Cexp,), f32),          # reference-only
        "g1": 1.0 + 0.1 * jax.random.normal(ks[2], (Cexp,), f32),
        "be1": 0.1 * jax.random.normal(ks[3], (Cexp,), f32),
        "wdw": 0.1 * jax.random.normal(ks[4], (3, 3, Cexp), f32),
        "bdw": 0.05 * jax.random.normal(ks[5], (Cexp,), f32),         # reference-only
        "g2": 1.0 + 0.1 * jax.random.normal(ks[6], (Cexp,), f32),
        "be2": 0.1 * jax.random.normal(ks[7], (Cexp,), f32),
        "w3": 0.1 * jax.random.normal(ks[8], (Cexp, out_features), f32),
        "b3": 0.05 * jax.random.normal(ks[9], (out_features,), f32),  # reference-only
        "g3": 1.0 + 0.1 * jax.random.normal(ks[10], (out_features,), f32),
        "be3": 0.1 * jax.random.normal(ks[11], (out_features,), f32),
    }


# ----------------------------- Pure-JAX reference -----------------------------

def _bn_train_ref(y, gamma, beta):
    m = y.mean((0, 2, 3), keepdims=True)
    v = ((y - m) ** 2).mean((0, 2, 3), keepdims=True)
    return (y - m) / jnp.sqrt(v + EPS) * gamma[None, :, None, None] + beta[None, :, None, None]


def reference_forward(x_nchw, p, *, stride, in_features, out_features, t=6):
    # Faithful to the PyTorch module (conv biases included; they cancel under train-mode BN).
    Cexp = t * in_features
    dn = ("NCHW", "OIHW", "NCHW")
    w1 = jnp.transpose(p["w1"], (1, 0))[:, :, None, None]
    y = lax.conv_general_dilated(x_nchw, w1, (1, 1), "VALID", dimension_numbers=dn)
    y = y + p["b1"][None, :, None, None]
    y = jnp.clip(_bn_train_ref(y, p["g1"], p["be1"]), 0.0, 6.0)

    wdw = jnp.transpose(p["wdw"], (2, 0, 1))[:, None, :, :]          # (Cexp, 1, 3, 3)
    y = lax.conv_general_dilated(y, wdw, (stride, stride), ((1, 1), (1, 1)),
                                 dimension_numbers=dn, feature_group_count=Cexp)
    y = y + p["bdw"][None, :, None, None]
    y = jnp.clip(_bn_train_ref(y, p["g2"], p["be2"]), 0.0, 6.0)

    w3 = jnp.transpose(p["w3"], (1, 0))[:, :, None, None]
    y = lax.conv_general_dilated(y, w3, (1, 1), "VALID", dimension_numbers=dn)
    y = y + p["b3"][None, :, None, None]
    y = _bn_train_ref(y, p["g3"], p["be3"])
    if stride == 1 and in_features == out_features:
        y = y + x_nchw
    return y


# ----------------------------- Main -----------------------------

if __name__ == "__main__":
    key = jax.random.PRNGKey(0)
    x = jax.random.normal(key, (2, 4, 16, 16), jnp.float32)           # NCHW like PyTorch

    fwd = jax.jit(linear_bottleneck_forward,
                  static_argnames=("stride", "in_features", "out_features", "t"))

    # Case 1: stride=1, in==out -> residual branch (M=512 -> two row tiles per matmul)
    p1 = init_params(jax.random.PRNGKey(1), in_features=4, out_features=4, t=6)
    out1 = fwd(x, p1, stride=1, in_features=4, out_features=4, t=6)
    out1 = jax.block_until_ready(out1)
    ref1 = reference_forward(x, p1, stride=1, in_features=4, out_features=4, t=6)
    np.testing.assert_allclose(np.asarray(out1), np.asarray(ref1), rtol=2e-3, atol=2e-3)

    # Case 2: stride=2, different out channels -> no residual, in-kernel strided dw conv
    p2 = init_params(jax.random.PRNGKey(2), in_features=4, out_features=8, t=6)
    out2 = fwd(x, p2, stride=2, in_features=4, out_features=8, t=6)
    out2 = jax.block_until_ready(out2)
    ref2 = reference_forward(x, p2, stride=2, in_features=4, out_features=8, t=6)
    assert out2.shape == (2, 8, 8, 8)
    np.testing.assert_allclose(np.asarray(out2), np.asarray(ref2), rtol=2e-3, atol=2e-3)

    print("KERNEL_OK")
</pallas_src>

<mosaic_0001>
module attributes {stable_mosaic.version = 11 : i64} {
  func.func @_pw_stats_kernel(%arg0: i32, %arg1: memref<256x4xf32, #tpu.memory_space<vmem>>, %arg2: memref<4x24xf32, #tpu.memory_space<vmem>>, %arg3: memref<256x24xf32, #tpu.memory_space<vmem>>, %arg4: memref<1x2x24xf32, #tpu.memory_space<vmem>>) attributes {dimension_semantics = [#tpu.dimension_semantics<parallel>], iteration_bounds = array<i64: 2>, scalar_prefetch = 0 : i64, scratch_operands = 0 : i64, tpu.core_type = #tpu.core_type<tc>, window_params = [{transform_indices = @transform_0, window_bounds = array<i64: 256, 4>}, {pipeline_mode = #tpu.pipeline_mode<synchronous>, transform_indices = @transform_1, window_bounds = array<i64: 4, 24>}, {transform_indices = @transform_2, window_bounds = array<i64: 256, 24>}, {transform_indices = @transform_3, window_bounds = array<i64: 1, 2, 24>}]} {
    %c0 = arith.constant 0 : index
    %c0_0 = arith.constant 0 : index
    %0 = vector.load %arg1[%c0, %c0_0] : memref<256x4xf32, #tpu.memory_space<vmem>>, vector<256x4xf32>
    %c0_1 = arith.constant 0 : index
    %c0_2 = arith.constant 0 : index
    %1 = vector.load %arg2[%c0_1, %c0_2] : memref<4x24xf32, #tpu.memory_space<vmem>>, vector<4x24xf32>
    %cst = arith.constant dense<0.000000e+00> : vector<256x24xf32>
    %2 = tpu.matmul %0, %1, %cst {dimension_numbers = #tpu.dot_dimension_numbers<[1], [0], [0], [1], [0, 0, 1, 1], [], []>} : vector<256x4xf32>, vector<4x24xf32>, vector<256x24xf32> -> vector<256x24xf32>
    %c0_3 = arith.constant 0 : index
    %c0_4 = arith.constant 0 : index
    %3 = vector.load %arg3[%c0_3, %c0_4] : memref<256x24xf32, #tpu.memory_space<vmem>>, vector<256x24xf32>
    tpu.vector_store %arg3[%c0_3, %c0_4], %2 {strides = array<i32>} : memref<256x24xf32, #tpu.memory_space<vmem>>, vector<256x24xf32>,
    %cst_5 = arith.constant dense<0.000000e+00> : vector<24xf32>
    %4 = vector.multi_reduction <add>, %2, %cst_5 [0] : vector<256x24xf32> to vector<24xf32>
    %5 = vector.shape_cast %4 : vector<24xf32> to vector<1x24xf32>
    %6 = vector.shape_cast %5 : vector<1x24xf32> to vector<1x1x24xf32>
    %c0_6 = arith.constant 0 : index
    %c0_7 = arith.constant 0 : index
    %c0_8 = arith.constant 0 : index
    %7 = vector.load %arg4[%c0_6, %c0_7, %c0_8] : memref<1x2x24xf32, #tpu.memory_space<vmem>>, vector<1x1x24xf32>
    tpu.vector_store %arg4[%c0_6, %c0_7, %c0_8], %6 {strides = array<i32>} : memref<1x2x24xf32, #tpu.memory_space<vmem>>, vector<1x1x24xf32>,
    %8 = arith.mulf %2, %2 : vector<256x24xf32>
    %cst_9 = arith.constant dense<0.000000e+00> : vector<24xf32>
    %9 = vector.multi_reduction <add>, %8, %cst_9 [0] : vector<256x24xf32> to vector<24xf32>
    %10 = vector.shape_cast %9 : vector<24xf32> to vector<1x24xf32>
    %11 = vector.shape_cast %10 : vector<1x24xf32> to vector<1x1x24xf32>
    %c0_10 = arith.constant 0 : index
    %c1 = arith.constant 1 : index
    %c0_11 = arith.constant 0 : index
    %12 = vector.load %arg4[%c0_10, %c1, %c0_11] : memref<1x2x24xf32, #tpu.memory_space<vmem>>, vector<1x1x24xf32>
    tpu.vector_store %arg4[%c0_10, %c1, %c0_11], %11 {strides = array<i32>} : memref<1x2x24xf32, #tpu.memory_space<vmem>>, vector<1x1x24xf32>,
    return
  }
  func.func @transform_0(%arg0: i32) -> (i32, i32) {
    %c0_i32 = arith.constant 0 : i32
    %c0_i32_0 = arith.constant 0 : i32
    return %arg0, %c0_i32 : i32, i32
  }
  func.func @transform_1(%arg0: i32) -> (i32, i32) {
    %c0_i32 = arith.constant 0 : i32
    %c0_i32_0 = arith.constant 0 : i32
    %c0_i32_1 = arith.constant 0 : i32
    return %c0_i32, %c0_i32_0 : i32, i32
  }
  func.func @transform_2(%arg0: i32) -> (i32, i32) {
    %c0_i32 = arith.constant 0 : i32
    %c0_i32_0 = arith.constant 0 : i32
    return %arg0, %c0_i32 : i32, i32
  }
  func.func @transform_3(%arg0: i32) -> (i32, i32, i32) {
    %c0_i32 = arith.constant 0 : i32
    %c0_i32_0 = arith.constant 0 : i32
    %c0_i32_1 = arith.constant 0 : i32
    return %arg0, %c0_i32, %c0_i32_0 : i32, i32, i32
  }
}

module attributes {stable_mosaic.version = 11 : i64} {
  func.func @_pw_bnrelu_stats_kernel(%arg0: i32, %arg1: memref<256x24xf32, #tpu.memory_space<vmem>>, %arg2: memref<2x24xf32, #tpu.memory_space<vmem>>, %arg3: memref<24x4xf32, #tpu.memory_space<vmem>>, %arg4: memref<256x4xf32, #tpu.memory_space<vmem>>, %arg5: memref<1x2x4xf32, #tpu.memory_space<vmem>>) attributes {dimension_semantics = [#tpu.dimension_semantics<parallel>], iteration_bounds = array<i64: 2>, scalar_prefetch = 0 : i64, scratch_operands = 0 : i64, tpu.core_type = #tpu.core_type<tc>, window_params = [{transform_indices = @transform_0, window_bounds = array<i64: 256, 24>}, {pipeline_mode = #tpu.pipeline_mode<synchronous>, transform_indices = @transform_1, window_bounds = array<i64: 2, 24>}, {pipeline_mode = #tpu.pipeline_mode<synchronous>, transform_indices = @transform_2, window_bounds = array<i64: 24, 4>}, {transform_indices = @transform_3, window_bounds = array<i64: 256, 4>}, {transform_indices = @transform_4, window_bounds = array<i64: 1, 2, 4>}]} {
    %c0 = arith.constant 0 : index
    %c0_0 = arith.constant 0 : index
    %0 = vector.load %arg1[%c0, %c0_0] : memref<256x24xf32, #tpu.memory_space<vmem>>, vector<256x24xf32>
    %c0_1 = arith.constant 0 : index
    %c0_2 = arith.constant 0 : index
    %1 = vector.load %arg2[%c0_1, %c0_2] : memref<2x24xf32, #tpu.memory_space<vmem>>, vector<1x24xf32>
    %2 = vector.broadcast %1 : vector<1x24xf32> to vector<256x24xf32>
    %3 = arith.mulf %0, %2 : vector<256x24xf32>
    %c1 = arith.constant 1 : index
    %c0_3 = arith.constant 0 : index
    %4 = vector.load %arg2[%c1, %c0_3] : memref<2x24xf32, #tpu.memory_space<vmem>>, vector<1x24xf32>
    %5 = vector.broadcast %4 : vector<1x24xf32> to vector<256x24xf32>
    %6 = arith.addf %3, %5 : vector<256x24xf32>
    %cst = arith.constant 0.000000e+00 : f32
    %7 = vector.broadcast %cst : f32 to vector<256x24xf32>
    %8 = arith.maximumf %6, %7 : vector<256x24xf32>
    %cst_4 = arith.constant 6.000000e+00 : f32
    %9 = vector.broadcast %cst_4 : f32 to vector<256x24xf32>
    %10 = arith.minimumf %8, %9 : vector<256x24xf32>
    %c0_5 = arith.constant 0 : index
    %c0_6 = arith.constant 0 : index
    %11 = vector.load %arg3[%c0_5, %c0_6] : memref<24x4xf32, #tpu.memory_space<vmem>>, vector<24x4xf32>
    %cst_7 = arith.constant dense<0.000000e+00> : vector<256x4xf32>
    %12 = tpu.matmul %10, %11, %cst_7 {dimension_numbers = #tpu.dot_dimension_numbers<[1], [0], [0], [1], [0, 0, 1, 1], [], []>} : vector<256x24xf32>, vector<24x4xf32>, vector<256x4xf32> -> vector<256x4xf32>
    %c0_8 = arith.constant 0 : index
    %c0_9 = arith.constant 0 : index
    %13 = vector.load %arg4[%c0_8, %c0_9] : memref<256x4xf32, #tpu.memory_space<vmem>>, vector<256x4xf32>
    tpu.vector_store %arg4[%c0_8, %c0_9], %12 {strides = array<i32>} : memref<256x4xf32, #tpu.memory_space<vmem>>, vector<256x4xf32>,
    %cst_10 = arith.constant dense<0.000000e+00> : vector<4xf32>
    %14 = vector.multi_reduction <add>, %12, %cst_10 [0] : vector<256x4xf32> to vector<4xf32>
    %15 = vector.shape_cast %14 : vector<4xf32> to vector<1x4xf32>
    %16 = vector.shape_cast %15 : vector<1x4xf32> to vector<1x1x4xf32>
    %c0_11 = arith.constant 0 : index
    %c0_12 = arith.constant 0 : index
    %c0_13 = arith.constant 0 : index
    %17 = vector.load %arg5[%c0_11, %c0_12, %c0_13] : memref<1x2x4xf32, #tpu.memory_space<vmem>>, vector<1x1x4xf32>
    tpu.vector_store %arg5[%c0_11, %c0_12, %c0_13], %16 {strides = array<i32>} : memref<1x2x4xf32, #tpu.memory_space<vmem>>, vector<1x1x4xf32>,
    %18 = arith.mulf %12, %12 : vector<256x4xf32>
    %cst_14 = arith.constant dense<0.000000e+00> : vector<4xf32>
    %19 = vector.multi_reduction <add>, %18, %cst_14 [0] : vector<256x4xf32> to vector<4xf32>
    %20 = vector.shape_cast %19 : vector<4xf32> to vector<1x4xf32>
    %21 = vector.shape_cast %20 : vector<1x4xf32> to vector<1x1x4xf32>
    %c0_15 = arith.constant 0 : index
    %c1_16 = arith.constant 1 : index
    %c0_17 = arith.constant 0 : index
    %22 = vector.load %arg5[%c0_15, %c1_16, %c0_17] : memref<1x2x4xf32, #tpu.memory_space<vmem>>, vector<1x1x4xf32>
    tpu.vector_store %arg5[%c0_15, %c1_16, %c0_17], %21 {strides = array<i32>} : memref<1x2x4xf32, #tpu.memory_space<vmem>>, vector<1x1x4xf32>,
    return
  }
  func.func @transform_0(%arg0: i32) -> (i32, i32) {
    %c0_i32 = arith.constant 0 : i32
    %c0_i32_0 = arith.constant 0 : i32
    return %arg0, %c0_i32 : i32, i32
  }
  func.func @transform_1(%arg0: i32) -> (i32, i32) {
    %c0_i32 = arith.constant 0 : i32
    %c0_i32_0 = arith.constant 0 : i32
    %c0_i32_1 = arith.constant 0 : i32
    return %c0_i32, %c0_i32_0 : i32, i32
  }
  func.func @transform_2(%arg0: i32) -> (i32, i32) {
    %c0_i32 = arith.constant 0 : i32
    %c0_i32_0 = arith.constant 0 : i32
    %c0_i32_1 = arith.constant 0 : i32
    return %c0_i32, %c0_i32_0 : i32, i32
  }
  func.func @transform_3(%arg0: i32) -> (i32, i32) {
    %c0_i32 = arith.constant 0 : i32
    %c0_i32_0 = arith.constant 0 : i32
    return %arg0, %c0_i32 : i32, i32
  }
  func.func @transform_4(%arg0: i32) -> (i32, i32, i32) {
    %c0_i32 = arith.constant 0 : i32
    %c0_i32_0 = arith.constant 0 : i32
    %c0_i32_1 = arith.constant 0 : i32
    return %arg0, %c0_i32, %c0_i32_0 : i32, i32, i32
  }
}

module attributes {stable_mosaic.version = 11 : i64} {
  func.func @_dw_kernel(%arg0: i32, %arg1: memref<1x16x16x24xf32, #tpu.memory_space<vmem>>, %arg2: memref<2x24xf32, #tpu.memory_space<vmem>>, %arg3: memref<3x3x24xf32, #tpu.memory_space<vmem>>, %arg4: memref<1x16x16x24xf32, #tpu.memory_space<vmem>>, %arg5: memref<1x2x24xf32, #tpu.memory_space<vmem>>, %arg6: memref<18x18x24xf32, #tpu.memory_space<vmem>>) attributes {dimension_semantics = [#tpu.dimension_semantics<parallel>], iteration_bounds = array<i64: 2>, scalar_prefetch = 0 : i64, scratch_operands = 1 : i64, tpu.core_type = #tpu.core_type<tc>, window_params = [{transform_indices = @transform_0, window_bounds = array<i64: 1, 16, 16, 24>}, {pipeline_mode = #tpu.pipeline_mode<synchronous>, transform_indices = @transform_1, window_bounds = array<i64: 2, 24>}, {pipeline_mode = #tpu.pipeline_mode<synchronous>, transform_indices = @transform_2, window_bounds = array<i64: 3, 3, 24>}, {transform_indices = @transform_3, window_bounds = array<i64: 1, 16, 16, 24>}, {transform_indices = @transform_4, window_bounds = array<i64: 1, 2, 24>}]} {
    %c0 = arith.constant 0 : index
    %c0_0 = arith.constant 0 : index
    %0 = vector.load %arg2[%c0, %c0_0] : memref<2x24xf32, #tpu.memory_space<vmem>>, vector<1x24xf32>
    %c1 = arith.constant 1 : index
    %c0_1 = arith.constant 0 : index
    %1 = vector.load %arg2[%c1, %c0_1] : memref<2x24xf32, #tpu.memory_space<vmem>>, vector<1x24xf32>
    %c0_2 = arith.constant 0 : index
    %c0_3 = arith.constant 0 : index
    %c0_4 = arith.constant 0 : index
    %c0_5 = arith.constant 0 : index
    %2 = vector.load %arg1[%c0_2, %c0_3, %c0_4, %c0_5] : memref<1x16x16x24xf32, #tpu.memory_space<vmem>>, vector<1x16x16x24xf32>
    %3 = vector.shape_cast %2 : vector<1x16x16x24xf32> to vector<16x16x24xf32>
    %4 = vector.shape_cast %0 : vector<1x24xf32> to vector<1x1x24xf32>
    %5 = vector.broadcast %4 : vector<1x1x24xf32> to vector<16x16x24xf32>
    %6 = arith.mulf %3, %5 : vector<16x16x24xf32>
    %7 = vector.shape_cast %1 : vector<1x24xf32> to vector<1x1x24xf32>
    %8 = vector.broadcast %7 : vector<1x1x24xf32> to vector<16x16x24xf32>
    %9 = arith.addf %6, %8 : vector<16x16x24xf32>
    %cst = arith.constant 0.000000e+00 : f32
    %10 = vector.broadcast %cst : f32 to vector<16x16x24xf32>
    %11 = arith.maximumf %9, %10 : vector<16x16x24xf32>
    %cst_6 = arith.constant 6.000000e+00 : f32
    %12 = vector.broadcast %cst_6 : f32 to vector<16x16x24xf32>
    %13 = arith.minimumf %11, %12 : vector<16x16x24xf32>
    %cst_7 = arith.constant 0.000000e+00 : f32
    %14 = vector.broadcast %cst_7 : f32 to vector<18x18x24xf32>
    %c0_8 = arith.constant 0 : index
    %c0_9 = arith.constant 0 : index
    %c0_10 = arith.constant 0 : index
    %15 = vector.load %arg6[%c0_8, %c0_9, %c0_10] : memref<18x18x24xf32, #tpu.memory_space<vmem>>, vector<18x18x24xf32>
    tpu.vector_store %arg6[%c0_8, %c0_9, %c0_10], %14 {strides = array<i32>} : memref<18x18x24xf32, #tpu.memory_space<vmem>>, vector<18x18x24xf32>,
    %c1_11 = arith.constant 1 : index
    %c1_12 = arith.constant 1 : index
    %c0_13 = arith.constant 0 : index
    %16 = vector.load %arg6[%c1_11, %c1_12, %c0_13] : memref<18x18x24xf32, #tpu.memory_space<vmem>>, vector<16x16x24xf32>
    tpu.vector_store %arg6[%c1_11, %c1_12, %c0_13], %13 {strides = array<i32>} : memref<18x18x24xf32, #tpu.memory_space<vmem>>, vector<16x16x24xf32>,
    %cst_14 = arith.constant 0.000000e+00 : f32
    %17 = vector.broadcast %cst_14 : f32 to vector<16x16x24xf32>
    %c0_15 = arith.constant 0 : index
    %c0_16 = arith.constant 0 : index
    %c0_17 = arith.constant 0 : index
    %18 = vector.load %arg6[%c0_15, %c0_16, %c0_17] : memref<18x18x24xf32, #tpu.memory_space<vmem>>, vector<16x16x24xf32>
    %c0_18 = arith.constant 0 : index
    %c0_19 = arith.constant 0 : index
    %c0_20 = arith.constant 0 : index
    %19 = vector.load %arg3[%c0_18, %c0_19, %c0_20] : memref<3x3x24xf32, #tpu.memory_space<vmem>>, vector<1x1x24xf32>
    %20 = vector.broadcast %19 : vector<1x1x24xf32> to vector<16x16x24xf32>
    %21 = arith.mulf %18, %20 : vector<16x16x24xf32>
    %22 = arith.addf %17, %21 : vector<16x16x24xf32>
    %c0_21 = arith.constant 0 : index
    %c1_22 = arith.constant 1 : index
    %c0_23 = arith.constant 0 : index
    %23 = vector.load %arg6[%c0_21, %c1_22, %c0_23] : memref<18x18x24xf32, #tpu.memory_space<vmem>>, vector<16x16x24xf32>
    %c0_24 = arith.constant 0 : index
    %c1_25 = arith.constant 1 : index
    %c0_26 = arith.constant 0 : index
    %24 = vector.load %arg3[%c0_24, %c1_25, %c0_26] : memref<3x3x24xf32, #tpu.memory_space<vmem>>, vector<1x1x24xf32>
    %25 = vector.broadcast %24 : vector<1x1x24xf32> to vector<16x16x24xf32>
    %26 = arith.mulf %23, %25 : vector<16x16x24xf32>
    %27 = arith.addf %22, %26 : vector<16x16x24xf32>
    %c0_27 = arith.constant 0 : index
    %c2 = arith.constant 2 : index
    %c0_28 = arith.constant 0 : index
    %28 = vector.load %arg6[%c0_27, %c2, %c0_28] : memref<18x18x24xf32, #tpu.memory_space<vmem>>, vector<16x16x24xf32>
    %c0_29 = arith.constant 0 : index
    %c2_30 = arith.constant 2 : index
    %c0_31 = arith.constant 0 : index
    %29 = vector.load %arg3[%c0_29, %c2_30, %c0_31] : memref<3x3x24xf32, #tpu.memory_space<vmem>>, vector<1x1x24xf32>
    %30 = vector.broadcast %29 : vector<1x1x24xf32> to vector<16x16x24xf32>
    %31 = arith.mulf %28, %30 : vector<16x16x24xf32>
    %32 = arith.addf %27, %31 : vector<16x16x24xf32>
    %c1_32 = arith.constant 1 : index
    %c0_33 = arith.constant 0 : index
    %c0_34 = arith.constant 0 : index
    %33 = vector.load %arg6[%c1_32, %c0_33, %c0_34] : memref<18x18x24xf32, #tpu.memory_space<vmem>>, vector<16x16x24xf32>
    %c1_35 = arith.constant 1 : index
    %c0_36 = arith.constant 0 : index
    %c0_37 = arith.constant 0 : index
    %34 = vector.load %arg3[%c1_35, %c0_36, %c0_37] : memref<3x3x24xf32, #tpu.memory_space<vmem>>, vector<1x1x24xf32>
    %35 = vector.broadcast %34 : vector<1x1x24xf32> to vector<16x16x24xf32>
    %36 = arith.mulf %33, %35 : vector<16x16x24xf32>
    %37 = arith.addf %32, %36 : vector<16x16x24xf32>
    %c1_38 = arith.constant 1 : index
    %c1_39 = arith.constant 1 : index
    %c0_40 = arith.constant 0 : index
    %38 = vector.load %arg6[%c1_38, %c1_39, %c0_40] : memref<18x18x24xf32, #tpu.memory_space<vmem>>, vector<16x16x24xf32>
    %c1_41 = arith.constant 1 : index
    %c1_42 = arith.constant 1 : index
    %c0_43 = arith.constant 0 : index
    %39 = vector.load %arg3[%c1_41, %c1_42, %c0_43] : memref<3x3x24xf32, #tpu.memory_space<vmem>>, vector<1x1x24xf32>
    %40 = vector.broadcast %39 : vector<1x1x24xf32> to vector<16x16x24xf32>
    %41 = arith.mulf %38, %40 : vector<16x16x24xf32>
    %42 = arith.addf %37, %41 : vector<16x16x24xf32>
    %c1_44 = arith.constant 1 : index
    %c2_45 = arith.constant 2 : index
    %c0_46 = arith.constant 0 : index
    %43 = vector.load %arg6[%c1_44, %c2_45, %c0_46] : memref<18x18x24xf32, #tpu.memory_space<vmem>>, vector<16x16x24xf32>
    %c1_47 = arith.constant 1 : index
    %c2_48 = arith.constant 2 : index
    %c0_49 = arith.constant 0 : index
    %44 = vector.load %arg3[%c1_47, %c2_48, %c0_49] : memref<3x3x24xf32, #tpu.memory_space<vmem>>, vector<1x1x24xf32>
    %45 = vector.broadcast %44 : vector<1x1x24xf32> to vector<16x16x24xf32>
    %46 = arith.mulf %43, %45 : vector<16x16x24xf32>
    %47 = arith.addf %42, %46 : vector<16x16x24xf32>
    %c2_50 = arith.constant 2 : index
    %c0_51 = arith.constant 0 : index
    %c0_52 = arith.constant 0 : index
    %48 = vector.load %arg6[%c2_50, %c0_51, %c0_52] : memref<18x18x24xf32, #tpu.memory_space<vmem>>, vector<16x16x24xf32>
    %c2_53 = arith.constant 2 : index
    %c0_54 = arith.constant 0 : index
    %c0_55 = arith.constant 0 : index
    %49 = vector.load %arg3[%c2_53, %c0_54, %c0_55] : memref<3x3x24xf32, #tpu.memory_space<vmem>>, vector<1x1x24xf32>
    %50 = vector.broadcast %49 : vector<1x1x24xf32> to vector<16x16x24xf32>
    %51 = arith.mulf %48, %50 : vector<16x16x24xf32>
    %52 = arith.addf %47, %51 : vector<16x16x24xf32>
    %c2_56 = arith.constant 2 : index
    %c1_57 = arith.constant 1 : index
    %c0_58 = arith.constant 0 : index
    %53 = vector.load %arg6[%c2_56, %c1_57, %c0_58] : memref<18x18x24xf32, #tpu.memory_space<vmem>>, vector<16x16x24xf32>
    %c2_59 = arith.constant 2 : index
    %c1_60 = arith.constant 1 : index
    %c0_61 = arith.constant 0 : index
    %54 = vector.load %arg3[%c2_59, %c1_60, %c0_61] : memref<3x3x24xf32, #tpu.memory_space<vmem>>, vector<1x1x24xf32>
    %55 = vector.broadcast %54 : vector<1x1x24xf32> to vector<16x16x24xf32>
    %56 = arith.mulf %53, %55 : vector<16x16x24xf32>
    %57 = arith.addf %52, %56 : vector<16x16x24xf32>
    %c2_62 = arith.constant 2 : index
    %c2_63 = arith.constant 2 : index
    %c0_64 = arith.constant 0 : index
    %58 = vector.load %arg6[%c2_62, %c2_63, %c0_64] : memref<18x18x24xf32, #tpu.memory_space<vmem>>, vector<16x16x24xf32>
    %c2_65 = arith.constant 2 : index
    %c2_66 = arith.constant 2 : index
    %c0_67 = arith.constant 0 : index
    %59 = vector.load %arg3[%c2_65, %c2_66, %c0_67] : memref<3x3x24xf32, #tpu.memory_space<vmem>>, vector<1x1x24xf32>
    %60 = vector.broadcast %59 : vector<1x1x24xf32> to vector<16x16x24xf32>
    %61 = arith.mulf %58, %60 : vector<16x16x24xf32>
    %62 = arith.addf %57, %61 : vector<16x16x24xf32>
    %c0_68 = arith.constant 0 : index
    %c0_69 = arith.constant 0 : index
    %c0_70 = arith.constant 0 : index
    %c0_71 = arith.constant 0 : index
    %63 = vector.load %arg4[%c0_68, %c0_69, %c0_70, %c0_71] : memref<1x16x16x24xf32, #tpu.memory_space<vmem>>, vector<1x16x16x24xf32>
    %64 = vector.shape_cast %63 : vector<1x16x16x24xf32> to vector<16x16x24xf32>
    %65 = vector.shape_cast %62 : vector<16x16x24xf32> to vector<1x16x16x24xf32>
    tpu.vector_store %arg4[%c0_68, %c0_69, %c0_70, %c0_71], %65 {strides = array<i32>} : memref<1x16x16x24xf32, #tpu.memory_space<vmem>>, vector<1x16x16x24xf32>,
    %cst_72 = arith.constant dense<0.000000e+00> : vector<16x24xf32>
    %66 = vector.multi_reduction <add>, %62, %cst_72 [1] : vector<16x16x24xf32> to vector<16x24xf32>
    %67 = vector.shape_cast %66 : vector<16x24xf32> to vector<16x1x24xf32>
    %cst_73 = arith.constant dense<0.000000e+00> : vector<1x24xf32>
    %68 = vector.multi_reduction <add>, %67, %cst_73 [0] : vector<16x1x24xf32> to vector<1x24xf32>
    %69 = vector.shape_cast %68 : vector<1x24xf32> to vector<1x1x24xf32>
    %70 = arith.mulf %62, %62 : vector<16x16x24xf32>
    %cst_74 = arith.constant dense<0.000000e+00> : vector<16x24xf32>
    %71 = vector.multi_reduction <add>, %70, %cst_74 [1] : vector<16x16x24xf32> to vector<16x24xf32>
    %72 = vector.shape_cast %71 : vector<16x24xf32> to vector<16x1x24xf32>
    %cst_75 = arith.constant dense<0.000000e+00> : vector<1x24xf32>
    %73 = vector.multi_reduction <add>, %72, %cst_75 [0] : vector<16x1x24xf32> to vector<1x24xf32>
    %74 = vector.shape_cast %73 : vector<1x24xf32> to vector<1x1x24xf32>
    %c0_76 = arith.constant 0 : index
    %c0_77 = arith.constant 0 : index
    %c0_78 = arith.constant 0 : index
    %75 = vector.load %arg5[%c0_76, %c0_77, %c0_78] : memref<1x2x24xf32, #tpu.memory_space<vmem>>, vector<1x1x24xf32>
    tpu.vector_store %arg5[%c0_76, %c0_77, %c0_78], %69 {strides = array<i32>} : memref<1x2x24xf32, #tpu.memory_space<vmem>>, vector<1x1x24xf32>,
    %c0_79 = arith.constant 0 : index
    %c1_80 = arith.constant 1 : index
    %c0_81 = arith.constant 0 : index
    %76 = vector.load %arg5[%c0_79, %c1_80, %c0_81] : memref<1x2x24xf32, #tpu.memory_space<vmem>>, vector<1x1x24xf32>
    tpu.vector_store %arg5[%c0_79, %c1_80, %c0_81], %74 {strides = array<i32>} : memref<1x2x24xf32, #tpu.memory_space<vmem>>, vector<1x1x24xf32>,
    return
  }
  func.func @transform_0(%arg0: i32) -> (i32, i32, i32, i32) {
    %c0_i32 = arith.constant 0 : i32
    %c0_i32_0 = arith.constant 0 : i32
    %c0_i32_1 = arith.constant 0 : i32
    %c0_i32_2 = arith.constant 0 : i32
    return %arg0, %c0_i32, %c0_i32_0, %c0_i32_1 : i32, i32, i32, i32
  }
  func.func @transform_1(%arg0: i32) -> (i32, i32) {
    %c0_i32 = arith.constant 0 : i32
    %c0_i32_0 = arith.constant 0 : i32
    %c0_i32_1 = arith.constant 0 : i32
    return %c0_i32, %c0_i32_0 : i32, i32
  }
  func.func @transform_2(%arg0: i32) -> (i32, i32, i32) {
    %c0_i32 = arith.constant 0 : i32
    %c0_i32_0 = arith.constant 0 : i32
    %c0_i32_1 = arith.constant 0 : i32
    %c0_i32_2 = arith.constant 0 : i32
    return %c0_i32, %c0_i32_0, %c0_i32_1 : i32, i32, i32
  }
  func.func @transform_3(%arg0: i32) -> (i32, i32, i32, i32) {
    %c0_i32 = arith.constant 0 : i32
    %c0_i32_0 = arith.constant 0 : i32
    %c0_i32_1 = arith.constant 0 : i32
    %c0_i32_2 = arith.constant 0 : i32
    return %arg0, %c0_i32, %c0_i32_0, %c0_i32_1 : i32, i32, i32, i32
  }
  func.func @transform_4(%arg0: i32) -> (i32, i32, i32) {
    %c0_i32 = arith.constant 0 : i32
    %c0_i32_0 = arith.constant 0 : i32
    %c0_i32_1 = arith.constant 0 : i32
    return %arg0, %c0_i32, %c0_i32_0 : i32, i32, i32
  }
}

module attributes {stable_mosaic.version = 11 : i64} {
  func.func @_bn_res_epilogue_kernel(%arg0: i32, %arg1: memref<256x4xf32, #tpu.memory_space<vmem>>, %arg2: memref<2x4xf32, #tpu.memory_space<vmem>>, %arg3: memref<256x4xf32, #tpu.memory_space<vmem>>, %arg4: memref<256x4xf32, #tpu.memory_space<vmem>>) attributes {dimension_semantics = [#tpu.dimension_semantics<parallel>], iteration_bounds = array<i64: 2>, scalar_prefetch = 0 : i64, scratch_operands = 0 : i64, tpu.core_type = #tpu.core_type<tc>, window_params = [{transform_indices = @transform_0, window_bounds = array<i64: 256, 4>}, {pipeline_mode = #tpu.pipeline_mode<synchronous>, transform_indices = @transform_1, window_bounds = array<i64: 2, 4>}, {transform_indices = @transform_2, window_bounds = array<i64: 256, 4>}, {transform_indices = @transform_3, window_bounds = array<i64: 256, 4>}]} {
    %c0 = arith.constant 0 : index
    %c0_0 = arith.constant 0 : index
    %0 = vector.load %arg1[%c0, %c0_0] : memref<256x4xf32, #tpu.memory_space<vmem>>, vector<256x4xf32>
    %c0_1 = arith.constant 0 : index
    %c0_2 = arith.constant 0 : index
    %1 = vector.load %arg2[%c0_1, %c0_2] : memref<2x4xf32, #tpu.memory_space<vmem>>, vector<1x4xf32>
    %2 = vector.broadcast %1 : vector<1x4xf32> to vector<256x4xf32>
    %3 = arith.mulf %0, %2 : vector<256x4xf32>
    %c1 = arith.constant 1 : index
    %c0_3 = arith.constant 0 : index
    %4 = vector.load %arg2[%c1, %c0_3] : memref<2x4xf32, #tpu.memory_space<vmem>>, vector<1x4xf32>
    %5 = vector.broadcast %4 : vector<1x4xf32> to vector<256x4xf32>
    %6 = arith.addf %3, %5 : vector<256x4xf32>
    %c0_4 = arith.constant 0 : index
    %c0_5 = arith.constant 0 : index
    %7 = vector.load %arg3[%c0_4, %c0_5] : memref<256x4xf32, #tpu.memory_space<vmem>>, vector<256x4xf32>
    %8 = arith.addf %6, %7 : vector<256x4xf32>
    %c0_6 = arith.constant 0 : index
    %c0_7 = arith.constant 0 : index
    %9 = vector.load %arg4[%c0_6, %c0_7] : memref<256x4xf32, #tpu.memory_space<vmem>>, vector<256x4xf32>
    tpu.vector_store %arg4[%c0_6, %c0_7], %8 {strides = array<i32>} : memref<256x4xf32, #tpu.memory_space<vmem>>, vector<256x4xf32>,
    return
  }
  func.func @transform_0(%arg0: i32) -> (i32, i32) {
    %c0_i32 = arith.constant 0 : i32
    %c0_i32_0 = arith.constant 0 : i32
    return %arg0, %c0_i32 : i32, i32
  }
  func.func @transform_1(%arg0: i32) -> (i32, i32) {
    %c0_i32 = arith.constant 0 : i32
    %c0_i32_0 = arith.constant 0 : i32
    %c0_i32_1 = arith.constant 0 : i32
    return %c0_i32, %c0_i32_0 : i32, i32
  }
  func.func @transform_2(%arg0: i32) -> (i32, i32) {
    %c0_i32 = arith.constant 0 : i32
    %c0_i32_0 = arith.constant 0 : i32
    return %arg0, %c0_i32 : i32, i32
  }
  func.func @transform_3(%arg0: i32) -> (i32, i32) {
    %c0_i32 = arith.constant 0 : i32
    %c0_i32_0 = arith.constant 0 : i32
    return %arg0, %c0_i32 : i32, i32
  }
}

</mosaic_0001>

<llo_original>
// kernel: linear_bottleneck_forward.4
$region0: #{linear_bottleneck_forward.4}
  #allocation0 [shape = 'u32[]', space=smem, size = 0x4, offset = 0x4, fixed_abs, tag = 'smem constant byte address 0x4 - core index']
  #allocation1 [shape = 'u32[72,128]{1,0:T(1,128)}', space=vmem, size = 0x9000, scoped, tag = 'internal scratch']
  %s0 = inlined_call_operand.vmem [shape: f32[512,4], index: 0, kind: input, shape index: {}]
  %s1 = inlined_call_operand.vmem [shape: f32[4,24], index: 1, kind: input, shape index: {}]
  %s2 = inlined_call_operand.vmem [shape: f32[512,24], index: 2, kind: output, shape index: {0}]
  %s3 = inlined_call_operand.vmem [shape: f32[2,2,24], index: 3, kind: output, shape index: {1}]
  %4 = xla_tuple %s2, %s3
  %s5 = sld [smem:[#allocation0]]
  $region49: #{linear_bottleneck_forward.4} parent=0
    _
  %s7 = ssub.s32 1, %s5
  %s8 = scalar_select 0, %s7, %s5
  loop: start=0, step=1, limit=4
  $region2: #{linear_bottleneck_forward.4} parent=0 // loop_pre_header
    _
  $region3: #{linear_bottleneck_forward.4} parent=0 // loop_header
    %s10 = sphi 0, %s14
    %p11 = scmp.ge.s32.totalorder %s10, 4
    %s20 = sphi 0, %s22
    %s23 = sphi 0, %s20
    %s24 = sphi 0, %s23
    %s40 = sphi 0, %s24
    %s44 = sphi 0, %s44
    %s46 = sphi 0, %s44
    %s47 = sphi 0, %s46
    %s61 = sphi 0, %s47
    %s67 = sphi 0, %s69
    %s70 = sphi 0, %s67
    %s71 = sphi 0, %s70
    %s87 = sphi 0, %s71
    %s93 = sphi 0, %s95
    %s96 = sphi 0, %s93
    %s97 = sphi 0, %s96
    %s113 = sphi 0, %s97
  $region4: #{linear_bottleneck_forward.4} parent=0 // loop_header_branch
    %13 = sbr.rel (%p11) target = $region8
  $region5: #{linear_bottleneck_forward.4} parent=0 // loop_body
    %s15 = ssub.s32 %s10, 1
    %s16 = ssub.s32 %s10, 2
    %s17 = sadd.s32 %s10, 1
    %s18 = ssub.s32 %s10, %s17
    %p19 = scmp.eq.s32.totalorder %s18, 0
    %s21 = sadd.s32 %s20, 1
    %s22 = scalar_select %p19, %s20, %s21
    %p25 = pneg %p19
    %p26 = scmp.eq.s32.totalorder %s10, 1
    %p27 = por %p25, %p26
    %p28 = scmp.ne.s32.totalorder %s20, %s23
    %p29 = scmp.eq.s32.totalorder %s10, 0
    %p30 = por %p28, %p29
    %p31 = scmp.ne.s32.totalorder %s20, %s23
    %p32 = scmp.eq.s32.totalorder %s15, 1
    %p33 = por %p31, %p32
    %p34 = scmp.ne.s32.totalorder %s23, %s24
    %p35 = scmp.eq.s32.totalorder %s15, 0
    %p36 = por %p34, %p35
    %p37 = scmp.ne.s32.totalorder %s23, %s24
    %p38 = scmp.eq.s32.totalorder %s16, 1
    %p39 = por %p37, %p38
    %p41 = scmp.ne.s32.totalorder %s24, %s40
    %p42 = scmp.eq.s32.totalorder %s16, 0
    %p43 = por %p41, %p42
    %s45 = sadd.s32 %s44, 1
    %p48 = scmp.eq.s32.totalorder %s10, 1
    %p49 = scmp.ne.s32.totalorder %s44, %s46
    %p50 = scmp.eq.s32.totalorder %s10, 0
    %p51 = por %p49, %p50
    %p52 = scmp.ne.s32.totalorder %s44, %s46
    %p53 = scmp.eq.s32.totalorder %s15, 1
    %p54 = por %p52, %p53
    %p55 = scmp.ne.s32.totalorder %s46, %s47
    %p56 = scmp.eq.s32.totalorder %s15, 0
    %p57 = por %p55, %p56
    %p58 = scmp.ne.s32.totalorder %s46, %s47
    %p59 = scmp.eq.s32.totalorder %s16, 1
    %p60 = por %p58, %p59
    %p62 = scmp.ne.s32.totalorder %s47, %s61
    %p63 = scmp.eq.s32.totalorder %s16, 0
    %p64 = por %p62, %p63
    %s65 = ssub.s32 %s10, %s17
    %p66 = scmp.eq.s32.totalorder %s65, 0
    %s68 = sadd.s32 %s67, 1
    %s69 = scalar_select %p66, %s67, %s68
    %p72 = pneg %p66
    %p73 = scmp.eq.s32.totalorder %s10, 1
    %p74 = por %p72, %p73
    %p75 = scmp.ne.s32.totalorder %s67, %s70
    %p76 = scmp.eq.s32.totalorder %s10, 0
    %p77 = por %p75, %p76
    %p78 = scmp.ne.s32.totalorder %s67, %s70
    %p79 = scmp.eq.s32.totalorder %s15, 1
    %p80 = por %p78, %p79
    %p81 = scmp.ne.s32.totalorder %s70, %s71
    %p82 = scmp.eq.s32.totalorder %s15, 0
    %p83 = por %p81, %p82
    %p84 = scmp.ne.s32.totalorder %s70, %s71
    %p85 = scmp.eq.s32.totalorder %s16, 1
    %p86 = por %p84, %p85
    %p88 = scmp.ne.s32.totalorder %s71, %s87
    %p89 = scmp.eq.s32.totalorder %s16, 0
    %p90 = por %p88, %p89
    %s91 = ssub.s32 %s10, %s17
    %p92 = scmp.eq.s32.totalorder %s91, 0
    %s94 = sadd.s32 %s93, 1
    %s95 = scalar_select %p92, %s93, %s94
    %p98 = pneg %p92
    %p99 = scmp.eq.s32.totalorder %s10, 1
    %p100 = por %p98, %p99
    %p101 = scmp.ne.s32.totalorder %s93, %s96
    %p102 = scmp.eq.s32.totalorder %s10, 0
    %p103 = por %p101, %p102
    %p104 = scmp.ne.s32.totalorder %s93, %s96
    %p105 = scmp.eq.s32.totalorder %s15, 1
    %p106 = por %p104, %p105
    %p107 = scmp.ne.s32.totalorder %s96, %s97
    %p108 = scmp.eq.s32.totalorder %s15, 0
    %p109 = por %p107, %p108
    %p110 = scmp.ne.s32.totalorder %s96, %s97
    %p111 = scmp.eq.s32.totalorder %s16, 1
    %p112 = por %p110, %p111
    %p114 = scmp.ne.s32.totalorder %s97, %s113
    %p115 = scmp.eq.s32.totalorder %s16, 0
    %p116 = por %p114, %p115
    %p117 = scmp.le.s32.totalorder 1, %s10
    %p118 = scmp.lt.s32.totalorder %s10, 3
    %p119 = pnand %p117, %p118
    %p120 = pneg %p119
    // Predicated region
    $region9: #{linear_bottleneck_forward.4} parent=5 // pred_check
      _
    $region10: #{linear_bottleneck_forward.4} parent=5 // pred_check_branch
      %122 = sbr.rel (%p119) target = $region12
    $region11: #{linear_bottleneck_forward.4} parent=5 // pred_region
      %s123 = ssub.s32 %s10, 1
      // Predicated region
      $region13: #{linear_bottleneck_forward.4} parent=11 // pred_check
        %p124 = pneg %p57
      $region14: #{linear_bottleneck_forward.4} parent=11 // pred_check_branch
        %126 = sbr.rel (%p124) target = $region16
      $region15: #{linear_bottleneck_forward.4} parent=11 // pred_region
        _
      $region16: #{linear_bottleneck_forward.4} parent=11 // pred_fallthru
        _
    $region12: #{linear_bottleneck_forward.4} parent=5 // pred_fallthru
      _
    %p127 = scmp.lt.s32.totalorder %s10, 2
    // Predicated region
    $region17: #{linear_bottleneck_forward.4} parent=5 // pred_check
      %p128 = pneg %p127
    $region18: #{linear_bottleneck_forward.4} parent=5 // pred_check_branch
      %130 = sbr.rel (%p128) target = $region20
    $region19: #{linear_bottleneck_forward.4} parent=5 // pred_region
      // Predicated region
      $region21: #{linear_bottleneck_forward.4} parent=19 // pred_check
        %p131 = pneg %p30
      $region22: #{linear_bottleneck_forward.4} parent=19 // pred_check_branch
        %133 = sbr.rel (%p131) target = $region24
      $region23: #{linear_bottleneck_forward.4} parent=19 // pred_region
        %s134 = smul.u32 32, %s10
        %p135 = scmp.lt.s32.totalorder %s134, 63
        %s136 = scalar_select %p135, %s134, 63
        %s137 = smul.addr %s136, 8
        %s138 = scalar_lea.vmem %s0, %s137
        %s139 = smul.u32 32, %s10
      $region24: #{linear_bottleneck_forward.4} parent=19 // pred_fallthru
        _
    $region20: #{linear_bottleneck_forward.4} parent=5 // pred_fallthru
      _
    %p140 = scmp.le.s32.totalorder 1, %s10
    %p141 = scmp.lt.s32.totalorder %s10, 3
    %p142 = pnand %p140, %p141
    %p143 = pneg %p142
    // Predicated region
    $region25: #{linear_bottleneck_forward.4} parent=5 // pred_check
      _
    $region26: #{linear_bottleneck_forward.4} parent=5 // pred_check_branch
      %145 = sbr.rel (%p142) target = $region28
    $region27: #{linear_bottleneck_forward.4} parent=5 // pred_region
      %s146 = ssub.s32 %s10, 1
      %s147 = smul.u32 32, %s15
      %p148 = scmp.lt.s32.totalorder %s147, 63
      %s149 = scalar_select %p148, %s147, 63
      %s150 = smul.addr %s149, 8
      %s151 = scalar_lea.vmem %s0, %s150
      %p152 = pneg %p36
      %p153 = pneg %p33
      %p154 = pneg %p57
      %p155 = pneg %p54
      %p156 = pneg %p83
      %p157 = pneg %p80
      %s158 = smul.u32 32, %s15
      %p159 = scmp.lt.s32.totalorder %s158, 63
      %s160 = scalar_select %p159, %s158, 63
      %s161 = smul.addr %s160, 8
      %s162 = scalar_lea.vmem %s2, %s161
      %p163 = pneg %p109
      %p164 = pneg %p106
      %p165 = scmp.lt.s32.totalorder %s15, 1
      %s166 = scalar_select %p165, %s15, 1
      %s167 = smul.addr %s166, 2
      %s168 = scalar_lea.vmem %s3, %s167
      %s169 = smul.u32 32, %s15
      %p170 = scmp.lt.s32.totalorder %s169, 63
      %s171 = scalar_select %p170, %s169, 63
      %s172 = smul.addr %s171, 8
      %s173 = scalar_lea.vmem %s0, %s172
      %s174 = smul.u32 32, %s15
      %s175 = smul.u32 32, %s15
      %p176 = scmp.lt.s32.totalorder %s175, 63
      %s177 = scalar_select %p176, %s175, 63
      %s178 = smul.addr %s177, 8
      %s179 = scalar_lea.vmem %s2, %s178
      %s180 = smul.u32 32, %s15
      %p181 = scmp.lt.s32.totalorder %s15, 1
      %s182 = scalar_select %p181, %s15, 1
      %s183 = smul.addr %s182, 2
      %s184 = scalar_lea.vmem %s3, %s183
      %v185 = vld [vmem:[%s173] sm:$0xff]
      %v186 = vld [vmem:[%s173 + $0x8] sm:$0xff]
      %v187 = vld [vmem:[%s173 + $0x10] sm:$0xff]
      %v188 = vld [vmem:[%s173 + $0x18] sm:$0xff]
      %v189 = vld [vmem:[%s173 + $0x20] sm:$0xff]
      %v190 = vld [vmem:[%s173 + $0x28] sm:$0xff]
      %v191 = vld [vmem:[%s173 + $0x30] sm:$0xff]
      %v192 = vld [vmem:[%s173 + $0x38] sm:$0xff]
      %v193 = vld [vmem:[%s173 + $0x40] sm:$0xff]
      %v194 = vld [vmem:[%s173 + $0x48] sm:$0xff]
      %v195 = vld [vmem:[%s173 + $0x50] sm:$0xff]
      %v196 = vld [vmem:[%s173 + $0x58] sm:$0xff]
      %v197 = vld [vmem:[%s173 + $0x60] sm:$0xff]
      %v198 = vld [vmem:[%s173 + $0x68] sm:$0xff]
      %v199 = vld [vmem:[%s173 + $0x70] sm:$0xff]
      %v200 = vld [vmem:[%s173 + $0x78] sm:$0xff]
      %v201 = vld [vmem:[%s173 + $0x80] sm:$0xff]
      %v202 = vld [vmem:[%s173 + $0x88] sm:$0xff]
      %v203 = vld [vmem:[%s173 + $0x90] sm:$0xff]
      %v204 = vld [vmem:[%s173 + $0x98] sm:$0xff]
      %v205 = vld [vmem:[%s173 + $0xa0] sm:$0xff]
      %v206 = vld [vmem:[%s173 + $0xa8] sm:$0xff]
      %v207 = vld [vmem:[%s173 + $0xb0] sm:$0xff]
      %v208 = vld [vmem:[%s173 + $0xb8] sm:$0xff]
      %v209 = vld [vmem:[%s173 + $0xc0] sm:$0xff]
      %v210 = vld [vmem:[%s173 + $0xc8] sm:$0xff]
      %v211 = vld [vmem:[%s173 + $0xd0] sm:$0xff]
      %v212 = vld [vmem:[%s173 + $0xd8] sm:$0xff]
      %v213 = vld [vmem:[%s173 + $0xe0] sm:$0xff]
      %v214 = vld [vmem:[%s173 + $0xe8] sm:$0xff]
      %v215 = vld [vmem:[%s173 + $0xf0] sm:$0xff]
      %v216 = vld [vmem:[%s173 + $0xf8] sm:$0xff]
      %v217 = vld [vmem:[%s1] sm:$0xf]
      %vm218 = vcmask 31744
      %v220 = vsel %vm218, %v185, 0
      %v223 = vsel %vm218, %v186, 0
      %v226 = vsel %vm218, %v187, 0
      %v229 = vsel %vm218, %v188, 0
      %v232 = vsel %vm218, %v189, 0
      %v235 = vsel %vm218, %v190, 0
      %v238 = vsel %vm218, %v191, 0
      %v241 = vsel %vm218, %v192, 0
      %v244 = vsel %vm218, %v193, 0
      %v247 = vsel %vm218, %v194, 0
      %v250 = vsel %vm218, %v195, 0
      %v253 = vsel %vm218, %v196, 0
      %v256 = vsel %vm218, %v197, 0
      %v259 = vsel %vm218, %v198, 0
      %v262 = vsel %vm218, %v199, 0
      %v265 = vsel %vm218, %v200, 0
      %v268 = vsel %vm218, %v201, 0
      %v271 = vsel %vm218, %v202, 0
      %v274 = vsel %vm218, %v203, 0
      %v277 = vsel %vm218, %v204, 0
      %v280 = vsel %vm218, %v205, 0
      %v283 = vsel %vm218, %v206, 0
      %v286 = vsel %vm218, %v207, 0
      %v289 = vsel %vm218, %v208, 0
      %v292 = vsel %vm218, %v209, 0
      %v295 = vsel %vm218, %v210, 0
      %v298 = vsel %vm218, %v211, 0
      %v301 = vsel %vm218, %v212, 0
      %v304 = vsel %vm218, %v213, 0
      %v307 = vsel %vm218, %v214, 0
      %v310 = vsel %vm218, %v215, 0
      %v313 = vsel %vm218, %v216, 0
      %vm315 = vcmask 1043456
      %v317 = vsel %vm315, %v217, 0
      %319 = vmatpush.msra.mxu0 0.0
      %320 = vmatpush.msra.mxu0 0.0
      %321 = vmatpush.msra.mxu0 0.0
      %322 = vmatpush.msra.mxu0 0.0
      %323 = vmatpush.msra.mxu0 0.0
      %324 = vmatpush.msra.mxu0 0.0
      %325 = vmatpush.msra.mxu0 0.0
      %326 = vmatpush.msra.mxu0 0.0
      %327 = vmatpush.msra.mxu0 0.0
      %328 = vmatpush.msra.mxu0 0.0
      %329 = vmatpush.msra.mxu0 0.0
      %330 = vmatpush.msra.mxu0 0.0
      %331 = vmatpush.msra.mxu0 0.0
      %332 = vmatpush.msra.mxu0 0.0
      %333 = vmatpush.msra.mxu0 0.0
      %334 = vmatpush.msra.mxu0 %v317
      %335 = vmatmul.f32.gmra.mxu0 %v220
      %v336 = vpop.f32.mrf.mxu0
      %v337 = vadd.f32 0.0, %v336
      %338 = vmatmul.f32.gmra.mxu0 %v223
      %v339 = vpop.f32.mrf.mxu0
      %v340 = vadd.f32 0.0, %v339
      %341 = vmatmul.f32.gmra.mxu0 %v226
      %v342 = vpop.f32.mrf.mxu0
      %v343 = vadd.f32 0.0, %v342
      %344 = vmatmul.f32.gmra.mxu0 %v229
      %v345 = vpop.f32.mrf.mxu0
      %v346 = vadd.f32 0.0, %v345
      %347 = vmatmul.f32.gmra.mxu0 %v232
      %v348 = vpop.f32.mrf.mxu0
      %v349 = vadd.f32 0.0, %v348
      %350 = vmatmul.f32.gmra.mxu0 %v235
      %v351 = vpop.f32.mrf.mxu0
      %v352 = vadd.f32 0.0, %v351
      %353 = vmatmul.f32.gmra.mxu0 %v238
      %v354 = vpop.f32.mrf.mxu0
      %v355 = vadd.f32 0.0, %v354
      %356 = vmatmul.f32.gmra.mxu0 %v241
      %v357 = vpop.f32.mrf.mxu0
      %v358 = vadd.f32 0.0, %v357
      %359 = vmatmul.f32.gmra.mxu0 %v244
      %v360 = vpop.f32.mrf.mxu0
      %v361 = vadd.f32 0.0, %v360
      %362 = vmatmul.f32.gmra.mxu0 %v247
      %v363 = vpop.f32.mrf.mxu0
      %v364 = vadd.f32 0.0, %v363
      %365 = vmatmul.f32.gmra.mxu0 %v250
      %v366 = vpop.f32.mrf.mxu0
      %v367 = vadd.f32 0.0, %v366
      %368 = vmatmul.f32.gmra.mxu0 %v253
      %v369 = vpop.f32.mrf.mxu0
      %v370 = vadd.f32 0.0, %v369
      %371 = vmatmul.f32.gmra.mxu0 %v256
      %v372 = vpop.f32.mrf.mxu0
      %v373 = vadd.f32 0.0, %v372
      %374 = vmatmul.f32.gmra.mxu0 %v259
      %v375 = vpop.f32.mrf.mxu0
      %v376 = vadd.f32 0.0, %v375
      %377 = vmatmul.f32.gmra.mxu0 %v262
      %v378 = vpop.f32.mrf.mxu0
      %v379 = vadd.f32 0.0, %v378
      %380 = vmatmul.f32.gmra.mxu0 %v265
      %v381 = vpop.f32.mrf.mxu0
      %v382 = vadd.f32 0.0, %v381
      %383 = vmatmul.f32.gmra.mxu0 %v268
      %v384 = vpop.f32.mrf.mxu0
      %v385 = vadd.f32 0.0, %v384
      %386 = vmatmul.f32.gmra.mxu0 %v271
      %v387 = vpop.f32.mrf.mxu0
      %v388 = vadd.f32 0.0, %v387
      %389 = vmatmul.f32.gmra.mxu0 %v274
      %v390 = vpop.f32.mrf.mxu0
      %v391 = vadd.f32 0.0, %v390
      %392 = vmatmul.f32.gmra.mxu0 %v277
      %v393 = vpop.f32.mrf.mxu0
      %v394 = vadd.f32 0.0, %v393
      %395 = vmatmul.f32.gmra.mxu0 %v280
      %v396 = vpop.f32.mrf.mxu0
      %v397 = vadd.f32 0.0, %v396
      %398 = vmatmul.f32.gmra.mxu0 %v283
      %v399 = vpop.f32.mrf.mxu0
      %v400 = vadd.f32 0.0, %v399
      %401 = vmatmul.f32.gmra.mxu0 %v286
      %v402 = vpop.f32.mrf.mxu0
      %v403 = vadd.f32 0.0, %v402
      %404 = vmatmul.f32.gmra.mxu0 %v289
      %v405 = vpop.f32.mrf.mxu0
      %v406 = vadd.f32 0.0, %v405
      %407 = vmatmul.f32.gmra.mxu0 %v292
      %v408 = vpop.f32.mrf.mxu0
      %v409 = vadd.f32 0.0, %v408
      %410 = vmatmul.f32.gmra.mxu0 %v295
      %v411 = vpop.f32.mrf.mxu0
      %v412 = vadd.f32 0.0, %v411
      %413 = vmatmul.f32.gmra.mxu0 %v298
      %v414 = vpop.f32.mrf.mxu0
      %v415 = vadd.f32 0.0, %v414
      %416 = vmatmul.f32.gmra.mxu0 %v301
      %v417 = vpop.f32.mrf.mxu0
      %v418 = vadd.f32 0.0, %v417
      %419 = vmatmul.f32.gmra.mxu0 %v304
      %v420 = vpop.f32.mrf.mxu0
      %v421 = vadd.f32 0.0, %v420
      %422 = vmatmul.f32.gmra.mxu0 %v307
      %v423 = vpop.f32.mrf.mxu0
      %v424 = vadd.f32 0.0, %v423
      %425 = vmatmul.f32.gmra.mxu0 %v310
      %v426 = vpop.f32.mrf.mxu0
      %v427 = vadd.f32 0.0, %v426
      %428 = vmatmul.f32.gmra.mxu0 %v313
      %v429 = vpop.f32.mrf.mxu0
      %v430 = vadd.f32 0.0, %v429
      %431 = vdwg.mxu0
      %vm432 = vcmask 195584
      %433 = vst.msk [vmem:[%s179] sm:$0xff] %vm432, %v337
      %434 = vst.msk [vmem:[%s179 + $0x8] sm:$0xff] %vm432, %v340
      %435 = vst.msk [vmem:[%s179 + $0x10] sm:$0xff] %vm432, %v343
      %436 = vst.msk [vmem:[%s179 + $0x18] sm:$0xff] %vm432, %v346
      %437 = vst.msk [vmem:[%s179 + $0x20] sm:$0xff] %vm432, %v349
      %438 = vst.msk [vmem:[%s179 + $0x28] sm:$0xff] %vm432, %v352
      %439 = vst.msk [vmem:[%s179 + $0x30] sm:$0xff] %vm432, %v355
      %440 = vst.msk [vmem:[%s179 + $0x38] sm:$0xff] %vm432, %v358
      %441 = vst.msk [vmem:[%s179 + $0x40] sm:$0xff] %vm432, %v361
      %442 = vst.msk [vmem:[%s179 + $0x48] sm:$0xff] %vm432, %v364
      %443 = vst.msk [vmem:[%s179 + $0x50] sm:$0xff] %vm432, %v367
      %444 = vst.msk [vmem:[%s179 + $0x58] sm:$0xff] %vm432, %v370
      %445 = vst.msk [vmem:[%s179 + $0x60] sm:$0xff] %vm432, %v373
      %446 = vst.msk [vmem:[%s179 + $0x68] sm:$0xff] %vm432, %v376
      %447 = vst.msk [vmem:[%s179 + $0x70] sm:$0xff] %vm432, %v379
      %448 = vst.msk [vmem:[%s179 + $0x78] sm:$0xff] %vm432, %v382
      %449 = vst.msk [vmem:[%s179 + $0x80] sm:$0xff] %vm432, %v385
      %450 = vst.msk [vmem:[%s179 + $0x88] sm:$0xff] %vm432, %v388
      %451 = vst.msk [vmem:[%s179 + $0x90] sm:$0xff] %vm432, %v391
      %452 = vst.msk [vmem:[%s179 + $0x98] sm:$0xff] %vm432, %v394
      %453 = vst.msk [vmem:[%s179 + $0xa0] sm:$0xff] %vm432, %v397
      %454 = vst.msk [vmem:[%s179 + $0xa8] sm:$0xff] %vm432, %v400
      %455 = vst.msk [vmem:[%s179 + $0xb0] sm:$0xff] %vm432, %v403
      %456 = vst.msk [vmem:[%s179 + $0xb8] sm:$0xff] %vm432, %v406
      %457 = vst.msk [vmem:[%s179 + $0xc0] sm:$0xff] %vm432, %v409
      %458 = vst.msk [vmem:[%s179 + $0xc8] sm:$0xff] %vm432, %v412
      %459 = vst.msk [vmem:[%s179 + $0xd0] sm:$0xff] %vm432, %v415
      %460 = vst.msk [vmem:[%s179 + $0xd8] sm:$0xff] %vm432, %v418
      %461 = vst.msk [vmem:[%s179 + $0xe0] sm:$0xff] %vm432, %v421
      %462 = vst.msk [vmem:[%s179 + $0xe8] sm:$0xff] %vm432, %v424
      %463 = vst.msk [vmem:[%s179 + $0xf0] sm:$0xff] %vm432, %v427
      %464 = vst.msk [vmem:[%s179 + $0xf8] sm:$0xff] %vm432, %v430
      %v465 = vsel %vm432, %v337, 0.0
      %v466 = vsel %vm432, %v340, 0.0
      %v467 = vadd.f32 %v465, %v466
      %v468 = vsel %vm432, %v343, 0.0
      %v469 = vadd.f32 %v467, %v468
      %v470 = vsel %vm432, %v346, 0.0
      %v471 = vadd.f32 %v469, %v470
      %v472 = vsel %vm432, %v349, 0.0
      %v473 = vadd.f32 %v471, %v472
      %v474 = vsel %vm432, %v352, 0.0
      %v475 = vadd.f32 %v473, %v474
      %v476 = vsel %vm432, %v355, 0.0
      %v477 = vadd.f32 %v475, %v476
      %v478 = vsel %vm432, %v358, 0.0
      %v479 = vadd.f32 %v477, %v478
      %v480 = vsel %vm432, %v361, 0.0
      %v481 = vadd.f32 %v479, %v480
      %v482 = vsel %vm432, %v364, 0.0
      %v483 = vadd.f32 %v481, %v482
      %v484 = vsel %vm432, %v367, 0.0
      %v485 = vadd.f32 %v483, %v484
      %v486 = vsel %vm432, %v370, 0.0
      %v487 = vadd.f32 %v485, %v486
      %v488 = vsel %vm432, %v373, 0.0
      %v489 = vadd.f32 %v487, %v488
      %v490 = vsel %vm432, %v376, 0.0
      %v491 = vadd.f32 %v489, %v490
      %v492 = vsel %vm432, %v379, 0.0
      %v493 = vadd.f32 %v491, %v492
      %v494 = vsel %vm432, %v382, 0.0
      %v495 = vadd.f32 %v493, %v494
      %v496 = vsel %vm432, %v385, 0.0
      %v497 = vadd.f32 %v495, %v496
      %v498 = vsel %vm432, %v388, 0.0
      %v499 = vadd.f32 %v497, %v498
      %v500 = vsel %vm432, %v391, 0.0
      %v501 = vadd.f32 %v499, %v500
      %v502 = vsel %vm432, %v394, 0.0
      %v503 = vadd.f32 %v501, %v502
      %v504 = vsel %vm432, %v397, 0.0
      %v505 = vadd.f32 %v503, %v504
      %v506 = vsel %vm432, %v400, 0.0
      %v507 = vadd.f32 %v505, %v506
      %v508 = vsel %vm432, %v403, 0.0
      %v509 = vadd.f32 %v507, %v508
      %v510 = vsel %vm432, %v406, 0.0
      %v511 = vadd.f32 %v509, %v510
      %v512 = vsel %vm432, %v409, 0.0
      %v513 = vadd.f32 %v511, %v512
      %v514 = vsel %vm432, %v412, 0.0
      %v515 = vadd.f32 %v513, %v514
      %v516 = vsel %vm432, %v415, 0.0
      %v517 = vadd.f32 %v515, %v516
      %v518 = vsel %vm432, %v418, 0.0
      %v519 = vadd.f32 %v517, %v518
      %v520 = vsel %vm432, %v421, 0.0
      %v521 = vadd.f32 %v519, %v520
      %v522 = vsel %vm432, %v424, 0.0
      %v523 = vadd.f32 %v521, %v522
      %v524 = vsel %vm432, %v427, 0.0
      %v525 = vadd.f32 %v523, %v524
      %v526 = vsel %vm432, %v430, 0.0
      %v527 = vadd.f32 %v525, %v526
      %v528 = vrot.slane %v527, 4
      %v529 = vadd.f32 %v527, %v528
      %v530 = vrot.slane %v529, 2
      %v531 = vadd.f32 %v529, %v530
      %v532 = vrot.slane %v531, 1
      %v533 = vadd.f32 %v531, %v532
      %vm534 = vcmask 188416
      %535 = vst.msk [vmem:[%s184] sm:$0x1] %vm534, %v533
      %v536 = vmul.f32 %v337, %v337
      %v537 = vmul.f32 %v340, %v340
      %v538 = vmul.f32 %v343, %v343
      %v539 = vmul.f32 %v346, %v346
      %v540 = vmul.f32 %v349, %v349
      %v541 = vmul.f32 %v352, %v352
      %v542 = vmul.f32 %v355, %v355
      %v543 = vmul.f32 %v358, %v358
      %v544 = vmul.f32 %v361, %v361
      %v545 = vmul.f32 %v364, %v364
      %v546 = vmul.f32 %v367, %v367
      %v547 = vmul.f32 %v370, %v370
      %v548 = vmul.f32 %v373, %v373
      %v549 = vmul.f32 %v376, %v376
      %v550 = vmul.f32 %v379, %v379
      %v551 = vmul.f32 %v382, %v382
      %v552 = vmul.f32 %v385, %v385
      %v553 = vmul.f32 %v388, %v388
      %v554 = vmul.f32 %v391, %v391
      %v555 = vmul.f32 %v394, %v394
      %v556 = vmul.f32 %v397, %v397
      %v557 = vmul.f32 %v400, %v400
      %v558 = vmul.f32 %v403, %v403
      %v559 = vmul.f32 %v406, %v406
      %v560 = vmul.f32 %v409, %v409
      %v561 = vmul.f32 %v412, %v412
      %v562 = vmul.f32 %v415, %v415
      %v563 = vmul.f32 %v418, %v418
      %v564 = vmul.f32 %v421, %v421
      %v565 = vmul.f32 %v424, %v424
      %v566 = vmul.f32 %v427, %v427
      %v567 = vmul.f32 %v430, %v430
      %v568 = vsel %vm432, %v536, 0.0
      %v569 = vsel %vm432, %v537, 0.0
      %v570 = vadd.f32 %v568, %v569
      %v571 = vsel %vm432, %v538, 0.0
      %v572 = vadd.f32 %v570, %v571
      %v573 = vsel %vm432, %v539, 0.0
      %v574 = vadd.f32 %v572, %v573
      %v575 = vsel %vm432, %v540, 0.0
      %v576 = vadd.f32 %v574, %v575
      %v577 = vsel %vm432, %v541, 0.0
      %v578 = vadd.f32 %v576, %v577
      %v579 = vsel %vm432, %v542, 0.0
      %v580 = vadd.f32 %v578, %v579
      %v581 = vsel %vm432, %v543, 0.0
      %v582 = vadd.f32 %v580, %v581
      %v583 = vsel %vm432, %v544, 0.0
      %v584 = vadd.f32 %v582, %v583
      %v585 = vsel %vm432, %v545, 0.0
      %v586 = vadd.f32 %v584, %v585
      %v587 = vsel %vm432, %v546, 0.0
      %v588 = vadd.f32 %v586, %v587
      %v589 = vsel %vm432, %v547, 0.0
      %v590 = vadd.f32 %v588, %v589
      %v591 = vsel %vm432, %v548, 0.0
      %v592 = vadd.f32 %v590, %v591
      %v593 = vsel %vm432, %v549, 0.0
      %v594 = vadd.f32 %v592, %v593
      %v595 = vsel %vm432, %v550, 0.0
      %v596 = vadd.f32 %v594, %v595
      %v597 = vsel %vm432, %v551, 0.0
      %v598 = vadd.f32 %v596, %v597
      %v599 = vsel %vm432, %v552, 0.0
      %v600 = vadd.f32 %v598, %v599
      %v601 = vsel %vm432, %v553, 0.0
      %v602 = vadd.f32 %v600, %v601
      %v603 = vsel %vm432, %v554, 0.0
      %v604 = vadd.f32 %v602, %v603
      %v605 = vsel %vm432, %v555, 0.0
      %v606 = vadd.f32 %v604, %v605
      %v607 = vsel %vm432, %v556, 0.0
      %v608 = vadd.f32 %v606, %v607
      %v609 = vsel %vm432, %v557, 0.0
      %v610 = vadd.f32 %v608, %v609
      %v611 = vsel %vm432, %v558, 0.0
      %v612 = vadd.f32 %v610, %v611
      %v613 = vsel %vm432, %v559, 0.0
      %v614 = vadd.f32 %v612, %v613
      %v615 = vsel %vm432, %v560, 0.0
      %v616 = vadd.f32 %v614, %v615
      %v617 = vsel %vm432, %v561, 0.0
      %v618 = vadd.f32 %v616, %v617
      %v619 = vsel %vm432, %v562, 0.0
      %v620 = vadd.f32 %v618, %v619
      %v621 = vsel %vm432, %v563, 0.0
      %v622 = vadd.f32 %v620, %v621
      %v623 = vsel %vm432, %v564, 0.0
      %v624 = vadd.f32 %v622, %v623
      %v625 = vsel %vm432, %v565, 0.0
      %v626 = vadd.f32 %v624, %v625
      %v627 = vsel %vm432, %v566, 0.0
      %v628 = vadd.f32 %v626, %v627
      %v629 = vsel %vm432, %v567, 0.0
      %v630 = vadd.f32 %v628, %v629
      %v631 = vrot.slane %v630, 4
      %v632 = vadd.f32 %v630, %v631
      %v633 = vrot.slane %v632, 2
      %v634 = vadd.f32 %v632, %v633
      %v635 = vrot.slane %v634, 1
      %v636 = vadd.f32 %v634, %v635
      %637 = vst.msk [vmem:[%s184 + $0x1] sm:$0x1] %vm534, %v636
      %s638 = smul.u32 32, %s15
      %p639 = scmp.lt.s32.totalorder %s638, 63
      %s640 = scalar_select %p639, %s638, 63
      %s641 = smul.addr %s640, 8
      %s642 = scalar_lea.vmem %s2, %s641
      %p643 = scmp.lt.s32.totalorder %s15, 1
      %s644 = scalar_select %p643, %s15, 1
      %s645 = smul.addr %s644, 2
      %s646 = scalar_lea.vmem %s3, %s645
      // Predicated region
      $region29: #{linear_bottleneck_forward.4} parent=27 // pred_check
        %p647 = pneg %p80
      $region30: #{linear_bottleneck_forward.4} parent=27 // pred_check_branch
        %649 = sbr.rel (%p647) target = $region32
      $region31: #{linear_bottleneck_forward.4} parent=27 // pred_region
        %s650 = smul.u32 32, %s15
      $region32: #{linear_bottleneck_forward.4} parent=27 // pred_fallthru
        _
      // Predicated region
      $region33: #{linear_bottleneck_forward.4} parent=27 // pred_check
        %p651 = pneg %p106
      $region34: #{linear_bottleneck_forward.4} parent=27 // pred_check_branch
        %653 = sbr.rel (%p651) target = $region36
      $region35: #{linear_bottleneck_forward.4} parent=27 // pred_region
        _
      $region36: #{linear_bottleneck_forward.4} parent=27 // pred_fallthru
        _
    $region28: #{linear_bottleneck_forward.4} parent=5 // pred_fallthru
      _
    %p654 = scmp.le.s32.totalorder 2, %s10
    // Predicated region
    $region37: #{linear_bottleneck_forward.4} parent=5 // pred_check
      %p655 = pneg %p654
    $region38: #{linear_bottleneck_forward.4} parent=5 // pred_check_branch
      %657 = sbr.rel (%p655) target = $region40
    $region39: #{linear_bottleneck_forward.4} parent=5 // pred_region
      %s658 = ssub.s32 %s10, 2
      // Predicated region
      $region41: #{linear_bottleneck_forward.4} parent=39 // pred_check
        %p659 = pneg %p86
      $region42: #{linear_bottleneck_forward.4} parent=39 // pred_check_branch
        %661 = sbr.rel (%p659) target = $region44
      $region43: #{linear_bottleneck_forward.4} parent=39 // pred_region
        %s662 = smul.u32 32, %s16
        %p663 = scmp.lt.s32.totalorder %s662, 63
        %s664 = scalar_select %p663, %s662, 63
        %s665 = smul.addr %s664, 8
        %s666 = scalar_lea.vmem %s2, %s665
      $region44: #{linear_bottleneck_forward.4} parent=39 // pred_fallthru
        _
      // Predicated region
      $region45: #{linear_bottleneck_forward.4} parent=39 // pred_check
        %p667 = pneg %p112
      $region46: #{linear_bottleneck_forward.4} parent=39 // pred_check_branch
        %669 = sbr.rel (%p667) target = $region48
      $region47: #{linear_bottleneck_forward.4} parent=39 // pred_region
        %p670 = scmp.lt.s32.totalorder %s16, 1
        %s671 = scalar_select %p670, %s16, 1
        %s672 = smul.addr %s671, 2
        %s673 = scalar_lea.vmem %s3, %s672
      $region48: #{linear_bottleneck_forward.4} parent=39 // pred_fallthru
        _
    $region40: #{linear_bottleneck_forward.4} parent=5 // pred_fallthru
      _
  $region6: #{linear_bottleneck_forward.4} parent=0 // loop_footer
    %s14 = sadd.s32 1, %s10
  $region7: #{linear_bottleneck_forward.4} parent=0 // loop_footer_branch
    %9 = sbr.rel target = $region3
  $region8: #{linear_bottleneck_forward.4} parent=0 // loop_exit
    _

// kernel: linear_bottleneck_forward.6
$region0: #{linear_bottleneck_forward.6}
  #allocation0 [shape = 'u32[]', space=smem, size = 0x4, offset = 0x4, fixed_abs, tag = 'smem constant byte address 0x4 - core index']
  #allocation1 [shape = 'u32[72,128]{1,0:T(1,128)}', space=vmem, size = 0x9000, scoped, tag = 'internal scratch']
  %s0 = inlined_call_operand.vmem [shape: f32[512,24], index: 0, kind: input, shape index: {}]
  %s1 = inlined_call_operand.vmem [shape: f32[2,24], index: 1, kind: input, shape index: {}]
  %s2 = inlined_call_operand.vmem [shape: f32[24,4], index: 2, kind: input, shape index: {}]
  %s3 = inlined_call_operand.vmem [shape: f32[512,4], index: 3, kind: output, shape index: {0}]
  %s4 = inlined_call_operand.vmem [shape: f32[2,2,4], index: 4, kind: output, shape index: {1}]
  %5 = xla_tuple %s3, %s4
  %s6 = sld [smem:[#allocation0]]
  $region53: #{linear_bottleneck_forward.6} parent=0
    _
  %s8 = ssub.s32 1, %s6
  %s9 = scalar_select 0, %s8, %s6
  loop: start=0, step=1, limit=4
  $region2: #{linear_bottleneck_forward.6} parent=0 // loop_pre_header
    _
  $region3: #{linear_bottleneck_forward.6} parent=0 // loop_header
    %s11 = sphi 0, %s15
    %p12 = scmp.ge.s32.totalorder %s11, 4
    %s21 = sphi 0, %s23
    %s24 = sphi 0, %s21
    %s25 = sphi 0, %s24
    %s41 = sphi 0, %s25
    %s45 = sphi 0, %s45
    %s47 = sphi 0, %s45
    %s48 = sphi 0, %s47
    %s62 = sphi 0, %s48
    %s66 = sphi 0, %s66
    %s68 = sphi 0, %s66
    %s69 = sphi 0, %s68
    %s83 = sphi 0, %s69
    %s89 = sphi 0, %s91
    %s92 = sphi 0, %s89
    %s93 = sphi 0, %s92
    %s109 = sphi 0, %s93
    %s115 = sphi 0, %s117
    %s118 = sphi 0, %s115
    %s119 = sphi 0, %s118
    %s135 = sphi 0, %s119
  $region4: #{linear_bottleneck_forward.6} parent=0 // loop_header_branch
    %14 = sbr.rel (%p12) target = $region8
  $region5: #{linear_bottleneck_forward.6} parent=0 // loop_body
    %s16 = ssub.s32 %s11, 1
    %s17 = ssub.s32 %s11, 2
    %s18 = sadd.s32 %s11, 1
    %s19 = ssub.s32 %s11, %s18
    %p20 = scmp.eq.s32.totalorder %s19, 0
    %s22 = sadd.s32 %s21, 1
    %s23 = scalar_select %p20, %s21, %s22
    %p26 = pneg %p20
    %p27 = scmp.eq.s32.totalorder %s11, 1
    %p28 = por %p26, %p27
    %p29 = scmp.ne.s32.totalorder %s21, %s24
    %p30 = scmp.eq.s32.totalorder %s11, 0
    %p31 = por %p29, %p30
    %p32 = scmp.ne.s32.totalorder %s21, %s24
    %p33 = scmp.eq.s32.totalorder %s16, 1
    %p34 = por %p32, %p33
    %p35 = scmp.ne.s32.totalorder %s24, %s25
    %p36 = scmp.eq.s32.totalorder %s16, 0
    %p37 = por %p35, %p36
    %p38 = scmp.ne.s32.totalorder %s24, %s25
    %p39 = scmp.eq.s32.totalorder %s17, 1
    %p40 = por %p38, %p39
    %p42 = scmp.ne.s32.totalorder %s25, %s41
    %p43 = scmp.eq.s32.totalorder %s17, 0
    %p44 = por %p42, %p43
    %s46 = sadd.s32 %s45, 1
    %p49 = scmp.eq.s32.totalorder %s11, 1
    %p50 = scmp.ne.s32.totalorder %s45, %s47
    %p51 = scmp.eq.s32.totalorder %s11, 0
    %p52 = por %p50, %p51
    %p53 = scmp.ne.s32.totalorder %s45, %s47
    %p54 = scmp.eq.s32.totalorder %s16, 1
    %p55 = por %p53, %p54
    %p56 = scmp.ne.s32.totalorder %s47, %s48
    %p57 = scmp.eq.s32.totalorder %s16, 0
    %p58 = por %p56, %p57
    %p59 = scmp.ne.s32.totalorder %s47, %s48
    %p60 = scmp.eq.s32.totalorder %s17, 1
    %p61 = por %p59, %p60
    %p63 = scmp.ne.s32.totalorder %s48, %s62
    %p64 = scmp.eq.s32.totalorder %s17, 0
    %p65 = por %p63, %p64
    %s67 = sadd.s32 %s66, 1
    %p70 = scmp.eq.s32.totalorder %s11, 1
    %p71 = scmp.ne.s32.totalorder %s66, %s68
    %p72 = scmp.eq.s32.totalorder %s11, 0
    %p73 = por %p71, %p72
    %p74 = scmp.ne.s32.totalorder %s66, %s68
    %p75 = scmp.eq.s32.totalorder %s16, 1
    %p76 = por %p74, %p75
    %p77 = scmp.ne.s32.totalorder %s68, %s69
    %p78 = scmp.eq.s32.totalorder %s16, 0
    %p79 = por %p77, %p78
    %p80 = scmp.ne.s32.totalorder %s68, %s69
    %p81 = scmp.eq.s32.totalorder %s17, 1
    %p82 = por %p80, %p81
    %p84 = scmp.ne.s32.totalorder %s69, %s83
    %p85 = scmp.eq.s32.totalorder %s17, 0
    %p86 = por %p84, %p85
    %s87 = ssub.s32 %s11, %s18
    %p88 = scmp.eq.s32.totalorder %s87, 0
    %s90 = sadd.s32 %s89, 1
    %s91 = scalar_select %p88, %s89, %s90
    %p94 = pneg %p88
    %p95 = scmp.eq.s32.totalorder %s11, 1
    %p96 = por %p94, %p95
    %p97 = scmp.ne.s32.totalorder %s89, %s92
    %p98 = scmp.eq.s32.totalorder %s11, 0
    %p99 = por %p97, %p98
    %p100 = scmp.ne.s32.totalorder %s89, %s92
    %p101 = scmp.eq.s32.totalorder %s16, 1
    %p102 = por %p100, %p101
    %p103 = scmp.ne.s32.totalorder %s92, %s93
    %p104 = scmp.eq.s32.totalorder %s16, 0
    %p105 = por %p103, %p104
    %p106 = scmp.ne.s32.totalorder %s92, %s93
    %p107 = scmp.eq.s32.totalorder %s17, 1
    %p108 = por %p106, %p107
    %p110 = scmp.ne.s32.totalorder %s93, %s109
    %p111 = scmp.eq.s32.totalorder %s17, 0
    %p112 = por %p110, %p111
    %s113 = ssub.s32 %s11, %s18
    %p114 = scmp.eq.s32.totalorder %s113, 0
    %s116 = sadd.s32 %s115, 1
    %s117 = scalar_select %p114, %s115, %s116
    %p120 = pneg %p114
    %p121 = scmp.eq.s32.totalorder %s11, 1
    %p122 = por %p120, %p121
    %p123 = scmp.ne.s32.totalorder %s115, %s118
    %p124 = scmp.eq.s32.totalorder %s11, 0
    %p125 = por %p123, %p124
    %p126 = scmp.ne.s32.totalorder %s115, %s118
    %p127 = scmp.eq.s32.totalorder %s16, 1
    %p128 = por %p126, %p127
    %p129 = scmp.ne.s32.totalorder %s118, %s119
    %p130 = scmp.eq.s32.totalorder %s16, 0
    %p131 = por %p129, %p130
    %p132 = scmp.ne.s32.totalorder %s118, %s119
    %p133 = scmp.eq.s32.totalorder %s17, 1
    %p134 = por %p132, %p133
    %p136 = scmp.ne.s32.totalorder %s119, %s135
    %p137 = scmp.eq.s32.totalorder %s17, 0
    %p138 = por %p136, %p137
    %p139 = scmp.le.s32.totalorder 1, %s11
    %p140 = scmp.lt.s32.totalorder %s11, 3
    %p141 = pnand %p139, %p140
    %p142 = pneg %p141
    // Predicated region
    $region9: #{linear_bottleneck_forward.6} parent=5 // pred_check
      _
    $region10: #{linear_bottleneck_forward.6} parent=5 // pred_check_branch
      %144 = sbr.rel (%p141) target = $region12
    $region11: #{linear_bottleneck_forward.6} parent=5 // pred_region
      %s145 = ssub.s32 %s11, 1
      // Predicated region
      $region13: #{linear_bottleneck_forward.6} parent=11 // pred_check
        %p146 = pneg %p58
      $region14: #{linear_bottleneck_forward.6} parent=11 // pred_check_branch
        %148 = sbr.rel (%p146) target = $region16
      $region15: #{linear_bottleneck_forward.6} parent=11 // pred_region
        _
      $region16: #{linear_bottleneck_forward.6} parent=11 // pred_fallthru
        _
      // Predicated region
      $region17: #{linear_bottleneck_forward.6} parent=11 // pred_check
        %p149 = pneg %p79
      $region18: #{linear_bottleneck_forward.6} parent=11 // pred_check_branch
        %151 = sbr.rel (%p149) target = $region20
      $region19: #{linear_bottleneck_forward.6} parent=11 // pred_region
        _
      $region20: #{linear_bottleneck_forward.6} parent=11 // pred_fallthru
        _
    $region12: #{linear_bottleneck_forward.6} parent=5 // pred_fallthru
      _
    %p152 = scmp.lt.s32.totalorder %s11, 2
    // Predicated region
    $region21: #{linear_bottleneck_forward.6} parent=5 // pred_check
      %p153 = pneg %p152
    $region22: #{linear_bottleneck_forward.6} parent=5 // pred_check_branch
      %155 = sbr.rel (%p153) target = $region24
    $region23: #{linear_bottleneck_forward.6} parent=5 // pred_region
      // Predicated region
      $region25: #{linear_bottleneck_forward.6} parent=23 // pred_check
        %p156 = pneg %p31
      $region26: #{linear_bottleneck_forward.6} parent=23 // pred_check_branch
        %158 = sbr.rel (%p156) target = $region28
      $region27: #{linear_bottleneck_forward.6} parent=23 // pred_region
        %s159 = smul.u32 32, %s11
        %p160 = scmp.lt.s32.totalorder %s159, 63
        %s161 = scalar_select %p160, %s159, 63
        %s162 = smul.addr %s161, 8
        %s163 = scalar_lea.vmem %s0, %s162
        %s164 = smul.u32 32, %s11
      $region28: #{linear_bottleneck_forward.6} parent=23 // pred_fallthru
        _
    $region24: #{linear_bottleneck_forward.6} parent=5 // pred_fallthru
      _
    %p165 = scmp.le.s32.totalorder 1, %s11
    %p166 = scmp.lt.s32.totalorder %s11, 3
    %p167 = pnand %p165, %p166
    %p168 = pneg %p167
    // Predicated region
    $region29: #{linear_bottleneck_forward.6} parent=5 // pred_check
      _
    $region30: #{linear_bottleneck_forward.6} parent=5 // pred_check_branch
      %170 = sbr.rel (%p167) target = $region32
    $region31: #{linear_bottleneck_forward.6} parent=5 // pred_region
      %s171 = ssub.s32 %s11, 1
      %s172 = smul.u32 32, %s16
      %p173 = scmp.lt.s32.totalorder %s172, 63
      %s174 = scalar_select %p173, %s172, 63
      %s175 = smul.addr %s174, 8
      %s176 = scalar_lea.vmem %s0, %s175
      %p177 = pneg %p37
      %p178 = pneg %p34
      %p179 = pneg %p58
      %p180 = pneg %p55
      %p181 = pneg %p79
      %p182 = pneg %p76
      %p183 = pneg %p105
      %p184 = pneg %p102
      %s185 = smul.u32 32, %s16
      %p186 = scmp.lt.s32.totalorder %s185, 63
      %s187 = scalar_select %p186, %s185, 63
      %s188 = smul.addr %s187, 8
      %s189 = scalar_lea.vmem %s3, %s188
      %p190 = pneg %p131
      %p191 = pneg %p128
      %p192 = scmp.lt.s32.totalorder %s16, 1
      %s193 = scalar_select %p192, %s16, 1
      %s194 = smul.addr %s193, 2
      %s195 = scalar_lea.vmem %s4, %s194
      %s196 = smul.u32 32, %s16
      %p197 = scmp.lt.s32.totalorder %s196, 63
      %s198 = scalar_select %p197, %s196, 63
      %s199 = smul.addr %s198, 8
      %s200 = scalar_lea.vmem %s0, %s199
      %s201 = smul.u32 32, %s16
      %s202 = smul.u32 32, %s16
      %p203 = scmp.lt.s32.totalorder %s202, 63
      %s204 = scalar_select %p203, %s202, 63
      %s205 = smul.addr %s204, 8
      %s206 = scalar_lea.vmem %s3, %s205
      %s207 = smul.u32 32, %s16
      %p208 = scmp.lt.s32.totalorder %s16, 1
      %s209 = scalar_select %p208, %s16, 1
      %s210 = smul.addr %s209, 2
      %s211 = scalar_lea.vmem %s4, %s210
      %v212 = vld [vmem:[%s200] sm:$0xff]
      %v213 = vld [vmem:[%s200 + $0x8] sm:$0xff]
      %v214 = vld [vmem:[%s200 + $0x10] sm:$0xff]
      %v215 = vld [vmem:[%s200 + $0x18] sm:$0xff]
      %v216 = vld [vmem:[%s200 + $0x20] sm:$0xff]
      %v217 = vld [vmem:[%s200 + $0x28] sm:$0xff]
      %v218 = vld [vmem:[%s200 + $0x30] sm:$0xff]
      %v219 = vld [vmem:[%s200 + $0x38] sm:$0xff]
      %v220 = vld [vmem:[%s200 + $0x40] sm:$0xff]
      %v221 = vld [vmem:[%s200 + $0x48] sm:$0xff]
      %v222 = vld [vmem:[%s200 + $0x50] sm:$0xff]
      %v223 = vld [vmem:[%s200 + $0x58] sm:$0xff]
      %v224 = vld [vmem:[%s200 + $0x60] sm:$0xff]
      %v225 = vld [vmem:[%s200 + $0x68] sm:$0xff]
      %v226 = vld [vmem:[%s200 + $0x70] sm:$0xff]
      %v227 = vld [vmem:[%s200 + $0x78] sm:$0xff]
      %v228 = vld [vmem:[%s200 + $0x80] sm:$0xff]
      %v229 = vld [vmem:[%s200 + $0x88] sm:$0xff]
      %v230 = vld [vmem:[%s200 + $0x90] sm:$0xff]
      %v231 = vld [vmem:[%s200 + $0x98] sm:$0xff]
      %v232 = vld [vmem:[%s200 + $0xa0] sm:$0xff]
      %v233 = vld [vmem:[%s200 + $0xa8] sm:$0xff]
      %v234 = vld [vmem:[%s200 + $0xb0] sm:$0xff]
      %v235 = vld [vmem:[%s200 + $0xb8] sm:$0xff]
      %v236 = vld [vmem:[%s200 + $0xc0] sm:$0xff]
      %v237 = vld [vmem:[%s200 + $0xc8] sm:$0xff]
      %v238 = vld [vmem:[%s200 + $0xd0] sm:$0xff]
      %v239 = vld [vmem:[%s200 + $0xd8] sm:$0xff]
      %v240 = vld [vmem:[%s200 + $0xe0] sm:$0xff]
      %v241 = vld [vmem:[%s200 + $0xe8] sm:$0xff]
      %v242 = vld [vmem:[%s200 + $0xf0] sm:$0xff]
      %v243 = vld [vmem:[%s200 + $0xf8] sm:$0xff]
      %v244 = vld [vmem:[%s1] sm:$0x1]
      %v245 = vperm.slane %v244, 0
      %v246 = vmul.f32 %v212, %v245
      %v247 = vmul.f32 %v213, %v245
      %v248 = vmul.f32 %v214, %v245
      %v249 = vmul.f32 %v215, %v245
      %v250 = vmul.f32 %v216, %v245
      %v251 = vmul.f32 %v217, %v245
      %v252 = vmul.f32 %v218, %v245
      %v253 = vmul.f32 %v219, %v245
      %v254 = vmul.f32 %v220, %v245
      %v255 = vmul.f32 %v221, %v245
      %v256 = vmul.f32 %v222, %v245
      %v257 = vmul.f32 %v223, %v245
      %v258 = vmul.f32 %v224, %v245
      %v259 = vmul.f32 %v225, %v245
      %v260 = vmul.f32 %v226, %v245
      %v261 = vmul.f32 %v227, %v245
      %v262 = vmul.f32 %v228, %v245
      %v263 = vmul.f32 %v229, %v245
      %v264 = vmul.f32 %v230, %v245
      %v265 = vmul.f32 %v231, %v245
      %v266 = vmul.f32 %v232, %v245
      %v267 = vmul.f32 %v233, %v245
      %v268 = vmul.f32 %v234, %v245
      %v269 = vmul.f32 %v235, %v245
      %v270 = vmul.f32 %v236, %v245
      %v271 = vmul.f32 %v237, %v245
      %v272 = vmul.f32 %v238, %v245
      %v273 = vmul.f32 %v239, %v245
      %v274 = vmul.f32 %v240, %v245
      %v275 = vmul.f32 %v241, %v245
      %v276 = vmul.f32 %v242, %v245
      %v277 = vmul.f32 %v243, %v245
      %v278 = vld [vmem:[%s1 + $0x1] sm:$0x1]
      %v279 = vperm.slane %v278, 0
      %v280 = vadd.f32 %v246, %v279
      %v281 = vadd.f32 %v247, %v279
      %v282 = vadd.f32 %v248, %v279
      %v283 = vadd.f32 %v249, %v279
      %v284 = vadd.f32 %v250, %v279
      %v285 = vadd.f32 %v251, %v279
      %v286 = vadd.f32 %v252, %v279
      %v287 = vadd.f32 %v253, %v279
      %v288 = vadd.f32 %v254, %v279
      %v289 = vadd.f32 %v255, %v279
      %v290 = vadd.f32 %v256, %v279
      %v291 = vadd.f32 %v257, %v279
      %v292 = vadd.f32 %v258, %v279
      %v293 = vadd.f32 %v259, %v279
      %v294 = vadd.f32 %v260, %v279
      %v295 = vadd.f32 %v261, %v279
      %v296 = vadd.f32 %v262, %v279
      %v297 = vadd.f32 %v263, %v279
      %v298 = vadd.f32 %v264, %v279
      %v299 = vadd.f32 %v265, %v279
      %v300 = vadd.f32 %v266, %v279
      %v301 = vadd.f32 %v267, %v279
      %v302 = vadd.f32 %v268, %v279
      %v303 = vadd.f32 %v269, %v279
      %v304 = vadd.f32 %v270, %v279
      %v305 = vadd.f32 %v271, %v279
      %v306 = vadd.f32 %v272, %v279
      %v307 = vadd.f32 %v273, %v279
      %v308 = vadd.f32 %v274, %v279
      %v309 = vadd.f32 %v275, %v279
      %v310 = vadd.f32 %v276, %v279
      %v311 = vadd.f32 %v277, %v279
      %v312 = vmax.f32 %v280, 0.0
      %v313 = vmax.f32 %v281, 0.0
      %v314 = vmax.f32 %v282, 0.0
      %v315 = vmax.f32 %v283, 0.0
      %v316 = vmax.f32 %v284, 0.0
      %v317 = vmax.f32 %v285, 0.0
      %v318 = vmax.f32 %v286, 0.0
      %v319 = vmax.f32 %v287, 0.0
      %v320 = vmax.f32 %v288, 0.0
      %v321 = vmax.f32 %v289, 0.0
      %v322 = vmax.f32 %v290, 0.0
      %v323 = vmax.f32 %v291, 0.0
      %v324 = vmax.f32 %v292, 0.0
      %v325 = vmax.f32 %v293, 0.0
      %v326 = vmax.f32 %v294, 0.0
      %v327 = vmax.f32 %v295, 0.0
      %v328 = vmax.f32 %v296, 0.0
      %v329 = vmax.f32 %v297, 0.0
      %v330 = vmax.f32 %v298, 0.0
      %v331 = vmax.f32 %v299, 0.0
      %v332 = vmax.f32 %v300, 0.0
      %v333 = vmax.f32 %v301, 0.0
      %v334 = vmax.f32 %v302, 0.0
      %v335 = vmax.f32 %v303, 0.0
      %v336 = vmax.f32 %v304, 0.0
      %v337 = vmax.f32 %v305, 0.0
      %v338 = vmax.f32 %v306, 0.0
      %v339 = vmax.f32 %v307, 0.0
      %v340 = vmax.f32 %v308, 0.0
      %v341 = vmax.f32 %v309, 0.0
      %v342 = vmax.f32 %v310, 0.0
      %v343 = vmax.f32 %v311, 0.0
      %v344 = vmin.f32 %v312, 6.0
      %v345 = vmin.f32 %v313, 6.0
      %v346 = vmin.f32 %v314, 6.0
      %v347 = vmin.f32 %v315, 6.0
      %v348 = vmin.f32 %v316, 6.0
      %v349 = vmin.f32 %v317, 6.0
      %v350 = vmin.f32 %v318, 6.0
      %v351 = vmin.f32 %v319, 6.0
      %v352 = vmin.f32 %v320, 6.0
      %v353 = vmin.f32 %v321, 6.0
      %v354 = vmin.f32 %v322, 6.0
      %v355 = vmin.f32 %v323, 6.0
      %v356 = vmin.f32 %v324, 6.0
      %v357 = vmin.f32 %v325, 6.0
      %v358 = vmin.f32 %v326, 6.0
      %v359 = vmin.f32 %v327, 6.0
      %v360 = vmin.f32 %v328, 6.0
      %v361 = vmin.f32 %v329, 6.0
      %v362 = vmin.f32 %v330, 6.0
      %v363 = vmin.f32 %v331, 6.0
      %v364 = vmin.f32 %v332, 6.0
      %v365 = vmin.f32 %v333, 6.0
      %v366 = vmin.f32 %v334, 6.0
      %v367 = vmin.f32 %v335, 6.0
      %v368 = vmin.f32 %v336, 6.0
      %v369 = vmin.f32 %v337, 6.0
      %v370 = vmin.f32 %v338, 6.0
      %v371 = vmin.f32 %v339, 6.0
      %v372 = vmin.f32 %v340, 6.0
      %v373 = vmin.f32 %v341, 6.0
      %v374 = vmin.f32 %v342, 6.0
      %v375 = vmin.f32 %v343, 6.0
      %v376 = vld [vmem:[%s2] sm:$0xff]
      %v377 = vld [vmem:[%s2 + $0x8] sm:$0xff]
      %v378 = vld [vmem:[%s2 + $0x10] sm:$0xff]
      %vm379 = vcmask 195584
      %v381 = vsel %vm379, %v344, 0
      %v384 = vsel %vm379, %v345, 0
      %v387 = vsel %vm379, %v346, 0
      %v390 = vsel %vm379, %v347, 0
      %v393 = vsel %vm379, %v348, 0
      %v396 = vsel %vm379, %v349, 0
      %v399 = vsel %vm379, %v350, 0
      %v402 = vsel %vm379, %v351, 0
      %v405 = vsel %vm379, %v352, 0
      %v408 = vsel %vm379, %v353, 0
      %v411 = vsel %vm379, %v354, 0
      %v414 = vsel %vm379, %v355, 0
      %v417 = vsel %vm379, %v356, 0
      %v420 = vsel %vm379, %v357, 0
      %v423 = vsel %vm379, %v358, 0
      %v426 = vsel %vm379, %v359, 0
      %v429 = vsel %vm379, %v360, 0
      %v432 = vsel %vm379, %v361, 0
      %v435 = vsel %vm379, %v362, 0
      %v438 = vsel %vm379, %v363, 0
      %v441 = vsel %vm379, %v364, 0
      %v444 = vsel %vm379, %v365, 0
      %v447 = vsel %vm379, %v366, 0
      %v450 = vsel %vm379, %v367, 0
      %v453 = vsel %vm379, %v368, 0
      %v456 = vsel %vm379, %v369, 0
      %v459 = vsel %vm379, %v370, 0
      %v462 = vsel %vm379, %v371, 0
      %v465 = vsel %vm379, %v372, 0
      %v468 = vsel %vm379, %v373, 0
      %v471 = vsel %vm379, %v374, 0
      %v474 = vsel %vm379, %v375, 0
      %476 = vmatpush.msra.mxu0 0.0
      %477 = vmatpush.msra.mxu0 0.0
      %478 = vmatpush.msra.mxu0 0.0
      %479 = vmatpush.msra.mxu0 0.0
      %480 = vmatpush.msra.mxu0 0.0
      %481 = vmatpush.msra.mxu0 0.0
      %482 = vmatpush.msra.mxu0 0.0
      %483 = vmatpush.msra.mxu0 0.0
      %484 = vmatpush.msra.mxu0 0.0
      %485 = vmatpush.msra.mxu0 0.0
      %486 = vmatpush.msra.mxu0 0.0
      %487 = vmatpush.msra.mxu0 0.0
      %488 = vmatpush.msra.mxu0 0.0
      %489 = vmatpush.msra.mxu0 %v378
      %490 = vmatpush.msra.mxu0 %v377
      %491 = vmatpush.msra.mxu0 %v376
      %492 = vmatmul.f32.gmra.mxu0 %v381
      %v493 = vpop.f32.mrf.mxu0
      %v494 = vadd.f32 0.0, %v493
      %495 = vmatmul.f32.gmra.mxu0 %v384
      %v496 = vpop.f32.mrf.mxu0
      %v497 = vadd.f32 0.0, %v496
      %498 = vmatmul.f32.gmra.mxu0 %v387
      %v499 = vpop.f32.mrf.mxu0
      %v500 = vadd.f32 0.0, %v499
      %501 = vmatmul.f32.gmra.mxu0 %v390
      %v502 = vpop.f32.mrf.mxu0
      %v503 = vadd.f32 0.0, %v502
      %504 = vmatmul.f32.gmra.mxu0 %v393
      %v505 = vpop.f32.mrf.mxu0
      %v506 = vadd.f32 0.0, %v505
      %507 = vmatmul.f32.gmra.mxu0 %v396
      %v508 = vpop.f32.mrf.mxu0
      %v509 = vadd.f32 0.0, %v508
      %510 = vmatmul.f32.gmra.mxu0 %v399
      %v511 = vpop.f32.mrf.mxu0
      %v512 = vadd.f32 0.0, %v511
      %513 = vmatmul.f32.gmra.mxu0 %v402
      %v514 = vpop.f32.mrf.mxu0
      %v515 = vadd.f32 0.0, %v514
      %516 = vmatmul.f32.gmra.mxu0 %v405
      %v517 = vpop.f32.mrf.mxu0
      %v518 = vadd.f32 0.0, %v517
      %519 = vmatmul.f32.gmra.mxu0 %v408
      %v520 = vpop.f32.mrf.mxu0
      %v521 = vadd.f32 0.0, %v520
      %522 = vmatmul.f32.gmra.mxu0 %v411
      %v523 = vpop.f32.mrf.mxu0
      %v524 = vadd.f32 0.0, %v523
      %525 = vmatmul.f32.gmra.mxu0 %v414
      %v526 = vpop.f32.mrf.mxu0
      %v527 = vadd.f32 0.0, %v526
      %528 = vmatmul.f32.gmra.mxu0 %v417
      %v529 = vpop.f32.mrf.mxu0
      %v530 = vadd.f32 0.0, %v529
      %531 = vmatmul.f32.gmra.mxu0 %v420
      %v532 = vpop.f32.mrf.mxu0
      %v533 = vadd.f32 0.0, %v532
      %534 = vmatmul.f32.gmra.mxu0 %v423
      %v535 = vpop.f32.mrf.mxu0
      %v536 = vadd.f32 0.0, %v535
      %537 = vmatmul.f32.gmra.mxu0 %v426
      %v538 = vpop.f32.mrf.mxu0
      %v539 = vadd.f32 0.0, %v538
      %540 = vmatmul.f32.gmra.mxu0 %v429
      %v541 = vpop.f32.mrf.mxu0
      %v542 = vadd.f32 0.0, %v541
      %543 = vmatmul.f32.gmra.mxu0 %v432
      %v544 = vpop.f32.mrf.mxu0
      %v545 = vadd.f32 0.0, %v544
      %546 = vmatmul.f32.gmra.mxu0 %v435
      %v547 = vpop.f32.mrf.mxu0
      %v548 = vadd.f32 0.0, %v547
      %549 = vmatmul.f32.gmra.mxu0 %v438
      %v550 = vpop.f32.mrf.mxu0
      %v551 = vadd.f32 0.0, %v550
      %552 = vmatmul.f32.gmra.mxu0 %v441
      %v553 = vpop.f32.mrf.mxu0
      %v554 = vadd.f32 0.0, %v553
      %555 = vmatmul.f32.gmra.mxu0 %v444
      %v556 = vpop.f32.mrf.mxu0
      %v557 = vadd.f32 0.0, %v556
      %558 = vmatmul.f32.gmra.mxu0 %v447
      %v559 = vpop.f32.mrf.mxu0
      %v560 = vadd.f32 0.0, %v559
      %561 = vmatmul.f32.gmra.mxu0 %v450
      %v562 = vpop.f32.mrf.mxu0
      %v563 = vadd.f32 0.0, %v562
      %564 = vmatmul.f32.gmra.mxu0 %v453
      %v565 = vpop.f32.mrf.mxu0
      %v566 = vadd.f32 0.0, %v565
      %567 = vmatmul.f32.gmra.mxu0 %v456
      %v568 = vpop.f32.mrf.mxu0
      %v569 = vadd.f32 0.0, %v568
      %570 = vmatmul.f32.gmra.mxu0 %v459
      %v571 = vpop.f32.mrf.mxu0
      %v572 = vadd.f32 0.0, %v571
      %573 = vmatmul.f32.gmra.mxu0 %v462
      %v574 = vpop.f32.mrf.mxu0
      %v575 = vadd.f32 0.0, %v574
      %576 = vmatmul.f32.gmra.mxu0 %v465
      %v577 = vpop.f32.mrf.mxu0
      %v578 = vadd.f32 0.0, %v577
      %579 = vmatmul.f32.gmra.mxu0 %v468
      %v580 = vpop.f32.mrf.mxu0
      %v581 = vadd.f32 0.0, %v580
      %582 = vmatmul.f32.gmra.mxu0 %v471
      %v583 = vpop.f32.mrf.mxu0
      %v584 = vadd.f32 0.0, %v583
      %585 = vmatmul.f32.gmra.mxu0 %v474
      %v586 = vpop.f32.mrf.mxu0
      %v587 = vadd.f32 0.0, %v586
      %588 = vdwg.mxu0
      %vm589 = vcmask 31744
      %590 = vst.msk [vmem:[%s206] sm:$0xff] %vm589, %v494
      %591 = vst.msk [vmem:[%s206 + $0x8] sm:$0xff] %vm589, %v497
      %592 = vst.msk [vmem:[%s206 + $0x10] sm:$0xff] %vm589, %v500
      %593 = vst.msk [vmem:[%s206 + $0x18] sm:$0xff] %vm589, %v503
      %594 = vst.msk [vmem:[%s206 + $0x20] sm:$0xff] %vm589, %v506
      %595 = vst.msk [vmem:[%s206 + $0x28] sm:$0xff] %vm589, %v509
      %596 = vst.msk [vmem:[%s206 + $0x30] sm:$0xff] %vm589, %v512
      %597 = vst.msk [vmem:[%s206 + $0x38] sm:$0xff] %vm589, %v515
      %598 = vst.msk [vmem:[%s206 + $0x40] sm:$0xff] %vm589, %v518
      %599 = vst.msk [vmem:[%s206 + $0x48] sm:$0xff] %vm589, %v521
      %600 = vst.msk [vmem:[%s206 + $0x50] sm:$0xff] %vm589, %v524
      %601 = vst.msk [vmem:[%s206 + $0x58] sm:$0xff] %vm589, %v527
      %602 = vst.msk [vmem:[%s206 + $0x60] sm:$0xff] %vm589, %v530
      %603 = vst.msk [vmem:[%s206 + $0x68] sm:$0xff] %vm589, %v533
      %604 = vst.msk [vmem:[%s206 + $0x70] sm:$0xff] %vm589, %v536
      %605 = vst.msk [vmem:[%s206 + $0x78] sm:$0xff] %vm589, %v539
      %606 = vst.msk [vmem:[%s206 + $0x80] sm:$0xff] %vm589, %v542
      %607 = vst.msk [vmem:[%s206 + $0x88] sm:$0xff] %vm589, %v545
      %608 = vst.msk [vmem:[%s206 + $0x90] sm:$0xff] %vm589, %v548
      %609 = vst.msk [vmem:[%s206 + $0x98] sm:$0xff] %vm589, %v551
      %610 = vst.msk [vmem:[%s206 + $0xa0] sm:$0xff] %vm589, %v554
      %611 = vst.msk [vmem:[%s206 + $0xa8] sm:$0xff] %vm589, %v557
      %612 = vst.msk [vmem:[%s206 + $0xb0] sm:$0xff] %vm589, %v560
      %613 = vst.msk [vmem:[%s206 + $0xb8] sm:$0xff] %vm589, %v563
      %614 = vst.msk [vmem:[%s206 + $0xc0] sm:$0xff] %vm589, %v566
      %615 = vst.msk [vmem:[%s206 + $0xc8] sm:$0xff] %vm589, %v569
      %616 = vst.msk [vmem:[%s206 + $0xd0] sm:$0xff] %vm589, %v572
      %617 = vst.msk [vmem:[%s206 + $0xd8] sm:$0xff] %vm589, %v575
      %618 = vst.msk [vmem:[%s206 + $0xe0] sm:$0xff] %vm589, %v578
      %619 = vst.msk [vmem:[%s206 + $0xe8] sm:$0xff] %vm589, %v581
      %620 = vst.msk [vmem:[%s206 + $0xf0] sm:$0xff] %vm589, %v584
      %621 = vst.msk [vmem:[%s206 + $0xf8] sm:$0xff] %vm589, %v587
      %v622 = vsel %vm589, %v494, 0.0
      %v623 = vsel %vm589, %v497, 0.0
      %v624 = vadd.f32 %v622, %v623
      %v625 = vsel %vm589, %v500, 0.0
      %v626 = vadd.f32 %v624, %v625
      %v627 = vsel %vm589, %v503, 0.0
      %v628 = vadd.f32 %v626, %v627
      %v629 = vsel %vm589, %v506, 0.0
      %v630 = vadd.f32 %v628, %v629
      %v631 = vsel %vm589, %v509, 0.0
      %v632 = vadd.f32 %v630, %v631
      %v633 = vsel %vm589, %v512, 0.0
      %v634 = vadd.f32 %v632, %v633
      %v635 = vsel %vm589, %v515, 0.0
      %v636 = vadd.f32 %v634, %v635
      %v637 = vsel %vm589, %v518, 0.0
      %v638 = vadd.f32 %v636, %v637
      %v639 = vsel %vm589, %v521, 0.0
      %v640 = vadd.f32 %v638, %v639
      %v641 = vsel %vm589, %v524, 0.0
      %v642 = vadd.f32 %v640, %v641
      %v643 = vsel %vm589, %v527, 0.0
      %v644 = vadd.f32 %v642, %v643
      %v645 = vsel %vm589, %v530, 0.0
      %v646 = vadd.f32 %v644, %v645
      %v647 = vsel %vm589, %v533, 0.0
      %v648 = vadd.f32 %v646, %v647
      %v649 = vsel %vm589, %v536, 0.0
      %v650 = vadd.f32 %v648, %v649
      %v651 = vsel %vm589, %v539, 0.0
      %v652 = vadd.f32 %v650, %v651
      %v653 = vsel %vm589, %v542, 0.0
      %v654 = vadd.f32 %v652, %v653
      %v655 = vsel %vm589, %v545, 0.0
      %v656 = vadd.f32 %v654, %v655
      %v657 = vsel %vm589, %v548, 0.0
      %v658 = vadd.f32 %v656, %v657
      %v659 = vsel %vm589, %v551, 0.0
      %v660 = vadd.f32 %v658, %v659
      %v661 = vsel %vm589, %v554, 0.0
      %v662 = vadd.f32 %v660, %v661
      %v663 = vsel %vm589, %v557, 0.0
      %v664 = vadd.f32 %v662, %v663
      %v665 = vsel %vm589, %v560, 0.0
      %v666 = vadd.f32 %v664, %v665
      %v667 = vsel %vm589, %v563, 0.0
      %v668 = vadd.f32 %v666, %v667
      %v669 = vsel %vm589, %v566, 0.0
      %v670 = vadd.f32 %v668, %v669
      %v671 = vsel %vm589, %v569, 0.0
      %v672 = vadd.f32 %v670, %v671
      %v673 = vsel %vm589, %v572, 0.0
      %v674 = vadd.f32 %v672, %v673
      %v675 = vsel %vm589, %v575, 0.0
      %v676 = vadd.f32 %v674, %v675
      %v677 = vsel %vm589, %v578, 0.0
      %v678 = vadd.f32 %v676, %v677
      %v679 = vsel %vm589, %v581, 0.0
      %v680 = vadd.f32 %v678, %v679
      %v681 = vsel %vm589, %v584, 0.0
      %v682 = vadd.f32 %v680, %v681
      %v683 = vsel %vm589, %v587, 0.0
      %v684 = vadd.f32 %v682, %v683
      %v685 = vrot.slane %v684, 4
      %v686 = vadd.f32 %v684, %v685
      %v687 = vrot.slane %v686, 2
      %v688 = vadd.f32 %v686, %v687
      %v689 = vrot.slane %v688, 1
      %v690 = vadd.f32 %v688, %v689
      %vm691 = vcmask 24576
      %692 = vst.msk [vmem:[%s211] sm:$0x1] %vm691, %v690
      %v693 = vmul.f32 %v494, %v494
      %v694 = vmul.f32 %v497, %v497
      %v695 = vmul.f32 %v500, %v500
      %v696 = vmul.f32 %v503, %v503
      %v697 = vmul.f32 %v506, %v506
      %v698 = vmul.f32 %v509, %v509
      %v699 = vmul.f32 %v512, %v512
      %v700 = vmul.f32 %v515, %v515
      %v701 = vmul.f32 %v518, %v518
      %v702 = vmul.f32 %v521, %v521
      %v703 = vmul.f32 %v524, %v524
      %v704 = vmul.f32 %v527, %v527
      %v705 = vmul.f32 %v530, %v530
      %v706 = vmul.f32 %v533, %v533
      %v707 = vmul.f32 %v536, %v536
      %v708 = vmul.f32 %v539, %v539
      %v709 = vmul.f32 %v542, %v542
      %v710 = vmul.f32 %v545, %v545
      %v711 = vmul.f32 %v548, %v548
      %v712 = vmul.f32 %v551, %v551
      %v713 = vmul.f32 %v554, %v554
      %v714 = vmul.f32 %v557, %v557
      %v715 = vmul.f32 %v560, %v560
      %v716 = vmul.f32 %v563, %v563
      %v717 = vmul.f32 %v566, %v566
      %v718 = vmul.f32 %v569, %v569
      %v719 = vmul.f32 %v572, %v572
      %v720 = vmul.f32 %v575, %v575
      %v721 = vmul.f32 %v578, %v578
      %v722 = vmul.f32 %v581, %v581
      %v723 = vmul.f32 %v584, %v584
      %v724 = vmul.f32 %v587, %v587
      %v725 = vsel %vm589, %v693, 0.0
      %v726 = vsel %vm589, %v694, 0.0
      %v727 = vadd.f32 %v725, %v726
      %v728 = vsel %vm589, %v695, 0.0
      %v729 = vadd.f32 %v727, %v728
      %v730 = vsel %vm589, %v696, 0.0
      %v731 = vadd.f32 %v729, %v730
      %v732 = vsel %vm589, %v697, 0.0
      %v733 = vadd.f32 %v731, %v732
      %v734 = vsel %vm589, %v698, 0.0
      %v735 = vadd.f32 %v733, %v734
      %v736 = vsel %vm589, %v699, 0.0
      %v737 = vadd.f32 %v735, %v736
      %v738 = vsel %vm589, %v700, 0.0
      %v739 = vadd.f32 %v737, %v738
      %v740 = vsel %vm589, %v701, 0.0
      %v741 = vadd.f32 %v739, %v740
      %v742 = vsel %vm589, %v702, 0.0
      %v743 = vadd.f32 %v741, %v742
      %v744 = vsel %vm589, %v703, 0.0
      %v745 = vadd.f32 %v743, %v744
      %v746 = vsel %vm589, %v704, 0.0
      %v747 = vadd.f32 %v745, %v746
      %v748 = vsel %vm589, %v705, 0.0
      %v749 = vadd.f32 %v747, %v748
      %v750 = vsel %vm589, %v706, 0.0
      %v751 = vadd.f32 %v749, %v750
      %v752 = vsel %vm589, %v707, 0.0
      %v753 = vadd.f32 %v751, %v752
      %v754 = vsel %vm589, %v708, 0.0
      %v755 = vadd.f32 %v753, %v754
      %v756 = vsel %vm589, %v709, 0.0
      %v757 = vadd.f32 %v755, %v756
      %v758 = vsel %vm589, %v710, 0.0
      %v759 = vadd.f32 %v757, %v758
      %v760 = vsel %vm589, %v711, 0.0
      %v761 = vadd.f32 %v759, %v760
      %v762 = vsel %vm589, %v712, 0.0
      %v763 = vadd.f32 %v761, %v762
      %v764 = vsel %vm589, %v713, 0.0
      %v765 = vadd.f32 %v763, %v764
      %v766 = vsel %vm589, %v714, 0.0
      %v767 = vadd.f32 %v765, %v766
      %v768 = vsel %vm589, %v715, 0.0
      %v769 = vadd.f32 %v767, %v768
      %v770 = vsel %vm589, %v716, 0.0
      %v771 = vadd.f32 %v769, %v770
      %v772 = vsel %vm589, %v717, 0.0
      %v773 = vadd.f32 %v771, %v772
      %v774 = vsel %vm589, %v718, 0.0
      %v775 = vadd.f32 %v773, %v774
      %v776 = vsel %vm589, %v719, 0.0
      %v777 = vadd.f32 %v775, %v776
      %v778 = vsel %vm589, %v720, 0.0
      %v779 = vadd.f32 %v777, %v778
      %v780 = vsel %vm589, %v721, 0.0
      %v781 = vadd.f32 %v779, %v780
      %v782 = vsel %vm589, %v722, 0.0
      %v783 = vadd.f32 %v781, %v782
      %v784 = vsel %vm589, %v723, 0.0
      %v785 = vadd.f32 %v783, %v784
      %v786 = vsel %vm589, %v724, 0.0
      %v787 = vadd.f32 %v785, %v786
      %v788 = vrot.slane %v787, 4
      %v789 = vadd.f32 %v787, %v788
      %v790 = vrot.slane %v789, 2
      %v791 = vadd.f32 %v789, %v790
      %v792 = vrot.slane %v791, 1
      %v793 = vadd.f32 %v791, %v792
      %794 = vst.msk [vmem:[%s211 + $0x1] sm:$0x1] %vm691, %v793
      %s795 = smul.u32 32, %s16
      %p796 = scmp.lt.s32.totalorder %s795, 63
      %s797 = scalar_select %p796, %s795, 63
      %s798 = smul.addr %s797, 8
      %s799 = scalar_lea.vmem %s3, %s798
      %p800 = scmp.lt.s32.totalorder %s16, 1
      %s801 = scalar_select %p800, %s16, 1
      %s802 = smul.addr %s801, 2
      %s803 = scalar_lea.vmem %s4, %s802
      // Predicated region
      $region33: #{linear_bottleneck_forward.6} parent=31 // pred_check
        %p804 = pneg %p102
      $region34: #{linear_bottleneck_forward.6} parent=31 // pred_check_branch
        %806 = sbr.rel (%p804) target = $region36
      $region35: #{linear_bottleneck_forward.6} parent=31 // pred_region
        %s807 = smul.u32 32, %s16
      $region36: #{linear_bottleneck_forward.6} parent=31 // pred_fallthru
        _
      // Predicated region
      $region37: #{linear_bottleneck_forward.6} parent=31 // pred_check
        %p808 = pneg %p128
      $region38: #{linear_bottleneck_forward.6} parent=31 // pred_check_branch
        %810 = sbr.rel (%p808) target = $region40
      $region39: #{linear_bottleneck_forward.6} parent=31 // pred_region
        _
      $region40: #{linear_bottleneck_forward.6} parent=31 // pred_fallthru
        _
    $region32: #{linear_bottleneck_forward.6} parent=5 // pred_fallthru
      _
    %p811 = scmp.le.s32.totalorder 2, %s11
    // Predicated region
    $region41: #{linear_bottleneck_forward.6} parent=5 // pred_check
      %p812 = pneg %p811
    $region42: #{linear_bottleneck_forward.6} parent=5 // pred_check_branch
      %814 = sbr.rel (%p812) target = $region44
    $region43: #{linear_bottleneck_forward.6} parent=5 // pred_region
      %s815 = ssub.s32 %s11, 2
      // Predicated region
      $region45: #{linear_bottleneck_forward.6} parent=43 // pred_check
        %p816 = pneg %p108
      $region46: #{linear_bottleneck_forward.6} parent=43 // pred_check_branch
        %818 = sbr.rel (%p816) target = $region48
      $region47: #{linear_bottleneck_forward.6} parent=43 // pred_region
        %s819 = smul.u32 32, %s17
        %p820 = scmp.lt.s32.totalorder %s819, 63
        %s821 = scalar_select %p820, %s819, 63
        %s822 = smul.addr %s821, 8
        %s823 = scalar_lea.vmem %s3, %s822
      $region48: #{linear_bottleneck_forward.6} parent=43 // pred_fallthru
        _
      // Predicated region
      $region49: #{linear_bottleneck_forward.6} parent=43 // pred_check
        %p824 = pneg %p134
      $region50: #{linear_bottleneck_forward.6} parent=43 // pred_check_branch
        %826 = sbr.rel (%p824) target = $region52
      $region51: #{linear_bottleneck_forward.6} parent=43 // pred_region
        %p827 = scmp.lt.s32.totalorder %s17, 1
        %s828 = scalar_select %p827, %s17, 1
        %s829 = smul.addr %s828, 2
        %s830 = scalar_lea.vmem %s4, %s829
      $region52: #{linear_bottleneck_forward.6} parent=43 // pred_fallthru
        _
    $region44: #{linear_bottleneck_forward.6} parent=5 // pred_fallthru
      _
  $region6: #{linear_bottleneck_forward.6} parent=0 // loop_footer
    %s15 = sadd.s32 1, %s11
  $region7: #{linear_bottleneck_forward.6} parent=0 // loop_footer_branch
    %10 = sbr.rel target = $region3
  $region8: #{linear_bottleneck_forward.6} parent=0 // loop_exit
    _

// kernel: linear_bottleneck_forward.7
$region0: #{linear_bottleneck_forward.7}
  #allocation0 [shape = 'u32[]', space=smem, size = 0x4, offset = 0x4, fixed_abs, tag = 'smem constant byte address 0x4 - core index']
  #allocation1 [shape = 'u32[72,128]{1,0:T(1,128)}', space=vmem, size = 0x9000, scoped, tag = 'internal scratch']
  %s0 = inlined_call_operand.vmem [shape: f32[512,4], index: 0, kind: input, shape index: {}, may-alias: {0,3}]
  %s1 = inlined_call_operand.vmem [shape: f32[2,4], index: 1, kind: input, shape index: {}]
  %s2 = inlined_call_operand.vmem [shape: f32[512,4], index: 2, kind: input, shape index: {}]
  %s3 = inlined_call_operand.vmem [shape: f32[512,4], index: 3, kind: output, shape index: {}, may-alias: {0,3}]
  %s4 = sld [smem:[#allocation0]]
  $region45: #{linear_bottleneck_forward.7} parent=0
    _
  %s6 = ssub.s32 1, %s4
  %s7 = scalar_select 0, %s6, %s4
  loop: start=0, step=1, limit=4
  $region2: #{linear_bottleneck_forward.7} parent=0 // loop_pre_header
    _
  $region3: #{linear_bottleneck_forward.7} parent=0 // loop_header
    %s9 = sphi 0, %s13
    %p10 = scmp.ge.s32.totalorder %s9, 4
    %s19 = sphi 0, %s21
    %s22 = sphi 0, %s19
    %s23 = sphi 0, %s22
    %s39 = sphi 0, %s23
    %s43 = sphi 0, %s43
    %s45 = sphi 0, %s43
    %s46 = sphi 0, %s45
    %s60 = sphi 0, %s46
    %s66 = sphi 0, %s68
    %s69 = sphi 0, %s66
    %s70 = sphi 0, %s69
    %s86 = sphi 0, %s70
    %s92 = sphi 0, %s94
    %s95 = sphi 0, %s92
    %s96 = sphi 0, %s95
    %s112 = sphi 0, %s96
  $region4: #{linear_bottleneck_forward.7} parent=0 // loop_header_branch
    %12 = sbr.rel (%p10) target = $region8
  $region5: #{linear_bottleneck_forward.7} parent=0 // loop_body
    %s14 = ssub.s32 %s9, 1
    %s15 = ssub.s32 %s9, 2
    %s16 = sadd.s32 %s9, 1
    %s17 = ssub.s32 %s9, %s16
    %p18 = scmp.eq.s32.totalorder %s17, 0
    %s20 = sadd.s32 %s19, 1
    %s21 = scalar_select %p18, %s19, %s20
    %p24 = pneg %p18
    %p25 = scmp.eq.s32.totalorder %s9, 1
    %p26 = por %p24, %p25
    %p27 = scmp.ne.s32.totalorder %s19, %s22
    %p28 = scmp.eq.s32.totalorder %s9, 0
    %p29 = por %p27, %p28
    %p30 = scmp.ne.s32.totalorder %s19, %s22
    %p31 = scmp.eq.s32.totalorder %s14, 1
    %p32 = por %p30, %p31
    %p33 = scmp.ne.s32.totalorder %s22, %s23
    %p34 = scmp.eq.s32.totalorder %s14, 0
    %p35 = por %p33, %p34
    %p36 = scmp.ne.s32.totalorder %s22, %s23
    %p37 = scmp.eq.s32.totalorder %s15, 1
    %p38 = por %p36, %p37
    %p40 = scmp.ne.s32.totalorder %s23, %s39
    %p41 = scmp.eq.s32.totalorder %s15, 0
    %p42 = por %p40, %p41
    %s44 = sadd.s32 %s43, 1
    %p47 = scmp.eq.s32.totalorder %s9, 1
    %p48 = scmp.ne.s32.totalorder %s43, %s45
    %p49 = scmp.eq.s32.totalorder %s9, 0
    %p50 = por %p48, %p49
    %p51 = scmp.ne.s32.totalorder %s43, %s45
    %p52 = scmp.eq.s32.totalorder %s14, 1
    %p53 = por %p51, %p52
    %p54 = scmp.ne.s32.totalorder %s45, %s46
    %p55 = scmp.eq.s32.totalorder %s14, 0
    %p56 = por %p54, %p55
    %p57 = scmp.ne.s32.totalorder %s45, %s46
    %p58 = scmp.eq.s32.totalorder %s15, 1
    %p59 = por %p57, %p58
    %p61 = scmp.ne.s32.totalorder %s46, %s60
    %p62 = scmp.eq.s32.totalorder %s15, 0
    %p63 = por %p61, %p62
    %s64 = ssub.s32 %s9, %s16
    %p65 = scmp.eq.s32.totalorder %s64, 0
    %s67 = sadd.s32 %s66, 1
    %s68 = scalar_select %p65, %s66, %s67
    %p71 = pneg %p65
    %p72 = scmp.eq.s32.totalorder %s9, 1
    %p73 = por %p71, %p72
    %p74 = scmp.ne.s32.totalorder %s66, %s69
    %p75 = scmp.eq.s32.totalorder %s9, 0
    %p76 = por %p74, %p75
    %p77 = scmp.ne.s32.totalorder %s66, %s69
    %p78 = scmp.eq.s32.totalorder %s14, 1
    %p79 = por %p77, %p78
    %p80 = scmp.ne.s32.totalorder %s69, %s70
    %p81 = scmp.eq.s32.totalorder %s14, 0
    %p82 = por %p80, %p81
    %p83 = scmp.ne.s32.totalorder %s69, %s70
    %p84 = scmp.eq.s32.totalorder %s15, 1
    %p85 = por %p83, %p84
    %p87 = scmp.ne.s32.totalorder %s70, %s86
    %p88 = scmp.eq.s32.totalorder %s15, 0
    %p89 = por %p87, %p88
    %s90 = ssub.s32 %s9, %s16
    %p91 = scmp.eq.s32.totalorder %s90, 0
    %s93 = sadd.s32 %s92, 1
    %s94 = scalar_select %p91, %s92, %s93
    %p97 = pneg %p91
    %p98 = scmp.eq.s32.totalorder %s9, 1
    %p99 = por %p97, %p98
    %p100 = scmp.ne.s32.totalorder %s92, %s95
    %p101 = scmp.eq.s32.totalorder %s9, 0
    %p102 = por %p100, %p101
    %p103 = scmp.ne.s32.totalorder %s92, %s95
    %p104 = scmp.eq.s32.totalorder %s14, 1
    %p105 = por %p103, %p104
    %p106 = scmp.ne.s32.totalorder %s95, %s96
    %p107 = scmp.eq.s32.totalorder %s14, 0
    %p108 = por %p106, %p107
    %p109 = scmp.ne.s32.totalorder %s95, %s96
    %p110 = scmp.eq.s32.totalorder %s15, 1
    %p111 = por %p109, %p110
    %p113 = scmp.ne.s32.totalorder %s96, %s112
    %p114 = scmp.eq.s32.totalorder %s15, 0
    %p115 = por %p113, %p114
    %p116 = scmp.le.s32.totalorder 1, %s9
    %p117 = scmp.lt.s32.totalorder %s9, 3
    %p118 = pnand %p116, %p117
    %p119 = pneg %p118
    // Predicated region
    $region9: #{linear_bottleneck_forward.7} parent=5 // pred_check
      _
    $region10: #{linear_bottleneck_forward.7} parent=5 // pred_check_branch
      %121 = sbr.rel (%p118) target = $region12
    $region11: #{linear_bottleneck_forward.7} parent=5 // pred_region
      %s122 = ssub.s32 %s9, 1
      // Predicated region
      $region13: #{linear_bottleneck_forward.7} parent=11 // pred_check
        %p123 = pneg %p56
      $region14: #{linear_bottleneck_forward.7} parent=11 // pred_check_branch
        %125 = sbr.rel (%p123) target = $region16
      $region15: #{linear_bottleneck_forward.7} parent=11 // pred_region
        _
      $region16: #{linear_bottleneck_forward.7} parent=11 // pred_fallthru
        _
    $region12: #{linear_bottleneck_forward.7} parent=5 // pred_fallthru
      _
    %p126 = scmp.lt.s32.totalorder %s9, 2
    // Predicated region
    $region17: #{linear_bottleneck_forward.7} parent=5 // pred_check
      %p127 = pneg %p126
    $region18: #{linear_bottleneck_forward.7} parent=5 // pred_check_branch
      %129 = sbr.rel (%p127) target = $region20
    $region19: #{linear_bottleneck_forward.7} parent=5 // pred_region
      // Predicated region
      $region21: #{linear_bottleneck_forward.7} parent=19 // pred_check
        %p130 = pneg %p29
      $region22: #{linear_bottleneck_forward.7} parent=19 // pred_check_branch
        %132 = sbr.rel (%p130) target = $region24
      $region23: #{linear_bottleneck_forward.7} parent=19 // pred_region
        %s133 = smul.u32 32, %s9
        %p134 = scmp.lt.s32.totalorder %s133, 63
        %s135 = scalar_select %p134, %s133, 63
        %s136 = smul.addr %s135, 8
        %s137 = scalar_lea.vmem %s0, %s136
        %s138 = smul.u32 32, %s9
      $region24: #{linear_bottleneck_forward.7} parent=19 // pred_fallthru
        _
      // Predicated region
      $region25: #{linear_bottleneck_forward.7} parent=19 // pred_check
        %p139 = pneg %p76
      $region26: #{linear_bottleneck_forward.7} parent=19 // pred_check_branch
        %141 = sbr.rel (%p139) target = $region28
      $region27: #{linear_bottleneck_forward.7} parent=19 // pred_region
        %s142 = smul.u32 32, %s9
        %p143 = scmp.lt.s32.totalorder %s142, 63
        %s144 = scalar_select %p143, %s142, 63
        %s145 = smul.addr %s144, 8
        %s146 = scalar_lea.vmem %s2, %s145
        %s147 = smul.u32 32, %s9
      $region28: #{linear_bottleneck_forward.7} parent=19 // pred_fallthru
        _
    $region20: #{linear_bottleneck_forward.7} parent=5 // pred_fallthru
      _
    %p148 = scmp.le.s32.totalorder 1, %s9
    %p149 = scmp.lt.s32.totalorder %s9, 3
    %p150 = pnand %p148, %p149
    %p151 = pneg %p150
    // Predicated region
    $region29: #{linear_bottleneck_forward.7} parent=5 // pred_check
      _
    $region30: #{linear_bottleneck_forward.7} parent=5 // pred_check_branch
      %153 = sbr.rel (%p150) target = $region32
    $region31: #{linear_bottleneck_forward.7} parent=5 // pred_region
      %s154 = ssub.s32 %s9, 1
      %s155 = smul.u32 32, %s14
      %p156 = scmp.lt.s32.totalorder %s155, 63
      %s157 = scalar_select %p156, %s155, 63
      %s158 = smul.addr %s157, 8
      %s159 = scalar_lea.vmem %s0, %s158
      %p160 = pneg %p35
      %p161 = pneg %p32
      %p162 = pneg %p56
      %p163 = pneg %p53
      %s164 = smul.u32 32, %s14
      %p165 = scmp.lt.s32.totalorder %s164, 63
      %s166 = scalar_select %p165, %s164, 63
      %s167 = smul.addr %s166, 8
      %s168 = scalar_lea.vmem %s2, %s167
      %p169 = pneg %p82
      %p170 = pneg %p79
      %p171 = pneg %p108
      %p172 = pneg %p105
      %s173 = smul.u32 32, %s14
      %p174 = scmp.lt.s32.totalorder %s173, 63
      %s175 = scalar_select %p174, %s173, 63
      %s176 = smul.addr %s175, 8
      %s177 = scalar_lea.vmem %s3, %s176
      %s178 = smul.u32 32, %s14
      %p179 = scmp.lt.s32.totalorder %s178, 63
      %s180 = scalar_select %p179, %s178, 63
      %s181 = smul.addr %s180, 8
      %s182 = scalar_lea.vmem %s0, %s181
      %s183 = smul.u32 32, %s14
      %s184 = smul.u32 32, %s14
      %p185 = scmp.lt.s32.totalorder %s184, 63
      %s186 = scalar_select %p185, %s184, 63
      %s187 = smul.addr %s186, 8
      %s188 = scalar_lea.vmem %s2, %s187
      %s189 = smul.u32 32, %s14
      %s190 = smul.u32 32, %s14
      %p191 = scmp.lt.s32.totalorder %s190, 63
      %s192 = scalar_select %p191, %s190, 63
      %s193 = smul.addr %s192, 8
      %s194 = scalar_lea.vmem %s3, %s193
      %s195 = smul.u32 32, %s14
      %v196 = vld [vmem:[%s182] sm:$0xff]
      %v197 = vld [vmem:[%s182 + $0x8] sm:$0xff]
      %v198 = vld [vmem:[%s182 + $0x10] sm:$0xff]
      %v199 = vld [vmem:[%s182 + $0x18] sm:$0xff]
      %v200 = vld [vmem:[%s182 + $0x20] sm:$0xff]
      %v201 = vld [vmem:[%s182 + $0x28] sm:$0xff]
      %v202 = vld [vmem:[%s182 + $0x30] sm:$0xff]
      %v203 = vld [vmem:[%s182 + $0x38] sm:$0xff]
      %v204 = vld [vmem:[%s182 + $0x40] sm:$0xff]
      %v205 = vld [vmem:[%s182 + $0x48] sm:$0xff]
      %v206 = vld [vmem:[%s182 + $0x50] sm:$0xff]
      %v207 = vld [vmem:[%s182 + $0x58] sm:$0xff]
      %v208 = vld [vmem:[%s182 + $0x60] sm:$0xff]
      %v209 = vld [vmem:[%s182 + $0x68] sm:$0xff]
      %v210 = vld [vmem:[%s182 + $0x70] sm:$0xff]
      %v211 = vld [vmem:[%s182 + $0x78] sm:$0xff]
      %v212 = vld [vmem:[%s182 + $0x80] sm:$0xff]
      %v213 = vld [vmem:[%s182 + $0x88] sm:$0xff]
      %v214 = vld [vmem:[%s182 + $0x90] sm:$0xff]
      %v215 = vld [vmem:[%s182 + $0x98] sm:$0xff]
      %v216 = vld [vmem:[%s182 + $0xa0] sm:$0xff]
      %v217 = vld [vmem:[%s182 + $0xa8] sm:$0xff]
      %v218 = vld [vmem:[%s182 + $0xb0] sm:$0xff]
      %v219 = vld [vmem:[%s182 + $0xb8] sm:$0xff]
      %v220 = vld [vmem:[%s182 + $0xc0] sm:$0xff]
      %v221 = vld [vmem:[%s182 + $0xc8] sm:$0xff]
      %v222 = vld [vmem:[%s182 + $0xd0] sm:$0xff]
      %v223 = vld [vmem:[%s182 + $0xd8] sm:$0xff]
      %v224 = vld [vmem:[%s182 + $0xe0] sm:$0xff]
      %v225 = vld [vmem:[%s182 + $0xe8] sm:$0xff]
      %v226 = vld [vmem:[%s182 + $0xf0] sm:$0xff]
      %v227 = vld [vmem:[%s182 + $0xf8] sm:$0xff]
      %v228 = vld [vmem:[%s1] sm:$0x1]
      %v229 = vperm.slane %v228, 0
      %v230 = vmul.f32 %v196, %v229
      %v231 = vmul.f32 %v197, %v229
      %v232 = vmul.f32 %v198, %v229
      %v233 = vmul.f32 %v199, %v229
      %v234 = vmul.f32 %v200, %v229
      %v235 = vmul.f32 %v201, %v229
      %v236 = vmul.f32 %v202, %v229
      %v237 = vmul.f32 %v203, %v229
      %v238 = vmul.f32 %v204, %v229
      %v239 = vmul.f32 %v205, %v229
      %v240 = vmul.f32 %v206, %v229
      %v241 = vmul.f32 %v207, %v229
      %v242 = vmul.f32 %v208, %v229
      %v243 = vmul.f32 %v209, %v229
      %v244 = vmul.f32 %v210, %v229
      %v245 = vmul.f32 %v211, %v229
      %v246 = vmul.f32 %v212, %v229
      %v247 = vmul.f32 %v213, %v229
      %v248 = vmul.f32 %v214, %v229
      %v249 = vmul.f32 %v215, %v229
      %v250 = vmul.f32 %v216, %v229
      %v251 = vmul.f32 %v217, %v229
      %v252 = vmul.f32 %v218, %v229
      %v253 = vmul.f32 %v219, %v229
      %v254 = vmul.f32 %v220, %v229
      %v255 = vmul.f32 %v221, %v229
      %v256 = vmul.f32 %v222, %v229
      %v257 = vmul.f32 %v223, %v229
      %v258 = vmul.f32 %v224, %v229
      %v259 = vmul.f32 %v225, %v229
      %v260 = vmul.f32 %v226, %v229
      %v261 = vmul.f32 %v227, %v229
      %v262 = vld [vmem:[%s1 + $0x1] sm:$0x1]
      %v263 = vperm.slane %v262, 0
      %v264 = vadd.f32 %v230, %v263
      %v265 = vadd.f32 %v231, %v263
      %v266 = vadd.f32 %v232, %v263
      %v267 = vadd.f32 %v233, %v263
      %v268 = vadd.f32 %v234, %v263
      %v269 = vadd.f32 %v235, %v263
      %v270 = vadd.f32 %v236, %v263
      %v271 = vadd.f32 %v237, %v263
      %v272 = vadd.f32 %v238, %v263
      %v273 = vadd.f32 %v239, %v263
      %v274 = vadd.f32 %v240, %v263
      %v275 = vadd.f32 %v241, %v263
      %v276 = vadd.f32 %v242, %v263
      %v277 = vadd.f32 %v243, %v263
      %v278 = vadd.f32 %v244, %v263
      %v279 = vadd.f32 %v245, %v263
      %v280 = vadd.f32 %v246, %v263
      %v281 = vadd.f32 %v247, %v263
      %v282 = vadd.f32 %v248, %v263
      %v283 = vadd.f32 %v249, %v263
      %v284 = vadd.f32 %v250, %v263
      %v285 = vadd.f32 %v251, %v263
      %v286 = vadd.f32 %v252, %v263
      %v287 = vadd.f32 %v253, %v263
      %v288 = vadd.f32 %v254, %v263
      %v289 = vadd.f32 %v255, %v263
      %v290 = vadd.f32 %v256, %v263
      %v291 = vadd.f32 %v257, %v263
      %v292 = vadd.f32 %v258, %v263
      %v293 = vadd.f32 %v259, %v263
      %v294 = vadd.f32 %v260, %v263
      %v295 = vadd.f32 %v261, %v263
      %v296 = vld [vmem:[%s188] sm:$0xff]
      %v297 = vld [vmem:[%s188 + $0x8] sm:$0xff]
      %v298 = vld [vmem:[%s188 + $0x10] sm:$0xff]
      %v299 = vld [vmem:[%s188 + $0x18] sm:$0xff]
      %v300 = vld [vmem:[%s188 + $0x20] sm:$0xff]
      %v301 = vld [vmem:[%s188 + $0x28] sm:$0xff]
      %v302 = vld [vmem:[%s188 + $0x30] sm:$0xff]
      %v303 = vld [vmem:[%s188 + $0x38] sm:$0xff]
      %v304 = vld [vmem:[%s188 + $0x40] sm:$0xff]
      %v305 = vld [vmem:[%s188 + $0x48] sm:$0xff]
      %v306 = vld [vmem:[%s188 + $0x50] sm:$0xff]
      %v307 = vld [vmem:[%s188 + $0x58] sm:$0xff]
      %v308 = vld [vmem:[%s188 + $0x60] sm:$0xff]
      %v309 = vld [vmem:[%s188 + $0x68] sm:$0xff]
      %v310 = vld [vmem:[%s188 + $0x70] sm:$0xff]
      %v311 = vld [vmem:[%s188 + $0x78] sm:$0xff]
      %v312 = vld [vmem:[%s188 + $0x80] sm:$0xff]
      %v313 = vld [vmem:[%s188 + $0x88] sm:$0xff]
      %v314 = vld [vmem:[%s188 + $0x90] sm:$0xff]
      %v315 = vld [vmem:[%s188 + $0x98] sm:$0xff]
      %v316 = vld [vmem:[%s188 + $0xa0] sm:$0xff]
      %v317 = vld [vmem:[%s188 + $0xa8] sm:$0xff]
      %v318 = vld [vmem:[%s188 + $0xb0] sm:$0xff]
      %v319 = vld [vmem:[%s188 + $0xb8] sm:$0xff]
      %v320 = vld [vmem:[%s188 + $0xc0] sm:$0xff]
      %v321 = vld [vmem:[%s188 + $0xc8] sm:$0xff]
      %v322 = vld [vmem:[%s188 + $0xd0] sm:$0xff]
      %v323 = vld [vmem:[%s188 + $0xd8] sm:$0xff]
      %v324 = vld [vmem:[%s188 + $0xe0] sm:$0xff]
      %v325 = vld [vmem:[%s188 + $0xe8] sm:$0xff]
      %v326 = vld [vmem:[%s188 + $0xf0] sm:$0xff]
      %v327 = vld [vmem:[%s188 + $0xf8] sm:$0xff]
      %v328 = vadd.f32 %v264, %v296
      %v329 = vadd.f32 %v265, %v297
      %v330 = vadd.f32 %v266, %v298
      %v331 = vadd.f32 %v267, %v299
      %v332 = vadd.f32 %v268, %v300
      %v333 = vadd.f32 %v269, %v301
      %v334 = vadd.f32 %v270, %v302
      %v335 = vadd.f32 %v271, %v303
      %v336 = vadd.f32 %v272, %v304
      %v337 = vadd.f32 %v273, %v305
      %v338 = vadd.f32 %v274, %v306
      %v339 = vadd.f32 %v275, %v307
      %v340 = vadd.f32 %v276, %v308
      %v341 = vadd.f32 %v277, %v309
      %v342 = vadd.f32 %v278, %v310
      %v343 = vadd.f32 %v279, %v311
      %v344 = vadd.f32 %v280, %v312
      %v345 = vadd.f32 %v281, %v313
      %v346 = vadd.f32 %v282, %v314
      %v347 = vadd.f32 %v283, %v315
      %v348 = vadd.f32 %v284, %v316
      %v349 = vadd.f32 %v285, %v317
      %v350 = vadd.f32 %v286, %v318
      %v351 = vadd.f32 %v287, %v319
      %v352 = vadd.f32 %v288, %v320
      %v353 = vadd.f32 %v289, %v321
      %v354 = vadd.f32 %v290, %v322
      %v355 = vadd.f32 %v291, %v323
      %v356 = vadd.f32 %v292, %v324
      %v357 = vadd.f32 %v293, %v325
      %v358 = vadd.f32 %v294, %v326
      %v359 = vadd.f32 %v295, %v327
      %vm360 = vcmask 31744
      %361 = vst.msk [vmem:[%s194] sm:$0xff] %vm360, %v328
      %362 = vst.msk [vmem:[%s194 + $0x8] sm:$0xff] %vm360, %v329
      %363 = vst.msk [vmem:[%s194 + $0x10] sm:$0xff] %vm360, %v330
      %364 = vst.msk [vmem:[%s194 + $0x18] sm:$0xff] %vm360, %v331
      %365 = vst.msk [vmem:[%s194 + $0x20] sm:$0xff] %vm360, %v332
      %366 = vst.msk [vmem:[%s194 + $0x28] sm:$0xff] %vm360, %v333
      %367 = vst.msk [vmem:[%s194 + $0x30] sm:$0xff] %vm360, %v334
      %368 = vst.msk [vmem:[%s194 + $0x38] sm:$0xff] %vm360, %v335
      %369 = vst.msk [vmem:[%s194 + $0x40] sm:$0xff] %vm360, %v336
      %370 = vst.msk [vmem:[%s194 + $0x48] sm:$0xff] %vm360, %v337
      %371 = vst.msk [vmem:[%s194 + $0x50] sm:$0xff] %vm360, %v338
      %372 = vst.msk [vmem:[%s194 + $0x58] sm:$0xff] %vm360, %v339
      %373 = vst.msk [vmem:[%s194 + $0x60] sm:$0xff] %vm360, %v340
      %374 = vst.msk [vmem:[%s194 + $0x68] sm:$0xff] %vm360, %v341
      %375 = vst.msk [vmem:[%s194 + $0x70] sm:$0xff] %vm360, %v342
      %376 = vst.msk [vmem:[%s194 + $0x78] sm:$0xff] %vm360, %v343
      %377 = vst.msk [vmem:[%s194 + $0x80] sm:$0xff] %vm360, %v344
      %378 = vst.msk [vmem:[%s194 + $0x88] sm:$0xff] %vm360, %v345
      %379 = vst.msk [vmem:[%s194 + $0x90] sm:$0xff] %vm360, %v346
      %380 = vst.msk [vmem:[%s194 + $0x98] sm:$0xff] %vm360, %v347
      %381 = vst.msk [vmem:[%s194 + $0xa0] sm:$0xff] %vm360, %v348
      %382 = vst.msk [vmem:[%s194 + $0xa8] sm:$0xff] %vm360, %v349
      %383 = vst.msk [vmem:[%s194 + $0xb0] sm:$0xff] %vm360, %v350
      %384 = vst.msk [vmem:[%s194 + $0xb8] sm:$0xff] %vm360, %v351
      %385 = vst.msk [vmem:[%s194 + $0xc0] sm:$0xff] %vm360, %v352
      %386 = vst.msk [vmem:[%s194 + $0xc8] sm:$0xff] %vm360, %v353
      %387 = vst.msk [vmem:[%s194 + $0xd0] sm:$0xff] %vm360, %v354
      %388 = vst.msk [vmem:[%s194 + $0xd8] sm:$0xff] %vm360, %v355
      %389 = vst.msk [vmem:[%s194 + $0xe0] sm:$0xff] %vm360, %v356
      %390 = vst.msk [vmem:[%s194 + $0xe8] sm:$0xff] %vm360, %v357
      %391 = vst.msk [vmem:[%s194 + $0xf0] sm:$0xff] %vm360, %v358
      %392 = vst.msk [vmem:[%s194 + $0xf8] sm:$0xff] %vm360, %v359
      %s393 = smul.u32 32, %s14
      %p394 = scmp.lt.s32.totalorder %s393, 63
      %s395 = scalar_select %p394, %s393, 63
      %s396 = smul.addr %s395, 8
      %s397 = scalar_lea.vmem %s3, %s396
      // Predicated region
      $region33: #{linear_bottleneck_forward.7} parent=31 // pred_check
        %p398 = pneg %p105
      $region34: #{linear_bottleneck_forward.7} parent=31 // pred_check_branch
        %400 = sbr.rel (%p398) target = $region36
      $region35: #{linear_bottleneck_forward.7} parent=31 // pred_region
        %s401 = smul.u32 32, %s14
      $region36: #{linear_bottleneck_forward.7} parent=31 // pred_fallthru
        _
    $region32: #{linear_bottleneck_forward.7} parent=5 // pred_fallthru
      _
    %p402 = scmp.le.s32.totalorder 2, %s9
    // Predicated region
    $region37: #{linear_bottleneck_forward.7} parent=5 // pred_check
      %p403 = pneg %p402
    $region38: #{linear_bottleneck_forward.7} parent=5 // pred_check_branch
      %405 = sbr.rel (%p403) target = $region40
    $region39: #{linear_bottleneck_forward.7} parent=5 // pred_region
      %s406 = ssub.s32 %s9, 2
      // Predicated region
      $region41: #{linear_bottleneck_forward.7} parent=39 // pred_check
        %p407 = pneg %p111
      $region42: #{linear_bottleneck_forward.7} parent=39 // pred_check_branch
        %409 = sbr.rel (%p407) target = $region44
      $region43: #{linear_bottleneck_forward.7} parent=39 // pred_region
        %s410 = smul.u32 32, %s15
        %p411 = scmp.lt.s32.totalorder %s410, 63
        %s412 = scalar_select %p411, %s410, 63
        %s413 = smul.addr %s412, 8
        %s414 = scalar_lea.vmem %s3, %s413
      $region44: #{linear_bottleneck_forward.7} parent=39 // pred_fallthru
        _
    $region40: #{linear_bottleneck_forward.7} parent=5 // pred_fallthru
      _
  $region6: #{linear_bottleneck_forward.7} parent=0 // loop_footer
    %s13 = sadd.s32 1, %s9
  $region7: #{linear_bottleneck_forward.7} parent=0 // loop_footer_branch
    %8 = sbr.rel target = $region3
  $region8: #{linear_bottleneck_forward.7} parent=0 // loop_exit
    _

// kernel: linear_bottleneck_forward.5
$region0: #{linear_bottleneck_forward.5}
  #allocation0 [shape = 'u32[]', space=smem, size = 0x4, offset = 0x4, fixed_abs, tag = 'smem constant byte address 0x4 - core index']
  #allocation1 [shape = 'u32[72,128]{1,0:T(1,128)}', space=vmem, size = 0x9000, scoped, tag = 'internal scratch']
  #allocation2 [shape = 'f32[18,18,24]{2,1,0:T(8,128)}', space=vmem, size = 0x36000, scoped, tag = 'scratch operand']
  %s0 = inlined_call_operand.vmem [shape: f32[2,16,16,24], index: 0, kind: input, shape index: {}]
  %s1 = inlined_call_operand.vmem [shape: f32[2,24], index: 1, kind: input, shape index: {}]
  %s2 = inlined_call_operand.vmem [shape: f32[3,3,24], index: 2, kind: input, shape index: {}]
  %s3 = inlined_call_operand.vmem [shape: f32[2,16,16,24], index: 3, kind: output, shape index: {0}]
  %s4 = inlined_call_operand.vmem [shape: f32[2,2,24], index: 4, kind: output, shape index: {1}]
  %5 = xla_tuple %s3, %s4
  %s6 = sld [smem:[#allocation0]]
  $region53: #{linear_bottleneck_forward.5} parent=0
    _
  %s8 = ssub.s32 1, %s6
  %s9 = scalar_select 0, %s8, %s6
  loop: start=0, step=1, limit=4
  $region2: #{linear_bottleneck_forward.5} parent=0 // loop_pre_header
    _
  $region3: #{linear_bottleneck_forward.5} parent=0 // loop_header
    %s11 = sphi 0, %s15
    %p12 = scmp.ge.s32.totalorder %s11, 4
    %s21 = sphi 0, %s23
    %s24 = sphi 0, %s21
    %s25 = sphi 0, %s24
    %s41 = sphi 0, %s25
    %s45 = sphi 0, %s45
    %s47 = sphi 0, %s45
    %s48 = sphi 0, %s47
    %s62 = sphi 0, %s48
    %s66 = sphi 0, %s66
    %s68 = sphi 0, %s66
    %s69 = sphi 0, %s68
    %s83 = sphi 0, %s69
    %s89 = sphi 0, %s91
    %s92 = sphi 0, %s89
    %s93 = sphi 0, %s92
    %s109 = sphi 0, %s93
    %s115 = sphi 0, %s117
    %s118 = sphi 0, %s115
    %s119 = sphi 0, %s118
    %s135 = sphi 0, %s119
  $region4: #{linear_bottleneck_forward.5} parent=0 // loop_header_branch
    %14 = sbr.rel (%p12) target = $region8
  $region5: #{linear_bottleneck_forward.5} parent=0 // loop_body
    %s16 = ssub.s32 %s11, 1
    %s17 = ssub.s32 %s11, 2
    %s18 = sadd.s32 %s11, 1
    %s19 = ssub.s32 %s11, %s18
    %p20 = scmp.eq.s32.totalorder %s19, 0
    %s22 = sadd.s32 %s21, 1
    %s23 = scalar_select %p20, %s21, %s22
    %p26 = pneg %p20
    %p27 = scmp.eq.s32.totalorder %s11, 1
    %p28 = por %p26, %p27
    %p29 = scmp.ne.s32.totalorder %s21, %s24
    %p30 = scmp.eq.s32.totalorder %s11, 0
    %p31 = por %p29, %p30
    %p32 = scmp.ne.s32.totalorder %s21, %s24
    %p33 = scmp.eq.s32.totalorder %s16, 1
    %p34 = por %p32, %p33
    %p35 = scmp.ne.s32.totalorder %s24, %s25
    %p36 = scmp.eq.s32.totalorder %s16, 0
    %p37 = por %p35, %p36
    %p38 = scmp.ne.s32.totalorder %s24, %s25
    %p39 = scmp.eq.s32.totalorder %s17, 1
    %p40 = por %p38, %p39
    %p42 = scmp.ne.s32.totalorder %s25, %s41
    %p43 = scmp.eq.s32.totalorder %s17, 0
    %p44 = por %p42, %p43
    %s46 = sadd.s32 %s45, 1
    %p49 = scmp.eq.s32.totalorder %s11, 1
    %p50 = scmp.ne.s32.totalorder %s45, %s47
    %p51 = scmp.eq.s32.totalorder %s11, 0
    %p52 = por %p50, %p51
    %p53 = scmp.ne.s32.totalorder %s45, %s47
    %p54 = scmp.eq.s32.totalorder %s16, 1
    %p55 = por %p53, %p54
    %p56 = scmp.ne.s32.totalorder %s47, %s48
    %p57 = scmp.eq.s32.totalorder %s16, 0
    %p58 = por %p56, %p57
    %p59 = scmp.ne.s32.totalorder %s47, %s48
    %p60 = scmp.eq.s32.totalorder %s17, 1
    %p61 = por %p59, %p60
    %p63 = scmp.ne.s32.totalorder %s48, %s62
    %p64 = scmp.eq.s32.totalorder %s17, 0
    %p65 = por %p63, %p64
    %s67 = sadd.s32 %s66, 1
    %p70 = scmp.eq.s32.totalorder %s11, 1
    %p71 = scmp.ne.s32.totalorder %s66, %s68
    %p72 = scmp.eq.s32.totalorder %s11, 0
    %p73 = por %p71, %p72
    %p74 = scmp.ne.s32.totalorder %s66, %s68
    %p75 = scmp.eq.s32.totalorder %s16, 1
    %p76 = por %p74, %p75
    %p77 = scmp.ne.s32.totalorder %s68, %s69
    %p78 = scmp.eq.s32.totalorder %s16, 0
    %p79 = por %p77, %p78
    %p80 = scmp.ne.s32.totalorder %s68, %s69
    %p81 = scmp.eq.s32.totalorder %s17, 1
    %p82 = por %p80, %p81
    %p84 = scmp.ne.s32.totalorder %s69, %s83
    %p85 = scmp.eq.s32.totalorder %s17, 0
    %p86 = por %p84, %p85
    %s87 = ssub.s32 %s11, %s18
    %p88 = scmp.eq.s32.totalorder %s87, 0
    %s90 = sadd.s32 %s89, 1
    %s91 = scalar_select %p88, %s89, %s90
    %p94 = pneg %p88
    %p95 = scmp.eq.s32.totalorder %s11, 1
    %p96 = por %p94, %p95
    %p97 = scmp.ne.s32.totalorder %s89, %s92
    %p98 = scmp.eq.s32.totalorder %s11, 0
    %p99 = por %p97, %p98
    %p100 = scmp.ne.s32.totalorder %s89, %s92
    %p101 = scmp.eq.s32.totalorder %s16, 1
    %p102 = por %p100, %p101
    %p103 = scmp.ne.s32.totalorder %s92, %s93
    %p104 = scmp.eq.s32.totalorder %s16, 0
    %p105 = por %p103, %p104
    %p106 = scmp.ne.s32.totalorder %s92, %s93
    %p107 = scmp.eq.s32.totalorder %s17, 1
    %p108 = por %p106, %p107
    %p110 = scmp.ne.s32.totalorder %s93, %s109
    %p111 = scmp.eq.s32.totalorder %s17, 0
    %p112 = por %p110, %p111
    %s113 = ssub.s32 %s11, %s18
    %p114 = scmp.eq.s32.totalorder %s113, 0
    %s116 = sadd.s32 %s115, 1
    %s117 = scalar_select %p114, %s115, %s116
    %p120 = pneg %p114
    %p121 = scmp.eq.s32.totalorder %s11, 1
    %p122 = por %p120, %p121
    %p123 = scmp.ne.s32.totalorder %s115, %s118
    %p124 = scmp.eq.s32.totalorder %s11, 0
    %p125 = por %p123, %p124
    %p126 = scmp.ne.s32.totalorder %s115, %s118
    %p127 = scmp.eq.s32.totalorder %s16, 1
    %p128 = por %p126, %p127
    %p129 = scmp.ne.s32.totalorder %s118, %s119
    %p130 = scmp.eq.s32.totalorder %s16, 0
    %p131 = por %p129, %p130
    %p132 = scmp.ne.s32.totalorder %s118, %s119
    %p133 = scmp.eq.s32.totalorder %s17, 1
    %p134 = por %p132, %p133
    %p136 = scmp.ne.s32.totalorder %s119, %s135
    %p137 = scmp.eq.s32.totalorder %s17, 0
    %p138 = por %p136, %p137
    %p139 = scmp.le.s32.totalorder 1, %s11
    %p140 = scmp.lt.s32.totalorder %s11, 3
    %p141 = pnand %p139, %p140
    %p142 = pneg %p141
    // Predicated region
    $region9: #{linear_bottleneck_forward.5} parent=5 // pred_check
      _
    $region10: #{linear_bottleneck_forward.5} parent=5 // pred_check_branch
      %144 = sbr.rel (%p141) target = $region12
    $region11: #{linear_bottleneck_forward.5} parent=5 // pred_region
      %s145 = ssub.s32 %s11, 1
      // Predicated region
      $region13: #{linear_bottleneck_forward.5} parent=11 // pred_check
        %p146 = pneg %p58
      $region14: #{linear_bottleneck_forward.5} parent=11 // pred_check_branch
        %148 = sbr.rel (%p146) target = $region16
      $region15: #{linear_bottleneck_forward.5} parent=11 // pred_region
        _
      $region16: #{linear_bottleneck_forward.5} parent=11 // pred_fallthru
        _
      // Predicated region
      $region17: #{linear_bottleneck_forward.5} parent=11 // pred_check
        %p149 = pneg %p79
      $region18: #{linear_bottleneck_forward.5} parent=11 // pred_check_branch
        %151 = sbr.rel (%p149) target = $region20
      $region19: #{linear_bottleneck_forward.5} parent=11 // pred_region
        _
      $region20: #{linear_bottleneck_forward.5} parent=11 // pred_fallthru
        _
    $region12: #{linear_bottleneck_forward.5} parent=5 // pred_fallthru
      _
    %p152 = scmp.lt.s32.totalorder %s11, 2
    // Predicated region
    $region21: #{linear_bottleneck_forward.5} parent=5 // pred_check
      %p153 = pneg %p152
    $region22: #{linear_bottleneck_forward.5} parent=5 // pred_check_branch
      %155 = sbr.rel (%p153) target = $region24
    $region23: #{linear_bottleneck_forward.5} parent=5 // pred_region
      // Predicated region
      $region25: #{linear_bottleneck_forward.5} parent=23 // pred_check
        %p156 = pneg %p31
      $region26: #{linear_bottleneck_forward.5} parent=23 // pred_check_branch
        %158 = sbr.rel (%p156) target = $region28
      $region27: #{linear_bottleneck_forward.5} parent=23 // pred_region
        %p159 = scmp.lt.s32.totalorder %s11, 1
        %s160 = scalar_select %p159, %s11, 1
        %s161 = smul.addr %s160, 32
        %s162 = smul.addr %s161, 8
        %s163 = scalar_lea.vmem %s0, %s162
      $region28: #{linear_bottleneck_forward.5} parent=23 // pred_fallthru
        _
    $region24: #{linear_bottleneck_forward.5} parent=5 // pred_fallthru
      _
    %p164 = scmp.le.s32.totalorder 1, %s11
    %p165 = scmp.lt.s32.totalorder %s11, 3
    %p166 = pnand %p164, %p165
    %p167 = pneg %p166
    // Predicated region
    $region29: #{linear_bottleneck_forward.5} parent=5 // pred_check
      _
    $region30: #{linear_bottleneck_forward.5} parent=5 // pred_check_branch
      %169 = sbr.rel (%p166) target = $region32
    $region31: #{linear_bottleneck_forward.5} parent=5 // pred_region
      %s170 = ssub.s32 %s11, 1
      %p171 = scmp.lt.s32.totalorder %s16, 1
      %s172 = scalar_select %p171, %s16, 1
      %s173 = smul.addr %s172, 32
      %s174 = smul.addr %s173, 8
      %s175 = scalar_lea.vmem %s0, %s174
      %p176 = pneg %p37
      %p177 = pneg %p34
      %p178 = pneg %p58
      %p179 = pneg %p55
      %p180 = pneg %p79
      %p181 = pneg %p76
      %p182 = pneg %p105
      %p183 = pneg %p102
      %p184 = scmp.lt.s32.totalorder %s16, 1
      %s185 = scalar_select %p184, %s16, 1
      %s186 = smul.addr %s185, 32
      %s187 = smul.addr %s186, 8
      %s188 = scalar_lea.vmem %s3, %s187
      %p189 = pneg %p131
      %p190 = pneg %p128
      %p191 = scmp.lt.s32.totalorder %s16, 1
      %s192 = scalar_select %p191, %s16, 1
      %s193 = smul.addr %s192, 2
      %s194 = scalar_lea.vmem %s4, %s193
      %p195 = scmp.lt.s32.totalorder %s16, 1
      %s196 = scalar_select %p195, %s16, 1
      %s197 = smul.addr %s196, 32
      %s198 = smul.addr %s197, 8
      %s199 = scalar_lea.vmem %s0, %s198
      %p200 = scmp.lt.s32.totalorder %s16, 1
      %s201 = scalar_select %p200, %s16, 1
      %s202 = smul.addr %s201, 32
      %s203 = smul.addr %s202, 8
      %s204 = scalar_lea.vmem %s3, %s203
      %p205 = scmp.lt.s32.totalorder %s16, 1
      %s206 = scalar_select %p205, %s16, 1
      %s207 = smul.addr %s206, 2
      %s208 = scalar_lea.vmem %s4, %s207
      %v209 = vld [vmem:[%s1] sm:$0x1]
      %v210 = vld [vmem:[%s1 + $0x1] sm:$0x1]
      %v211 = vld [vmem:[%s199] sm:$0xff]
      %v212 = vld [vmem:[%s199 + $0x8] sm:$0xff]
      %v213 = vld [vmem:[%s199 + $0x10] sm:$0xff]
      %v214 = vld [vmem:[%s199 + $0x18] sm:$0xff]
      %v215 = vld [vmem:[%s199 + $0x20] sm:$0xff]
      %v216 = vld [vmem:[%s199 + $0x28] sm:$0xff]
      %v217 = vld [vmem:[%s199 + $0x30] sm:$0xff]
      %v218 = vld [vmem:[%s199 + $0x38] sm:$0xff]
      %v219 = vld [vmem:[%s199 + $0x40] sm:$0xff]
      %v220 = vld [vmem:[%s199 + $0x48] sm:$0xff]
      %v221 = vld [vmem:[%s199 + $0x50] sm:$0xff]
      %v222 = vld [vmem:[%s199 + $0x58] sm:$0xff]
      %v223 = vld [vmem:[%s199 + $0x60] sm:$0xff]
      %v224 = vld [vmem:[%s199 + $0x68] sm:$0xff]
      %v225 = vld [vmem:[%s199 + $0x70] sm:$0xff]
      %v226 = vld [vmem:[%s199 + $0x78] sm:$0xff]
      %v227 = vld [vmem:[%s199 + $0x80] sm:$0xff]
      %v228 = vld [vmem:[%s199 + $0x88] sm:$0xff]
      %v229 = vld [vmem:[%s199 + $0x90] sm:$0xff]
      %v230 = vld [vmem:[%s199 + $0x98] sm:$0xff]
      %v231 = vld [vmem:[%s199 + $0xa0] sm:$0xff]
      %v232 = vld [vmem:[%s199 + $0xa8] sm:$0xff]
      %v233 = vld [vmem:[%s199 + $0xb0] sm:$0xff]
      %v234 = vld [vmem:[%s199 + $0xb8] sm:$0xff]
      %v235 = vld [vmem:[%s199 + $0xc0] sm:$0xff]
      %v236 = vld [vmem:[%s199 + $0xc8] sm:$0xff]
      %v237 = vld [vmem:[%s199 + $0xd0] sm:$0xff]
      %v238 = vld [vmem:[%s199 + $0xd8] sm:$0xff]
      %v239 = vld [vmem:[%s199 + $0xe0] sm:$0xff]
      %v240 = vld [vmem:[%s199 + $0xe8] sm:$0xff]
      %v241 = vld [vmem:[%s199 + $0xf0] sm:$0xff]
      %v242 = vld [vmem:[%s199 + $0xf8] sm:$0xff]
      %v243 = vperm.slane %v209, 0
      %v244 = vmul.f32 %v211, %v243
      %v245 = vmul.f32 %v212, %v243
      %v246 = vmul.f32 %v213, %v243
      %v247 = vmul.f32 %v214, %v243
      %v248 = vmul.f32 %v215, %v243
      %v249 = vmul.f32 %v216, %v243
      %v250 = vmul.f32 %v217, %v243
      %v251 = vmul.f32 %v218, %v243
      %v252 = vmul.f32 %v219, %v243
      %v253 = vmul.f32 %v220, %v243
      %v254 = vmul.f32 %v221, %v243
      %v255 = vmul.f32 %v222, %v243
      %v256 = vmul.f32 %v223, %v243
      %v257 = vmul.f32 %v224, %v243
      %v258 = vmul.f32 %v225, %v243
      %v259 = vmul.f32 %v226, %v243
      %v260 = vmul.f32 %v227, %v243
      %v261 = vmul.f32 %v228, %v243
      %v262 = vmul.f32 %v229, %v243
      %v263 = vmul.f32 %v230, %v243
      %v264 = vmul.f32 %v231, %v243
      %v265 = vmul.f32 %v232, %v243
      %v266 = vmul.f32 %v233, %v243
      %v267 = vmul.f32 %v234, %v243
      %v268 = vmul.f32 %v235, %v243
      %v269 = vmul.f32 %v236, %v243
      %v270 = vmul.f32 %v237, %v243
      %v271 = vmul.f32 %v238, %v243
      %v272 = vmul.f32 %v239, %v243
      %v273 = vmul.f32 %v240, %v243
      %v274 = vmul.f32 %v241, %v243
      %v275 = vmul.f32 %v242, %v243
      %v276 = vperm.slane %v210, 0
      %v277 = vadd.f32 %v244, %v276
      %v278 = vadd.f32 %v245, %v276
      %v279 = vadd.f32 %v246, %v276
      %v280 = vadd.f32 %v247, %v276
      %v281 = vadd.f32 %v248, %v276
      %v282 = vadd.f32 %v249, %v276
      %v283 = vadd.f32 %v250, %v276
      %v284 = vadd.f32 %v251, %v276
      %v285 = vadd.f32 %v252, %v276
      %v286 = vadd.f32 %v253, %v276
      %v287 = vadd.f32 %v254, %v276
      %v288 = vadd.f32 %v255, %v276
      %v289 = vadd.f32 %v256, %v276
      %v290 = vadd.f32 %v257, %v276
      %v291 = vadd.f32 %v258, %v276
      %v292 = vadd.f32 %v259, %v276
      %v293 = vadd.f32 %v260, %v276
      %v294 = vadd.f32 %v261, %v276
      %v295 = vadd.f32 %v262, %v276
      %v296 = vadd.f32 %v263, %v276
      %v297 = vadd.f32 %v264, %v276
      %v298 = vadd.f32 %v265, %v276
      %v299 = vadd.f32 %v266, %v276
      %v300 = vadd.f32 %v267, %v276
      %v301 = vadd.f32 %v268, %v276
      %v302 = vadd.f32 %v269, %v276
      %v303 = vadd.f32 %v270, %v276
      %v304 = vadd.f32 %v271, %v276
      %v305 = vadd.f32 %v272, %v276
      %v306 = vadd.f32 %v273, %v276
      %v307 = vadd.f32 %v274, %v276
      %v308 = vadd.f32 %v275, %v276
      %v309 = vmax.f32 %v277, 0.0
      %v310 = vmax.f32 %v278, 0.0
      %v311 = vmax.f32 %v279, 0.0
      %v312 = vmax.f32 %v280, 0.0
      %v313 = vmax.f32 %v281, 0.0
      %v314 = vmax.f32 %v282, 0.0
      %v315 = vmax.f32 %v283, 0.0
      %v316 = vmax.f32 %v284, 0.0
      %v317 = vmax.f32 %v285, 0.0
      %v318 = vmax.f32 %v286, 0.0
      %v319 = vmax.f32 %v287, 0.0
      %v320 = vmax.f32 %v288, 0.0
      %v321 = vmax.f32 %v289, 0.0
      %v322 = vmax.f32 %v290, 0.0
      %v323 = vmax.f32 %v291, 0.0
      %v324 = vmax.f32 %v292, 0.0
      %v325 = vmax.f32 %v293, 0.0
      %v326 = vmax.f32 %v294, 0.0
      %v327 = vmax.f32 %v295, 0.0
      %v328 = vmax.f32 %v296, 0.0
      %v329 = vmax.f32 %v297, 0.0
      %v330 = vmax.f32 %v298, 0.0
      %v331 = vmax.f32 %v299, 0.0
      %v332 = vmax.f32 %v300, 0.0
      %v333 = vmax.f32 %v301, 0.0
      %v334 = vmax.f32 %v302, 0.0
      %v335 = vmax.f32 %v303, 0.0
      %v336 = vmax.f32 %v304, 0.0
      %v337 = vmax.f32 %v305, 0.0
      %v338 = vmax.f32 %v306, 0.0
      %v339 = vmax.f32 %v307, 0.0
      %v340 = vmax.f32 %v308, 0.0
      %v341 = vmin.f32 %v309, 6.0
      %v342 = vmin.f32 %v310, 6.0
      %v343 = vmin.f32 %v311, 6.0
      %v344 = vmin.f32 %v312, 6.0
      %v345 = vmin.f32 %v313, 6.0
      %v346 = vmin.f32 %v314, 6.0
      %v347 = vmin.f32 %v315, 6.0
      %v348 = vmin.f32 %v316, 6.0
      %v349 = vmin.f32 %v317, 6.0
      %v350 = vmin.f32 %v318, 6.0
      %v351 = vmin.f32 %v319, 6.0
      %v352 = vmin.f32 %v320, 6.0
      %v353 = vmin.f32 %v321, 6.0
      %v354 = vmin.f32 %v322, 6.0
      %v355 = vmin.f32 %v323, 6.0
      %v356 = vmin.f32 %v324, 6.0
      %v357 = vmin.f32 %v325, 6.0
      %v358 = vmin.f32 %v326, 6.0
      %v359 = vmin.f32 %v327, 6.0
      %v360 = vmin.f32 %v328, 6.0
      %v361 = vmin.f32 %v329, 6.0
      %v362 = vmin.f32 %v330, 6.0
      %v363 = vmin.f32 %v331, 6.0
      %v364 = vmin.f32 %v332, 6.0
      %v365 = vmin.f32 %v333, 6.0
      %v366 = vmin.f32 %v334, 6.0
      %v367 = vmin.f32 %v335, 6.0
      %v368 = vmin.f32 %v336, 6.0
      %v369 = vmin.f32 %v337, 6.0
      %v370 = vmin.f32 %v338, 6.0
      %v371 = vmin.f32 %v339, 6.0
      %v372 = vmin.f32 %v340, 6.0
      %vm373 = vcmask 195584
      %374 = vst.msk [vmem:[#allocation2] sm:$0xff] %vm373, 0.0
      %375 = vst.msk [vmem:[#allocation2 + $0x8] sm:$0xff] %vm373, 0.0
      %vm376 = vcmask 189440
      %377 = vst.msk [vmem:[#allocation2 + $0x10] sm:$0x3] %vm376, 0.0
      %378 = vst.msk [vmem:[#allocation2 + $0x18] sm:$0xff] %vm373, 0.0
      %379 = vst.msk [vmem:[#allocation2 + $0x20] sm:$0xff] %vm373, 0.0
      %380 = vst.msk [vmem:[#allocation2 + $0x28] sm:$0x3] %vm376, 0.0
      %381 = vst.msk [vmem:[#allocation2 + $0x30] sm:$0xff] %vm373, 0.0
      %382 = vst.msk [vmem:[#allocation2 + $0x38] sm:$0xff] %vm373, 0.0
      %383 = vst.msk [vmem:[#allocation2 + $0x40] sm:$0x3] %vm376, 0.0
      %384 = vst.msk [vmem:[#allocation2 + $0x48] sm:$0xff] %vm373, 0.0
      %385 = vst.msk [vmem:[#allocation2 + $0x50] sm:$0xff] %vm373, 0.0
      %386 = vst.msk [vmem:[#allocation2 + $0x58] sm:$0x3] %vm376, 0.0
      %387 = vst.msk [vmem:[#allocation2 + $0x60] sm:$0xff] %vm373, 0.0
      %388 = vst.msk [vmem:[#allocation2 + $0x68] sm:$0xff] %vm373, 0.0
      %389 = vst.msk [vmem:[#allocation2 + $0x70] sm:$0x3] %vm376, 0.0
      %390 = vst.msk [vmem:[#allocation2 + $0x78] sm:$0xff] %vm373, 0.0
      %391 = vst.msk [vmem:[#allocation2 + $0x80] sm:$0xff] %vm373, 0.0
      %392 = vst.msk [vmem:[#allocation2 + $0x88] sm:$0x3] %vm376, 0.0
      %393 = vst.msk [vmem:[#allocation2 + $0x90] sm:$0xff] %vm373, 0.0
      %394 = vst.msk [vmem:[#allocation2 + $0x98] sm:$0xff] %vm373, 0.0
      %395 = vst.msk [vmem:[#allocation2 + $0xa0] sm:$0x3] %vm376, 0.0
      %396 = vst.msk [vmem:[#allocation2 + $0xa8] sm:$0xff] %vm373, 0.0
      %397 = vst.msk [vmem:[#allocation2 + $0xb0] sm:$0xff] %vm373, 0.0
      %398 = vst.msk [vmem:[#allocation2 + $0xb8] sm:$0x3] %vm376, 0.0
      %399 = vst.msk [vmem:[#allocation2 + $0xc0] sm:$0xff] %vm373, 0.0
      %400 = vst.msk [vmem:[#allocation2 + $0xc8] sm:$0xff] %vm373, 0.0
      %401 = vst.msk [vmem:[#allocation2 + $0xd0] sm:$0x3] %vm376, 0.0
      %402 = vst.msk [vmem:[#allocation2 + $0xd8] sm:$0xff] %vm373, 0.0
      %403 = vst.msk [vmem:[#allocation2 + $0xe0] sm:$0xff] %vm373, 0.0
      %404 = vst.msk [vmem:[#allocation2 + $0xe8] sm:$0x3] %vm376, 0.0
      %405 = vst.msk [vmem:[#allocation2 + $0xf0] sm:$0xff] %vm373, 0.0
      %406 = vst.msk [vmem:[#allocation2 + $0xf8] sm:$0xff] %vm373, 0.0
      %407 = vst.msk [vmem:[#allocation2 + $0x100] sm:$0x3] %vm376, 0.0
      %408 = vst.msk [vmem:[#allocation2 + $0x108] sm:$0xff] %vm373, 0.0
      %409 = vst.msk [vmem:[#allocation2 + $0x110] sm:$0xff] %vm373, 0.0
      %410 = vst.msk [vmem:[#allocation2 + $0x118] sm:$0x3] %vm376, 0.0
      %411 = vst.msk [vmem:[#allocation2 + $0x120] sm:$0xff] %vm373, 0.0
      %412 = vst.msk [vmem:[#allocation2 + $0x128] sm:$0xff] %vm373, 0.0
      %413 = vst.msk [vmem:[#allocation2 + $0x130] sm:$0x3] %vm376, 0.0
      %414 = vst.msk [vmem:[#allocation2 + $0x138] sm:$0xff] %vm373, 0.0
      %415 = vst.msk [vmem:[#allocation2 + $0x140] sm:$0xff] %vm373, 0.0
      %416 = vst.msk [vmem:[#allocation2 + $0x148] sm:$0x3] %vm376, 0.0
      %417 = vst.msk [vmem:[#allocation2 + $0x150] sm:$0xff] %vm373, 0.0
      %418 = vst.msk [vmem:[#allocation2 + $0x158] sm:$0xff] %vm373, 0.0
      %419 = vst.msk [vmem:[#allocation2 + $0x160] sm:$0x3] %vm376, 0.0
      %420 = vst.msk [vmem:[#allocation2 + $0x168] sm:$0xff] %vm373, 0.0
      %421 = vst.msk [vmem:[#allocation2 + $0x170] sm:$0xff] %vm373, 0.0
      %422 = vst.msk [vmem:[#allocation2 + $0x178] sm:$0x3] %vm376, 0.0
      %423 = vst.msk [vmem:[#allocation2 + $0x180] sm:$0xff] %vm373, 0.0
      %424 = vst.msk [vmem:[#allocation2 + $0x188] sm:$0xff] %vm373, 0.0
      %425 = vst.msk [vmem:[#allocation2 + $0x190] sm:$0x3] %vm376, 0.0
      %426 = vst.msk [vmem:[#allocation2 + $0x198] sm:$0xff] %vm373, 0.0
      %427 = vst.msk [vmem:[#allocation2 + $0x1a0] sm:$0xff] %vm373, 0.0
      %428 = vst.msk [vmem:[#allocation2 + $0x1a8] sm:$0x3] %vm376, 0.0
      %s429 = scalar_lea.vmem [#allocation2], 24
      %430 = vst.msk [vmem:[%s429 + $0x1] sm:$0xff] %vm373, %v341
      %431 = vst.msk [vmem:[%s429 + $0x9] sm:$0xff] %vm373, %v342
      %432 = vst.msk [vmem:[%s429 + $0x19] sm:$0xff] %vm373, %v343
      %433 = vst.msk [vmem:[%s429 + $0x21] sm:$0xff] %vm373, %v344
      %434 = vst.msk [vmem:[%s429 + $0x31] sm:$0xff] %vm373, %v345
      %435 = vst.msk [vmem:[%s429 + $0x39] sm:$0xff] %vm373, %v346
      %436 = vst.msk [vmem:[%s429 + $0x49] sm:$0xff] %vm373, %v347
      %437 = vst.msk [vmem:[%s429 + $0x51] sm:$0xff] %vm373, %v348
      %438 = vst.msk [vmem:[%s429 + $0x61] sm:$0xff] %vm373, %v349
      %439 = vst.msk [vmem:[%s429 + $0x69] sm:$0xff] %vm373, %v350
      %440 = vst.msk [vmem:[%s429 + $0x79] sm:$0xff] %vm373, %v351
      %441 = vst.msk [vmem:[%s429 + $0x81] sm:$0xff] %vm373, %v352
      %442 = vst.msk [vmem:[%s429 + $0x91] sm:$0xff] %vm373, %v353
      %443 = vst.msk [vmem:[%s429 + $0x99] sm:$0xff] %vm373, %v354
      %444 = vst.msk [vmem:[%s429 + $0xa9] sm:$0xff] %vm373, %v355
      %445 = vst.msk [vmem:[%s429 + $0xb1] sm:$0xff] %vm373, %v356
      %446 = vst.msk [vmem:[%s429 + $0xc1] sm:$0xff] %vm373, %v357
      %447 = vst.msk [vmem:[%s429 + $0xc9] sm:$0xff] %vm373, %v358
      %448 = vst.msk [vmem:[%s429 + $0xd9] sm:$0xff] %vm373, %v359
      %449 = vst.msk [vmem:[%s429 + $0xe1] sm:$0xff] %vm373, %v360
      %450 = vst.msk [vmem:[%s429 + $0xf1] sm:$0xff] %vm373, %v361
      %451 = vst.msk [vmem:[%s429 + $0xf9] sm:$0xff] %vm373, %v362
      %452 = vst.msk [vmem:[%s429 + $0x109] sm:$0xff] %vm373, %v363
      %453 = vst.msk [vmem:[%s429 + $0x111] sm:$0xff] %vm373, %v364
      %454 = vst.msk [vmem:[%s429 + $0x121] sm:$0xff] %vm373, %v365
      %455 = vst.msk [vmem:[%s429 + $0x129] sm:$0xff] %vm373, %v366
      %456 = vst.msk [vmem:[%s429 + $0x139] sm:$0xff] %vm373, %v367
      %457 = vst.msk [vmem:[%s429 + $0x141] sm:$0xff] %vm373, %v368
      %458 = vst.msk [vmem:[%s429 + $0x151] sm:$0xff] %vm373, %v369
      %459 = vst.msk [vmem:[%s429 + $0x159] sm:$0xff] %vm373, %v370
      %460 = vst.msk [vmem:[%s429 + $0x169] sm:$0xff] %vm373, %v371
      %461 = vst.msk [vmem:[%s429 + $0x171] sm:$0xff] %vm373, %v372
      %v462 = vld [vmem:[#allocation2] sm:$0xff]
      %v463 = vld [vmem:[#allocation2 + $0x8] sm:$0xff]
      %v464 = vld [vmem:[#allocation2 + $0x18] sm:$0xff]
      %v465 = vld [vmem:[#allocation2 + $0x20] sm:$0xff]
      %v466 = vld [vmem:[#allocation2 + $0x30] sm:$0xff]
      %v467 = vld [vmem:[#allocation2 + $0x38] sm:$0xff]
      %v468 = vld [vmem:[#allocation2 + $0x48] sm:$0xff]
      %v469 = vld [vmem:[#allocation2 + $0x50] sm:$0xff]
      %v470 = vld [vmem:[#allocation2 + $0x60] sm:$0xff]
      %v471 = vld [vmem:[#allocation2 + $0x68] sm:$0xff]
      %v472 = vld [vmem:[#allocation2 + $0x78] sm:$0xff]
      %v473 = vld [vmem:[#allocation2 + $0x80] sm:$0xff]
      %v474 = vld [vmem:[#allocation2 + $0x90] sm:$0xff]
      %v475 = vld [vmem:[#allocation2 + $0x98] sm:$0xff]
      %v476 = vld [vmem:[#allocation2 + $0xa8] sm:$0xff]
      %v477 = vld [vmem:[#allocation2 + $0xb0] sm:$0xff]
      %v478 = vld [vmem:[#allocation2 + $0xc0] sm:$0xff]
      %v479 = vld [vmem:[#allocation2 + $0xc8] sm:$0xff]
      %v480 = vld [vmem:[#allocation2 + $0xd8] sm:$0xff]
      %v481 = vld [vmem:[#allocation2 + $0xe0] sm:$0xff]
      %v482 = vld [vmem:[#allocation2 + $0xf0] sm:$0xff]
      %v483 = vld [vmem:[#allocation2 + $0xf8] sm:$0xff]
      %v484 = vld [vmem:[#allocation2 + $0x108] sm:$0xff]
      %v485 = vld [vmem:[#allocation2 + $0x110] sm:$0xff]
      %v486 = vld [vmem:[#allocation2 + $0x120] sm:$0xff]
      %v487 = vld [vmem:[#allocation2 + $0x128] sm:$0xff]
      %v488 = vld [vmem:[#allocation2 + $0x138] sm:$0xff]
      %v489 = vld [vmem:[#allocation2 + $0x140] sm:$0xff]
      %v490 = vld [vmem:[#allocation2 + $0x150] sm:$0xff]
      %v491 = vld [vmem:[#allocation2 + $0x158] sm:$0xff]
      %v492 = vld [vmem:[#allocation2 + $0x168] sm:$0xff]
      %v493 = vld [vmem:[#allocation2 + $0x170] sm:$0xff]
      %v494 = vld [vmem:[%s2] sm:$0x1]
      %v495 = vperm.slane %v494, 0
      %v496 = vmul.f32 %v462, %v495
      %v497 = vmul.f32 %v463, %v495
      %v498 = vmul.f32 %v464, %v495
      %v499 = vmul.f32 %v465, %v495
      %v500 = vmul.f32 %v466, %v495
      %v501 = vmul.f32 %v467, %v495
      %v502 = vmul.f32 %v468, %v495
      %v503 = vmul.f32 %v469, %v495
      %v504 = vmul.f32 %v470, %v495
      %v505 = vmul.f32 %v471, %v495
      %v506 = vmul.f32 %v472, %v495
      %v507 = vmul.f32 %v473, %v495
      %v508 = vmul.f32 %v474, %v495
      %v509 = vmul.f32 %v475, %v495
      %v510 = vmul.f32 %v476, %v495
      %v511 = vmul.f32 %v477, %v495
      %v512 = vmul.f32 %v478, %v495
      %v513 = vmul.f32 %v479, %v495
      %v514 = vmul.f32 %v480, %v495
      %v515 = vmul.f32 %v481, %v495
      %v516 = vmul.f32 %v482, %v495
      %v517 = vmul.f32 %v483, %v495
      %v518 = vmul.f32 %v484, %v495
      %v519 = vmul.f32 %v485, %v495
      %v520 = vmul.f32 %v486, %v495
      %v521 = vmul.f32 %v487, %v495
      %v522 = vmul.f32 %v488, %v495
      %v523 = vmul.f32 %v489, %v495
      %v524 = vmul.f32 %v490, %v495
      %v525 = vmul.f32 %v491, %v495
      %v526 = vmul.f32 %v492, %v495
      %v527 = vmul.f32 %v493, %v495
      %v528 = vadd.f32 %v496, 0.0
      %v529 = vadd.f32 %v497, 0.0
      %v530 = vadd.f32 %v498, 0.0
      %v531 = vadd.f32 %v499, 0.0
      %v532 = vadd.f32 %v500, 0.0
      %v533 = vadd.f32 %v501, 0.0
      %v534 = vadd.f32 %v502, 0.0
      %v535 = vadd.f32 %v503, 0.0
      %v536 = vadd.f32 %v504, 0.0
      %v537 = vadd.f32 %v505, 0.0
      %v538 = vadd.f32 %v506, 0.0
      %v539 = vadd.f32 %v507, 0.0
      %v540 = vadd.f32 %v508, 0.0
      %v541 = vadd.f32 %v509, 0.0
      %v542 = vadd.f32 %v510, 0.0
      %v543 = vadd.f32 %v511, 0.0
      %v544 = vadd.f32 %v512, 0.0
      %v545 = vadd.f32 %v513, 0.0
      %v546 = vadd.f32 %v514, 0.0
      %v547 = vadd.f32 %v515, 0.0
      %v548 = vadd.f32 %v516, 0.0
      %v549 = vadd.f32 %v517, 0.0
      %v550 = vadd.f32 %v518, 0.0
      %v551 = vadd.f32 %v519, 0.0
      %v552 = vadd.f32 %v520, 0.0
      %v553 = vadd.f32 %v521, 0.0
      %v554 = vadd.f32 %v522, 0.0
      %v555 = vadd.f32 %v523, 0.0
      %v556 = vadd.f32 %v524, 0.0
      %v557 = vadd.f32 %v525, 0.0
      %v558 = vadd.f32 %v526, 0.0
      %v559 = vadd.f32 %v527, 0.0
      %v560 = vld [vmem:[#allocation2 + $0x1] sm:$0xff]
      %v561 = vld [vmem:[#allocation2 + $0x9] sm:$0xff]
      %v562 = vld [vmem:[#allocation2 + $0x19] sm:$0xff]
      %v563 = vld [vmem:[#allocation2 + $0x21] sm:$0xff]
      %v564 = vld [vmem:[#allocation2 + $0x31] sm:$0xff]
      %v565 = vld [vmem:[#allocation2 + $0x39] sm:$0xff]
      %v566 = vld [vmem:[#allocation2 + $0x49] sm:$0xff]
      %v567 = vld [vmem:[#allocation2 + $0x51] sm:$0xff]
      %v568 = vld [vmem:[#allocation2 + $0x61] sm:$0xff]
      %v569 = vld [vmem:[#allocation2 + $0x69] sm:$0xff]
      %v570 = vld [vmem:[#allocation2 + $0x79] sm:$0xff]
      %v571 = vld [vmem:[#allocation2 + $0x81] sm:$0xff]
      %v572 = vld [vmem:[#allocation2 + $0x91] sm:$0xff]
      %v573 = vld [vmem:[#allocation2 + $0x99] sm:$0xff]
      %v574 = vld [vmem:[#allocation2 + $0xa9] sm:$0xff]
      %v575 = vld [vmem:[#allocation2 + $0xb1] sm:$0xff]
      %v576 = vld [vmem:[#allocation2 + $0xc1] sm:$0xff]
      %v577 = vld [vmem:[#allocation2 + $0xc9] sm:$0xff]
      %v578 = vld [vmem:[#allocation2 + $0xd9] sm:$0xff]
      %v579 = vld [vmem:[#allocation2 + $0xe1] sm:$0xff]
      %v580 = vld [vmem:[#allocation2 + $0xf1] sm:$0xff]
      %v581 = vld [vmem:[#allocation2 + $0xf9] sm:$0xff]
      %v582 = vld [vmem:[#allocation2 + $0x109] sm:$0xff]
      %v583 = vld [vmem:[#allocation2 + $0x111] sm:$0xff]
      %v584 = vld [vmem:[#allocation2 + $0x121] sm:$0xff]
      %v585 = vld [vmem:[#allocation2 + $0x129] sm:$0xff]
      %v586 = vld [vmem:[#allocation2 + $0x139] sm:$0xff]
      %v587 = vld [vmem:[#allocation2 + $0x141] sm:$0xff]
      %v588 = vld [vmem:[#allocation2 + $0x151] sm:$0xff]
      %v589 = vld [vmem:[#allocation2 + $0x159] sm:$0xff]
      %v590 = vld [vmem:[#allocation2 + $0x169] sm:$0xff]
      %v591 = vld [vmem:[#allocation2 + $0x171] sm:$0xff]
      %v592 = vld [vmem:[%s2 + $0x1] sm:$0x1]
      %v593 = vperm.slane %v592, 0
      %v594 = vmul.f32 %v560, %v593
      %v595 = vmul.f32 %v561, %v593
      %v596 = vmul.f32 %v562, %v593
      %v597 = vmul.f32 %v563, %v593
      %v598 = vmul.f32 %v564, %v593
      %v599 = vmul.f32 %v565, %v593
      %v600 = vmul.f32 %v566, %v593
      %v601 = vmul.f32 %v567, %v593
      %v602 = vmul.f32 %v568, %v593
      %v603 = vmul.f32 %v569, %v593
      %v604 = vmul.f32 %v570, %v593
      %v605 = vmul.f32 %v571, %v593
      %v606 = vmul.f32 %v572, %v593
      %v607 = vmul.f32 %v573, %v593
      %v608 = vmul.f32 %v574, %v593
      %v609 = vmul.f32 %v575, %v593
      %v610 = vmul.f32 %v576, %v593
      %v611 = vmul.f32 %v577, %v593
      %v612 = vmul.f32 %v578, %v593
      %v613 = vmul.f32 %v579, %v593
      %v614 = vmul.f32 %v580, %v593
      %v615 = vmul.f32 %v581, %v593
      %v616 = vmul.f32 %v582, %v593
      %v617 = vmul.f32 %v583, %v593
      %v618 = vmul.f32 %v584, %v593
      %v619 = vmul.f32 %v585, %v593
      %v620 = vmul.f32 %v586, %v593
      %v621 = vmul.f32 %v587, %v593
      %v622 = vmul.f32 %v588, %v593
      %v623 = vmul.f32 %v589, %v593
      %v624 = vmul.f32 %v590, %v593
      %v625 = vmul.f32 %v591, %v593
      %v626 = vadd.f32 %v528, %v594
      %v627 = vadd.f32 %v529, %v595
      %v628 = vadd.f32 %v530, %v596
      %v629 = vadd.f32 %v531, %v597
      %v630 = vadd.f32 %v532, %v598
      %v631 = vadd.f32 %v533, %v599
      %v632 = vadd.f32 %v534, %v600
      %v633 = vadd.f32 %v535, %v601
      %v634 = vadd.f32 %v536, %v602
      %v635 = vadd.f32 %v537, %v603
      %v636 = vadd.f32 %v538, %v604
      %v637 = vadd.f32 %v539, %v605
      %v638 = vadd.f32 %v540, %v606
      %v639 = vadd.f32 %v541, %v607
      %v640 = vadd.f32 %v542, %v608
      %v641 = vadd.f32 %v543, %v609
      %v642 = vadd.f32 %v544, %v610
      %v643 = vadd.f32 %v545, %v611
      %v644 = vadd.f32 %v546, %v612
      %v645 = vadd.f32 %v547, %v613
      %v646 = vadd.f32 %v548, %v614
      %v647 = vadd.f32 %v549, %v615
      %v648 = vadd.f32 %v550, %v616
      %v649 = vadd.f32 %v551, %v617
      %v650 = vadd.f32 %v552, %v618
      %v651 = vadd.f32 %v553, %v619
      %v652 = vadd.f32 %v554, %v620
      %v653 = vadd.f32 %v555, %v621
      %v654 = vadd.f32 %v556, %v622
      %v655 = vadd.f32 %v557, %v623
      %v656 = vadd.f32 %v558, %v624
      %v657 = vadd.f32 %v559, %v625
      %v658 = vld [vmem:[#allocation2 + $0x2] sm:$0xff]
      %v659 = vld [vmem:[#allocation2 + $0xa] sm:$0xff]
      %v660 = vld [vmem:[#allocation2 + $0x1a] sm:$0xff]
      %v661 = vld [vmem:[#allocation2 + $0x22] sm:$0xff]
      %v662 = vld [vmem:[#allocation2 + $0x32] sm:$0xff]
      %v663 = vld [vmem:[#allocation2 + $0x3a] sm:$0xff]
      %v664 = vld [vmem:[#allocation2 + $0x4a] sm:$0xff]
      %v665 = vld [vmem:[#allocation2 + $0x52] sm:$0xff]
      %v666 = vld [vmem:[#allocation2 + $0x62] sm:$0xff]
      %v667 = vld [vmem:[#allocation2 + $0x6a] sm:$0xff]
      %v668 = vld [vmem:[#allocation2 + $0x7a] sm:$0xff]
      %v669 = vld [vmem:[#allocation2 + $0x82] sm:$0xff]
      %v670 = vld [vmem:[#allocation2 + $0x92] sm:$0xff]
      %v671 = vld [vmem:[#allocation2 + $0x9a] sm:$0xff]
      %v672 = vld [vmem:[#allocation2 + $0xaa] sm:$0xff]
      %v673 = vld [vmem:[#allocation2 + $0xb2] sm:$0xff]
      %v674 = vld [vmem:[#allocation2 + $0xc2] sm:$0xff]
      %v675 = vld [vmem:[#allocation2 + $0xca] sm:$0xff]
      %v676 = vld [vmem:[#allocation2 + $0xda] sm:$0xff]
      %v677 = vld [vmem:[#allocation2 + $0xe2] sm:$0xff]
      %v678 = vld [vmem:[#allocation2 + $0xf2] sm:$0xff]
      %v679 = vld [vmem:[#allocation2 + $0xfa] sm:$0xff]
      %v680 = vld [vmem:[#allocation2 + $0x10a] sm:$0xff]
      %v681 = vld [vmem:[#allocation2 + $0x112] sm:$0xff]
      %v682 = vld [vmem:[#allocation2 + $0x122] sm:$0xff]
      %v683 = vld [vmem:[#allocation2 + $0x12a] sm:$0xff]
      %v684 = vld [vmem:[#allocation2 + $0x13a] sm:$0xff]
      %v685 = vld [vmem:[#allocation2 + $0x142] sm:$0xff]
      %v686 = vld [vmem:[#allocation2 + $0x152] sm:$0xff]
      %v687 = vld [vmem:[#allocation2 + $0x15a] sm:$0xff]
      %v688 = vld [vmem:[#allocation2 + $0x16a] sm:$0xff]
      %v689 = vld [vmem:[#allocation2 + $0x172] sm:$0xff]
      %v690 = vld [vmem:[%s2 + $0x2] sm:$0x1]
      %v691 = vperm.slane %v690, 0
      %v692 = vmul.f32 %v658, %v691
      %v693 = vmul.f32 %v659, %v691
      %v694 = vmul.f32 %v660, %v691
      %v695 = vmul.f32 %v661, %v691
      %v696 = vmul.f32 %v662, %v691
      %v697 = vmul.f32 %v663, %v691
      %v698 = vmul.f32 %v664, %v691
      %v699 = vmul.f32 %v665, %v691
      %v700 = vmul.f32 %v666, %v691
      %v701 = vmul.f32 %v667, %v691
      %v702 = vmul.f32 %v668, %v691
      %v703 = vmul.f32 %v669, %v691
      %v704 = vmul.f32 %v670, %v691
      %v705 = vmul.f32 %v671, %v691
      %v706 = vmul.f32 %v672, %v691
      %v707 = vmul.f32 %v673, %v691
      %v708 = vmul.f32 %v674, %v691
      %v709 = vmul.f32 %v675, %v691
      %v710 = vmul.f32 %v676, %v691
      %v711 = vmul.f32 %v677, %v691
      %v712 = vmul.f32 %v678, %v691
      %v713 = vmul.f32 %v679, %v691
      %v714 = vmul.f32 %v680, %v691
      %v715 = vmul.f32 %v681, %v691
      %v716 = vmul.f32 %v682, %v691
      %v717 = vmul.f32 %v683, %v691
      %v718 = vmul.f32 %v684, %v691
      %v719 = vmul.f32 %v685, %v691
      %v720 = vmul.f32 %v686, %v691
      %v721 = vmul.f32 %v687, %v691
      %v722 = vmul.f32 %v688, %v691
      %v723 = vmul.f32 %v689, %v691
      %v724 = vadd.f32 %v626, %v692
      %v725 = vadd.f32 %v627, %v693
      %v726 = vadd.f32 %v628, %v694
      %v727 = vadd.f32 %v629, %v695
      %v728 = vadd.f32 %v630, %v696
      %v729 = vadd.f32 %v631, %v697
      %v730 = vadd.f32 %v632, %v698
      %v731 = vadd.f32 %v633, %v699
      %v732 = vadd.f32 %v634, %v700
      %v733 = vadd.f32 %v635, %v701
      %v734 = vadd.f32 %v636, %v702
      %v735 = vadd.f32 %v637, %v703
      %v736 = vadd.f32 %v638, %v704
      %v737 = vadd.f32 %v639, %v705
      %v738 = vadd.f32 %v640, %v706
      %v739 = vadd.f32 %v641, %v707
      %v740 = vadd.f32 %v642, %v708
      %v741 = vadd.f32 %v643, %v709
      %v742 = vadd.f32 %v644, %v710
      %v743 = vadd.f32 %v645, %v711
      %v744 = vadd.f32 %v646, %v712
      %v745 = vadd.f32 %v647, %v713
      %v746 = vadd.f32 %v648, %v714
      %v747 = vadd.f32 %v649, %v715
      %v748 = vadd.f32 %v650, %v716
      %v749 = vadd.f32 %v651, %v717
      %v750 = vadd.f32 %v652, %v718
      %v751 = vadd.f32 %v653, %v719
      %v752 = vadd.f32 %v654, %v720
      %v753 = vadd.f32 %v655, %v721
      %v754 = vadd.f32 %v656, %v722
      %v755 = vadd.f32 %v657, %v723
      %v756 = vld [vmem:[%s429] sm:$0xff]
      %v757 = vld [vmem:[%s429 + $0x8] sm:$0xff]
      %v758 = vld [vmem:[%s429 + $0x18] sm:$0xff]
      %v759 = vld [vmem:[%s429 + $0x20] sm:$0xff]
      %v760 = vld [vmem:[%s429 + $0x30] sm:$0xff]
      %v761 = vld [vmem:[%s429 + $0x38] sm:$0xff]
      %v762 = vld [vmem:[%s429 + $0x48] sm:$0xff]
      %v763 = vld [vmem:[%s429 + $0x50] sm:$0xff]
      %v764 = vld [vmem:[%s429 + $0x60] sm:$0xff]
      %v765 = vld [vmem:[%s429 + $0x68] sm:$0xff]
      %v766 = vld [vmem:[%s429 + $0x78] sm:$0xff]
      %v767 = vld [vmem:[%s429 + $0x80] sm:$0xff]
      %v768 = vld [vmem:[%s429 + $0x90] sm:$0xff]
      %v769 = vld [vmem:[%s429 + $0x98] sm:$0xff]
      %v770 = vld [vmem:[%s429 + $0xa8] sm:$0xff]
      %v771 = vld [vmem:[%s429 + $0xb0] sm:$0xff]
      %v772 = vld [vmem:[%s429 + $0xc0] sm:$0xff]
      %v773 = vld [vmem:[%s429 + $0xc8] sm:$0xff]
      %v774 = vld [vmem:[%s429 + $0xd8] sm:$0xff]
      %v775 = vld [vmem:[%s429 + $0xe0] sm:$0xff]
      %v776 = vld [vmem:[%s429 + $0xf0] sm:$0xff]
      %v777 = vld [vmem:[%s429 + $0xf8] sm:$0xff]
      %v778 = vld [vmem:[%s429 + $0x108] sm:$0xff]
      %v779 = vld [vmem:[%s429 + $0x110] sm:$0xff]
      %v780 = vld [vmem:[%s429 + $0x120] sm:$0xff]
      %v781 = vld [vmem:[%s429 + $0x128] sm:$0xff]
      %v782 = vld [vmem:[%s429 + $0x138] sm:$0xff]
      %v783 = vld [vmem:[%s429 + $0x140] sm:$0xff]
      %v784 = vld [vmem:[%s429 + $0x150] sm:$0xff]
      %v785 = vld [vmem:[%s429 + $0x158] sm:$0xff]
      %v786 = vld [vmem:[%s429 + $0x168] sm:$0xff]
      %v787 = vld [vmem:[%s429 + $0x170] sm:$0xff]
      %s788 = scalar_lea.vmem %s2, 4
      %v789 = vld [vmem:[%s788] sm:$0x1]
      %v790 = vperm.slane %v789, 0
      %v791 = vmul.f32 %v756, %v790
      %v792 = vmul.f32 %v757, %v790
      %v793 = vmul.f32 %v758, %v790
      %v794 = vmul.f32 %v759, %v790
      %v795 = vmul.f32 %v760, %v790
      %v796 = vmul.f32 %v761, %v790
      %v797 = vmul.f32 %v762, %v790
      %v798 = vmul.f32 %v763, %v790
      %v799 = vmul.f32 %v764, %v790
      %v800 = vmul.f32 %v765, %v790
      %v801 = vmul.f32 %v766, %v790
      %v802 = vmul.f32 %v767, %v790
      %v803 = vmul.f32 %v768, %v790
      %v804 = vmul.f32 %v769, %v790
      %v805 = vmul.f32 %v770, %v790
      %v806 = vmul.f32 %v771, %v790
      %v807 = vmul.f32 %v772, %v790
      %v808 = vmul.f32 %v773, %v790
      %v809 = vmul.f32 %v774, %v790
      %v810 = vmul.f32 %v775, %v790
      %v811 = vmul.f32 %v776, %v790
      %v812 = vmul.f32 %v777, %v790
      %v813 = vmul.f32 %v778, %v790
      %v814 = vmul.f32 %v779, %v790
      %v815 = vmul.f32 %v780, %v790
      %v816 = vmul.f32 %v781, %v790
      %v817 = vmul.f32 %v782, %v790
      %v818 = vmul.f32 %v783, %v790
      %v819 = vmul.f32 %v784, %v790
      %v820 = vmul.f32 %v785, %v790
      %v821 = vmul.f32 %v786, %v790
      %v822 = vmul.f32 %v787, %v790
      %v823 = vadd.f32 %v724, %v791
      %v824 = vadd.f32 %v725, %v792
      %v825 = vadd.f32 %v726, %v793
      %v826 = vadd.f32 %v727, %v794
      %v827 = vadd.f32 %v728, %v795
      %v828 = vadd.f32 %v729, %v796
      %v829 = vadd.f32 %v730, %v797
      %v830 = vadd.f32 %v731, %v798
      %v831 = vadd.f32 %v732, %v799
      %v832 = vadd.f32 %v733, %v800
      %v833 = vadd.f32 %v734, %v801
      %v834 = vadd.f32 %v735, %v802
      %v835 = vadd.f32 %v736, %v803
      %v836 = vadd.f32 %v737, %v804
      %v837 = vadd.f32 %v738, %v805
      %v838 = vadd.f32 %v739, %v806
      %v839 = vadd.f32 %v740, %v807
      %v840 = vadd.f32 %v741, %v808
      %v841 = vadd.f32 %v742, %v809
      %v842 = vadd.f32 %v743, %v810
      %v843 = vadd.f32 %v744, %v811
      %v844 = vadd.f32 %v745, %v812
      %v845 = vadd.f32 %v746, %v813
      %v846 = vadd.f32 %v747, %v814
      %v847 = vadd.f32 %v748, %v815
      %v848 = vadd.f32 %v749, %v816
      %v849 = vadd.f32 %v750, %v817
      %v850 = vadd.f32 %v751, %v818
      %v851 = vadd.f32 %v752, %v819
      %v852 = vadd.f32 %v753, %v820
      %v853 = vadd.f32 %v754, %v821
      %v854 = vadd.f32 %v755, %v822
      %v855 = vld [vmem:[%s429 + $0x1] sm:$0xff]
      %v856 = vld [vmem:[%s429 + $0x9] sm:$0xff]
      %v857 = vld [vmem:[%s429 + $0x19] sm:$0xff]
      %v858 = vld [vmem:[%s429 + $0x21] sm:$0xff]
      %v859 = vld [vmem:[%s429 + $0x31] sm:$0xff]
      %v860 = vld [vmem:[%s429 + $0x39] sm:$0xff]
      %v861 = vld [vmem:[%s429 + $0x49] sm:$0xff]
      %v862 = vld [vmem:[%s429 + $0x51] sm:$0xff]
      %v863 = vld [vmem:[%s429 + $0x61] sm:$0xff]
      %v864 = vld [vmem:[%s429 + $0x69] sm:$0xff]
      %v865 = vld [vmem:[%s429 + $0x79] sm:$0xff]
      %v866 = vld [vmem:[%s429 + $0x81] sm:$0xff]
      %v867 = vld [vmem:[%s429 + $0x91] sm:$0xff]
      %v868 = vld [vmem:[%s429 + $0x99] sm:$0xff]
      %v869 = vld [vmem:[%s429 + $0xa9] sm:$0xff]
      %v870 = vld [vmem:[%s429 + $0xb1] sm:$0xff]
      %v871 = vld [vmem:[%s429 + $0xc1] sm:$0xff]
      %v872 = vld [vmem:[%s429 + $0xc9] sm:$0xff]
      %v873 = vld [vmem:[%s429 + $0xd9] sm:$0xff]
      %v874 = vld [vmem:[%s429 + $0xe1] sm:$0xff]
      %v875 = vld [vmem:[%s429 + $0xf1] sm:$0xff]
      %v876 = vld [vmem:[%s429 + $0xf9] sm:$0xff]
      %v877 = vld [vmem:[%s429 + $0x109] sm:$0xff]
      %v878 = vld [vmem:[%s429 + $0x111] sm:$0xff]
      %v879 = vld [vmem:[%s429 + $0x121] sm:$0xff]
      %v880 = vld [vmem:[%s429 + $0x129] sm:$0xff]
      %v881 = vld [vmem:[%s429 + $0x139] sm:$0xff]
      %v882 = vld [vmem:[%s429 + $0x141] sm:$0xff]
      %v883 = vld [vmem:[%s429 + $0x151] sm:$0xff]
      %v884 = vld [vmem:[%s429 + $0x159] sm:$0xff]
      %v885 = vld [vmem:[%s429 + $0x169] sm:$0xff]
      %v886 = vld [vmem:[%s429 + $0x171] sm:$0xff]
      %v887 = vld [vmem:[%s788 + $0x1] sm:$0x1]
      %v888 = vperm.slane %v887, 0
      %v889 = vmul.f32 %v855, %v888
      %v890 = vmul.f32 %v856, %v888
      %v891 = vmul.f32 %v857, %v888
      %v892 = vmul.f32 %v858, %v888
      %v893 = vmul.f32 %v859, %v888
      %v894 = vmul.f32 %v860, %v888
      %v895 = vmul.f32 %v861, %v888
      %v896 = vmul.f32 %v862, %v888
      %v897 = vmul.f32 %v863, %v888
      %v898 = vmul.f32 %v864, %v888
      %v899 = vmul.f32 %v865, %v888
      %v900 = vmul.f32 %v866, %v888
      %v901 = vmul.f32 %v867, %v888
      %v902 = vmul.f32 %v868, %v888
      %v903 = vmul.f32 %v869, %v888
      %v904 = vmul.f32 %v870, %v888
      %v905 = vmul.f32 %v871, %v888
      %v906 = vmul.f32 %v872, %v888
      %v907 = vmul.f32 %v873, %v888
      %v908 = vmul.f32 %v874, %v888
      %v909 = vmul.f32 %v875, %v888
      %v910 = vmul.f32 %v876, %v888
      %v911 = vmul.f32 %v877, %v888
      %v912 = vmul.f32 %v878, %v888
      %v913 = vmul.f32 %v879, %v888
      %v914 = vmul.f32 %v880, %v888
      %v915 = vmul.f32 %v881, %v888
      %v916 = vmul.f32 %v882, %v888
      %v917 = vmul.f32 %v883, %v888
      %v918 = vmul.f32 %v884, %v888
      %v919 = vmul.f32 %v885, %v888
      %v920 = vmul.f32 %v886, %v888
      %v921 = vadd.f32 %v823, %v889
      %v922 = vadd.f32 %v824, %v890
      %v923 = vadd.f32 %v825, %v891
      %v924 = vadd.f32 %v826, %v892
      %v925 = vadd.f32 %v827, %v893
      %v926 = vadd.f32 %v828, %v894
      %v927 = vadd.f32 %v829, %v895
      %v928 = vadd.f32 %v830, %v896
      %v929 = vadd.f32 %v831, %v897
      %v930 = vadd.f32 %v832, %v898
      %v931 = vadd.f32 %v833, %v899
      %v932 = vadd.f32 %v834, %v900
      %v933 = vadd.f32 %v835, %v901
      %v934 = vadd.f32 %v836, %v902
      %v935 = vadd.f32 %v837, %v903
      %v936 = vadd.f32 %v838, %v904
      %v937 = vadd.f32 %v839, %v905
      %v938 = vadd.f32 %v840, %v906
      %v939 = vadd.f32 %v841, %v907
      %v940 = vadd.f32 %v842, %v908
      %v941 = vadd.f32 %v843, %v909
      %v942 = vadd.f32 %v844, %v910
      %v943 = vadd.f32 %v845, %v911
      %v944 = vadd.f32 %v846, %v912
      %v945 = vadd.f32 %v847, %v913
      %v946 = vadd.f32 %v848, %v914
      %v947 = vadd.f32 %v849, %v915
      %v948 = vadd.f32 %v850, %v916
      %v949 = vadd.f32 %v851, %v917
      %v950 = vadd.f32 %v852, %v918
      %v951 = vadd.f32 %v853, %v919
      %v952 = vadd.f32 %v854, %v920
      %v953 = vld [vmem:[%s429 + $0x2] sm:$0xff]
      %v954 = vld [vmem:[%s429 + $0xa] sm:$0xff]
      %v955 = vld [vmem:[%s429 + $0x1a] sm:$0xff]
      %v956 = vld [vmem:[%s429 + $0x22] sm:$0xff]
      %v957 = vld [vmem:[%s429 + $0x32] sm:$0xff]
      %v958 = vld [vmem:[%s429 + $0x3a] sm:$0xff]
      %v959 = vld [vmem:[%s429 + $0x4a] sm:$0xff]
      %v960 = vld [vmem:[%s429 + $0x52] sm:$0xff]
      %v961 = vld [vmem:[%s429 + $0x62] sm:$0xff]
      %v962 = vld [vmem:[%s429 + $0x6a] sm:$0xff]
      %v963 = vld [vmem:[%s429 + $0x7a] sm:$0xff]
      %v964 = vld [vmem:[%s429 + $0x82] sm:$0xff]
      %v965 = vld [vmem:[%s429 + $0x92] sm:$0xff]
      %v966 = vld [vmem:[%s429 + $0x9a] sm:$0xff]
      %v967 = vld [vmem:[%s429 + $0xaa] sm:$0xff]
      %v968 = vld [vmem:[%s429 + $0xb2] sm:$0xff]
      %v969 = vld [vmem:[%s429 + $0xc2] sm:$0xff]
      %v970 = vld [vmem:[%s429 + $0xca] sm:$0xff]
      %v971 = vld [vmem:[%s429 + $0xda] sm:$0xff]
      %v972 = vld [vmem:[%s429 + $0xe2] sm:$0xff]
      %v973 = vld [vmem:[%s429 + $0xf2] sm:$0xff]
      %v974 = vld [vmem:[%s429 + $0xfa] sm:$0xff]
      %v975 = vld [vmem:[%s429 + $0x10a] sm:$0xff]
      %v976 = vld [vmem:[%s429 + $0x112] sm:$0xff]
      %v977 = vld [vmem:[%s429 + $0x122] sm:$0xff]
      %v978 = vld [vmem:[%s429 + $0x12a] sm:$0xff]
      %v979 = vld [vmem:[%s429 + $0x13a] sm:$0xff]
      %v980 = vld [vmem:[%s429 + $0x142] sm:$0xff]
      %v981 = vld [vmem:[%s429 + $0x152] sm:$0xff]
      %v982 = vld [vmem:[%s429 + $0x15a] sm:$0xff]
      %v983 = vld [vmem:[%s429 + $0x16a] sm:$0xff]
      %v984 = vld [vmem:[%s429 + $0x172] sm:$0xff]
      %v985 = vld [vmem:[%s788 + $0x2] sm:$0x1]
      %v986 = vperm.slane %v985, 0
      %v987 = vmul.f32 %v953, %v986
      %v988 = vmul.f32 %v954, %v986
      %v989 = vmul.f32 %v955, %v986
      %v990 = vmul.f32 %v956, %v986
      %v991 = vmul.f32 %v957, %v986
      %v992 = vmul.f32 %v958, %v986
      %v993 = vmul.f32 %v959, %v986
      %v994 = vmul.f32 %v960, %v986
      %v995 = vmul.f32 %v961, %v986
      %v996 = vmul.f32 %v962, %v986
      %v997 = vmul.f32 %v963, %v986
      %v998 = vmul.f32 %v964, %v986
      %v999 = vmul.f32 %v965, %v986
      %v1000 = vmul.f32 %v966, %v986
      %v1001 = vmul.f32 %v967, %v986
      %v1002 = vmul.f32 %v968, %v986
      %v1003 = vmul.f32 %v969, %v986
      %v1004 = vmul.f32 %v970, %v986
      %v1005 = vmul.f32 %v971, %v986
      %v1006 = vmul.f32 %v972, %v986
      %v1007 = vmul.f32 %v973, %v986
      %v1008 = vmul.f32 %v974, %v986
      %v1009 = vmul.f32 %v975, %v986
      %v1010 = vmul.f32 %v976, %v986
      %v1011 = vmul.f32 %v977, %v986
      %v1012 = vmul.f32 %v978, %v986
      %v1013 = vmul.f32 %v979, %v986
      %v1014 = vmul.f32 %v980, %v986
      %v1015 = vmul.f32 %v981, %v986
      %v1016 = vmul.f32 %v982, %v986
      %v1017 = vmul.f32 %v983, %v986
      %v1018 = vmul.f32 %v984, %v986
      %v1019 = vadd.f32 %v921, %v987
      %v1020 = vadd.f32 %v922, %v988
      %v1021 = vadd.f32 %v923, %v989
      %v1022 = vadd.f32 %v924, %v990
      %v1023 = vadd.f32 %v925, %v991
      %v1024 = vadd.f32 %v926, %v992
      %v1025 = vadd.f32 %v927, %v993
      %v1026 = vadd.f32 %v928, %v994
      %v1027 = vadd.f32 %v929, %v995
      %v1028 = vadd.f32 %v930, %v996
      %v1029 = vadd.f32 %v931, %v997
      %v1030 = vadd.f32 %v932, %v998
      %v1031 = vadd.f32 %v933, %v999
      %v1032 = vadd.f32 %v934, %v1000
      %v1033 = vadd.f32 %v935, %v1001
      %v1034 = vadd.f32 %v936, %v1002
      %v1035 = vadd.f32 %v937, %v1003
      %v1036 = vadd.f32 %v938, %v1004
      %v1037 = vadd.f32 %v939, %v1005
      %v1038 = vadd.f32 %v940, %v1006
      %v1039 = vadd.f32 %v941, %v1007
      %v1040 = vadd.f32 %v942, %v1008
      %v1041 = vadd.f32 %v943, %v1009
      %v1042 = vadd.f32 %v944, %v1010
      %v1043 = vadd.f32 %v945, %v1011
      %v1044 = vadd.f32 %v946, %v1012
      %v1045 = vadd.f32 %v947, %v1013
      %v1046 = vadd.f32 %v948, %v1014
      %v1047 = vadd.f32 %v949, %v1015
      %v1048 = vadd.f32 %v950, %v1016
      %v1049 = vadd.f32 %v951, %v1017
      %v1050 = vadd.f32 %v952, %v1018
      %s1051 = scalar_lea.vmem [#allocation2], 48
      %v1052 = vld [vmem:[%s1051] sm:$0xff]
      %v1053 = vld [vmem:[%s1051 + $0x8] sm:$0xff]
      %v1054 = vld [vmem:[%s1051 + $0x18] sm:$0xff]
      %v1055 = vld [vmem:[%s1051 + $0x20] sm:$0xff]
      %v1056 = vld [vmem:[%s1051 + $0x30] sm:$0xff]
      %v1057 = vld [vmem:[%s1051 + $0x38] sm:$0xff]
      %v1058 = vld [vmem:[%s1051 + $0x48] sm:$0xff]
      %v1059 = vld [vmem:[%s1051 + $0x50] sm:$0xff]
      %v1060 = vld [vmem:[%s1051 + $0x60] sm:$0xff]
      %v1061 = vld [vmem:[%s1051 + $0x68] sm:$0xff]
      %v1062 = vld [vmem:[%s1051 + $0x78] sm:$0xff]
      %v1063 = vld [vmem:[%s1051 + $0x80] sm:$0xff]
      %v1064 = vld [vmem:[%s1051 + $0x90] sm:$0xff]
      %v1065 = vld [vmem:[%s1051 + $0x98] sm:$0xff]
      %v1066 = vld [vmem:[%s1051 + $0xa8] sm:$0xff]
      %v1067 = vld [vmem:[%s1051 + $0xb0] sm:$0xff]
      %v1068 = vld [vmem:[%s1051 + $0xc0] sm:$0xff]
      %v1069 = vld [vmem:[%s1051 + $0xc8] sm:$0xff]
      %v1070 = vld [vmem:[%s1051 + $0xd8] sm:$0xff]
      %v1071 = vld [vmem:[%s1051 + $0xe0] sm:$0xff]
      %v1072 = vld [vmem:[%s1051 + $0xf0] sm:$0xff]
      %v1073 = vld [vmem:[%s1051 + $0xf8] sm:$0xff]
      %v1074 = vld [vmem:[%s1051 + $0x108] sm:$0xff]
      %v1075 = vld [vmem:[%s1051 + $0x110] sm:$0xff]
      %v1076 = vld [vmem:[%s1051 + $0x120] sm:$0xff]
      %v1077 = vld [vmem:[%s1051 + $0x128] sm:$0xff]
      %v1078 = vld [vmem:[%s1051 + $0x138] sm:$0xff]
      %v1079 = vld [vmem:[%s1051 + $0x140] sm:$0xff]
      %v1080 = vld [vmem:[%s1051 + $0x150] sm:$0xff]
      %v1081 = vld [vmem:[%s1051 + $0x158] sm:$0xff]
      %v1082 = vld [vmem:[%s1051 + $0x168] sm:$0xff]
      %v1083 = vld [vmem:[%s1051 + $0x170] sm:$0xff]
      %s1084 = scalar_lea.vmem %s2, 8
      %v1085 = vld [vmem:[%s1084] sm:$0x1]
      %v1086 = vperm.slane %v1085, 0
      %v1087 = vmul.f32 %v1052, %v1086
      %v1088 = vmul.f32 %v1053, %v1086
      %v1089 = vmul.f32 %v1054, %v1086
      %v1090 = vmul.f32 %v1055, %v1086
      %v1091 = vmul.f32 %v1056, %v1086
      %v1092 = vmul.f32 %v1057, %v1086
      %v1093 = vmul.f32 %v1058, %v1086
      %v1094 = vmul.f32 %v1059, %v1086
      %v1095 = vmul.f32 %v1060, %v1086
      %v1096 = vmul.f32 %v1061, %v1086
      %v1097 = vmul.f32 %v1062, %v1086
      %v1098 = vmul.f32 %v1063, %v1086
      %v1099 = vmul.f32 %v1064, %v1086
      %v1100 = vmul.f32 %v1065, %v1086
      %v1101 = vmul.f32 %v1066, %v1086
      %v1102 = vmul.f32 %v1067, %v1086
      %v1103 = vmul.f32 %v1068, %v1086
      %v1104 = vmul.f32 %v1069, %v1086
      %v1105 = vmul.f32 %v1070, %v1086
      %v1106 = vmul.f32 %v1071, %v1086
      %v1107 = vmul.f32 %v1072, %v1086
      %v1108 = vmul.f32 %v1073, %v1086
      %v1109 = vmul.f32 %v1074, %v1086
      %v1110 = vmul.f32 %v1075, %v1086
      %v1111 = vmul.f32 %v1076, %v1086
      %v1112 = vmul.f32 %v1077, %v1086
      %v1113 = vmul.f32 %v1078, %v1086
      %v1114 = vmul.f32 %v1079, %v1086
      %v1115 = vmul.f32 %v1080, %v1086
      %v1116 = vmul.f32 %v1081, %v1086
      %v1117 = vmul.f32 %v1082, %v1086
      %v1118 = vmul.f32 %v1083, %v1086
      %v1119 = vadd.f32 %v1019, %v1087
      %v1120 = vadd.f32 %v1020, %v1088
      %v1121 = vadd.f32 %v1021, %v1089
      %v1122 = vadd.f32 %v1022, %v1090
      %v1123 = vadd.f32 %v1023, %v1091
      %v1124 = vadd.f32 %v1024, %v1092
      %v1125 = vadd.f32 %v1025, %v1093
      %v1126 = vadd.f32 %v1026, %v1094
      %v1127 = vadd.f32 %v1027, %v1095
      %v1128 = vadd.f32 %v1028, %v1096
      %v1129 = vadd.f32 %v1029, %v1097
      %v1130 = vadd.f32 %v1030, %v1098
      %v1131 = vadd.f32 %v1031, %v1099
      %v1132 = vadd.f32 %v1032, %v1100
      %v1133 = vadd.f32 %v1033, %v1101
      %v1134 = vadd.f32 %v1034, %v1102
      %v1135 = vadd.f32 %v1035, %v1103
      %v1136 = vadd.f32 %v1036, %v1104
      %v1137 = vadd.f32 %v1037, %v1105
      %v1138 = vadd.f32 %v1038, %v1106
      %v1139 = vadd.f32 %v1039, %v1107
      %v1140 = vadd.f32 %v1040, %v1108
      %v1141 = vadd.f32 %v1041, %v1109
      %v1142 = vadd.f32 %v1042, %v1110
      %v1143 = vadd.f32 %v1043, %v1111
      %v1144 = vadd.f32 %v1044, %v1112
      %v1145 = vadd.f32 %v1045, %v1113
      %v1146 = vadd.f32 %v1046, %v1114
      %v1147 = vadd.f32 %v1047, %v1115
      %v1148 = vadd.f32 %v1048, %v1116
      %v1149 = vadd.f32 %v1049, %v1117
      %v1150 = vadd.f32 %v1050, %v1118
      %v1151 = vld [vmem:[%s1051 + $0x1] sm:$0xff]
      %v1152 = vld [vmem:[%s1051 + $0x9] sm:$0xff]
      %v1153 = vld [vmem:[%s1051 + $0x19] sm:$0xff]
      %v1154 = vld [vmem:[%s1051 + $0x21] sm:$0xff]
      %v1155 = vld [vmem:[%s1051 + $0x31] sm:$0xff]
      %v1156 = vld [vmem:[%s1051 + $0x39] sm:$0xff]
      %v1157 = vld [vmem:[%s1051 + $0x49] sm:$0xff]
      %v1158 = vld [vmem:[%s1051 + $0x51] sm:$0xff]
      %v1159 = vld [vmem:[%s1051 + $0x61] sm:$0xff]
      %v1160 = vld [vmem:[%s1051 + $0x69] sm:$0xff]
      %v1161 = vld [vmem:[%s1051 + $0x79] sm:$0xff]
      %v1162 = vld [vmem:[%s1051 + $0x81] sm:$0xff]
      %v1163 = vld [vmem:[%s1051 + $0x91] sm:$0xff]
      %v1164 = vld [vmem:[%s1051 + $0x99] sm:$0xff]
      %v1165 = vld [vmem:[%s1051 + $0xa9] sm:$0xff]
      %v1166 = vld [vmem:[%s1051 + $0xb1] sm:$0xff]
      %v1167 = vld [vmem:[%s1051 + $0xc1] sm:$0xff]
      %v1168 = vld [vmem:[%s1051 + $0xc9] sm:$0xff]
      %v1169 = vld [vmem:[%s1051 + $0xd9] sm:$0xff]
      %v1170 = vld [vmem:[%s1051 + $0xe1] sm:$0xff]
      %v1171 = vld [vmem:[%s1051 + $0xf1] sm:$0xff]
      %v1172 = vld [vmem:[%s1051 + $0xf9] sm:$0xff]
      %v1173 = vld [vmem:[%s1051 + $0x109] sm:$0xff]
      %v1174 = vld [vmem:[%s1051 + $0x111] sm:$0xff]
      %v1175 = vld [vmem:[%s1051 + $0x121] sm:$0xff]
      %v1176 = vld [vmem:[%s1051 + $0x129] sm:$0xff]
      %v1177 = vld [vmem:[%s1051 + $0x139] sm:$0xff]
      %v1178 = vld [vmem:[%s1051 + $0x141] sm:$0xff]
      %v1179 = vld [vmem:[%s1051 + $0x151] sm:$0xff]
      %v1180 = vld [vmem:[%s1051 + $0x159] sm:$0xff]
      %v1181 = vld [vmem:[%s1051 + $0x169] sm:$0xff]
      %v1182 = vld [vmem:[%s1051 + $0x171] sm:$0xff]
      %v1183 = vld [vmem:[%s1084 + $0x1] sm:$0x1]
      %v1184 = vperm.slane %v1183, 0
      %v1185 = vmul.f32 %v1151, %v1184
      %v1186 = vmul.f32 %v1152, %v1184
      %v1187 = vmul.f32 %v1153, %v1184
      %v1188 = vmul.f32 %v1154, %v1184
      %v1189 = vmul.f32 %v1155, %v1184
      %v1190 = vmul.f32 %v1156, %v1184
      %v1191 = vmul.f32 %v1157, %v1184
      %v1192 = vmul.f32 %v1158, %v1184
      %v1193 = vmul.f32 %v1159, %v1184
      %v1194 = vmul.f32 %v1160, %v1184
      %v1195 = vmul.f32 %v1161, %v1184
      %v1196 = vmul.f32 %v1162, %v1184
      %v1197 = vmul.f32 %v1163, %v1184
      %v1198 = vmul.f32 %v1164, %v1184
      %v1199 = vmul.f32 %v1165, %v1184
      %v1200 = vmul.f32 %v1166, %v1184
      %v1201 = vmul.f32 %v1167, %v1184
      %v1202 = vmul.f32 %v1168, %v1184
      %v1203 = vmul.f32 %v1169, %v1184
      %v1204 = vmul.f32 %v1170, %v1184
      %v1205 = vmul.f32 %v1171, %v1184
      %v1206 = vmul.f32 %v1172, %v1184
      %v1207 = vmul.f32 %v1173, %v1184
      %v1208 = vmul.f32 %v1174, %v1184
      %v1209 = vmul.f32 %v1175, %v1184
      %v1210 = vmul.f32 %v1176, %v1184
      %v1211 = vmul.f32 %v1177, %v1184
      %v1212 = vmul.f32 %v1178, %v1184
      %v1213 = vmul.f32 %v1179, %v1184
      %v1214 = vmul.f32 %v1180, %v1184
      %v1215 = vmul.f32 %v1181, %v1184
      %v1216 = vmul.f32 %v1182, %v1184
      %v1217 = vadd.f32 %v1119, %v1185
      %v1218 = vadd.f32 %v1120, %v1186
      %v1219 = vadd.f32 %v1121, %v1187
      %v1220 = vadd.f32 %v1122, %v1188
      %v1221 = vadd.f32 %v1123, %v1189
      %v1222 = vadd.f32 %v1124, %v1190
      %v1223 = vadd.f32 %v1125, %v1191
      %v1224 = vadd.f32 %v1126, %v1192
      %v1225 = vadd.f32 %v1127, %v1193
      %v1226 = vadd.f32 %v1128, %v1194
      %v1227 = vadd.f32 %v1129, %v1195
      %v1228 = vadd.f32 %v1130, %v1196
      %v1229 = vadd.f32 %v1131, %v1197
      %v1230 = vadd.f32 %v1132, %v1198
      %v1231 = vadd.f32 %v1133, %v1199
      %v1232 = vadd.f32 %v1134, %v1200
      %v1233 = vadd.f32 %v1135, %v1201
      %v1234 = vadd.f32 %v1136, %v1202
      %v1235 = vadd.f32 %v1137, %v1203
      %v1236 = vadd.f32 %v1138, %v1204
      %v1237 = vadd.f32 %v1139, %v1205
      %v1238 = vadd.f32 %v1140, %v1206
      %v1239 = vadd.f32 %v1141, %v1207
      %v1240 = vadd.f32 %v1142, %v1208
      %v1241 = vadd.f32 %v1143, %v1209
      %v1242 = vadd.f32 %v1144, %v1210
      %v1243 = vadd.f32 %v1145, %v1211
      %v1244 = vadd.f32 %v1146, %v1212
      %v1245 = vadd.f32 %v1147, %v1213
      %v1246 = vadd.f32 %v1148, %v1214
      %v1247 = vadd.f32 %v1149, %v1215
      %v1248 = vadd.f32 %v1150, %v1216
      %v1249 = vld [vmem:[%s1051 + $0x2] sm:$0xff]
      %v1250 = vld [vmem:[%s1051 + $0xa] sm:$0xff]
      %v1251 = vld [vmem:[%s1051 + $0x1a] sm:$0xff]
      %v1252 = vld [vmem:[%s1051 + $0x22] sm:$0xff]
      %v1253 = vld [vmem:[%s1051 + $0x32] sm:$0xff]
      %v1254 = vld [vmem:[%s1051 + $0x3a] sm:$0xff]
      %v1255 = vld [vmem:[%s1051 + $0x4a] sm:$0xff]
      %v1256 = vld [vmem:[%s1051 + $0x52] sm:$0xff]
      %v1257 = vld [vmem:[%s1051 + $0x62] sm:$0xff]
      %v1258 = vld [vmem:[%s1051 + $0x6a] sm:$0xff]
      %v1259 = vld [vmem:[%s1051 + $0x7a] sm:$0xff]
      %v1260 = vld [vmem:[%s1051 + $0x82] sm:$0xff]
      %v1261 = vld [vmem:[%s1051 + $0x92] sm:$0xff]
      %v1262 = vld [vmem:[%s1051 + $0x9a] sm:$0xff]
      %v1263 = vld [vmem:[%s1051 + $0xaa] sm:$0xff]
      %v1264 = vld [vmem:[%s1051 + $0xb2] sm:$0xff]
      %v1265 = vld [vmem:[%s1051 + $0xc2] sm:$0xff]
      %v1266 = vld [vmem:[%s1051 + $0xca] sm:$0xff]
      %v1267 = vld [vmem:[%s1051 + $0xda] sm:$0xff]
      %v1268 = vld [vmem:[%s1051 + $0xe2] sm:$0xff]
      %v1269 = vld [vmem:[%s1051 + $0xf2] sm:$0xff]
      %v1270 = vld [vmem:[%s1051 + $0xfa] sm:$0xff]
      %v1271 = vld [vmem:[%s1051 + $0x10a] sm:$0xff]
      %v1272 = vld [vmem:[%s1051 + $0x112] sm:$0xff]
      %v1273 = vld [vmem:[%s1051 + $0x122] sm:$0xff]
      %v1274 = vld [vmem:[%s1051 + $0x12a] sm:$0xff]
      %v1275 = vld [vmem:[%s1051 + $0x13a] sm:$0xff]
      %v1276 = vld [vmem:[%s1051 + $0x142] sm:$0xff]
      %v1277 = vld [vmem:[%s1051 + $0x152] sm:$0xff]
      %v1278 = vld [vmem:[%s1051 + $0x15a] sm:$0xff]
      %v1279 = vld [vmem:[%s1051 + $0x16a] sm:$0xff]
      %v1280 = vld [vmem:[%s1051 + $0x172] sm:$0xff]
      %v1281 = vld [vmem:[%s1084 + $0x2] sm:$0x1]
      %v1282 = vperm.slane %v1281, 0
      %v1283 = vmul.f32 %v1249, %v1282
      %v1284 = vmul.f32 %v1250, %v1282
      %v1285 = vmul.f32 %v1251, %v1282
      %v1286 = vmul.f32 %v1252, %v1282
      %v1287 = vmul.f32 %v1253, %v1282
      %v1288 = vmul.f32 %v1254, %v1282
      %v1289 = vmul.f32 %v1255, %v1282
      %v1290 = vmul.f32 %v1256, %v1282
      %v1291 = vmul.f32 %v1257, %v1282
      %v1292 = vmul.f32 %v1258, %v1282
      %v1293 = vmul.f32 %v1259, %v1282
      %v1294 = vmul.f32 %v1260, %v1282
      %v1295 = vmul.f32 %v1261, %v1282
      %v1296 = vmul.f32 %v1262, %v1282
      %v1297 = vmul.f32 %v1263, %v1282
      %v1298 = vmul.f32 %v1264, %v1282
      %v1299 = vmul.f32 %v1265, %v1282
      %v1300 = vmul.f32 %v1266, %v1282
      %v1301 = vmul.f32 %v1267, %v1282
      %v1302 = vmul.f32 %v1268, %v1282
      %v1303 = vmul.f32 %v1269, %v1282
      %v1304 = vmul.f32 %v1270, %v1282
      %v1305 = vmul.f32 %v1271, %v1282
      %v1306 = vmul.f32 %v1272, %v1282
      %v1307 = vmul.f32 %v1273, %v1282
      %v1308 = vmul.f32 %v1274, %v1282
      %v1309 = vmul.f32 %v1275, %v1282
      %v1310 = vmul.f32 %v1276, %v1282
      %v1311 = vmul.f32 %v1277, %v1282
      %v1312 = vmul.f32 %v1278, %v1282
      %v1313 = vmul.f32 %v1279, %v1282
      %v1314 = vmul.f32 %v1280, %v1282
      %v1315 = vadd.f32 %v1217, %v1283
      %v1316 = vadd.f32 %v1218, %v1284
      %v1317 = vadd.f32 %v1219, %v1285
      %v1318 = vadd.f32 %v1220, %v1286
      %v1319 = vadd.f32 %v1221, %v1287
      %v1320 = vadd.f32 %v1222, %v1288
      %v1321 = vadd.f32 %v1223, %v1289
      %v1322 = vadd.f32 %v1224, %v1290
      %v1323 = vadd.f32 %v1225, %v1291
      %v1324 = vadd.f32 %v1226, %v1292
      %v1325 = vadd.f32 %v1227, %v1293
      %v1326 = vadd.f32 %v1228, %v1294
      %v1327 = vadd.f32 %v1229, %v1295
      %v1328 = vadd.f32 %v1230, %v1296
      %v1329 = vadd.f32 %v1231, %v1297
      %v1330 = vadd.f32 %v1232, %v1298
      %v1331 = vadd.f32 %v1233, %v1299
      %v1332 = vadd.f32 %v1234, %v1300
      %v1333 = vadd.f32 %v1235, %v1301
      %v1334 = vadd.f32 %v1236, %v1302
      %v1335 = vadd.f32 %v1237, %v1303
      %v1336 = vadd.f32 %v1238, %v1304
      %v1337 = vadd.f32 %v1239, %v1305
      %v1338 = vadd.f32 %v1240, %v1306
      %v1339 = vadd.f32 %v1241, %v1307
      %v1340 = vadd.f32 %v1242, %v1308
      %v1341 = vadd.f32 %v1243, %v1309
      %v1342 = vadd.f32 %v1244, %v1310
      %v1343 = vadd.f32 %v1245, %v1311
      %v1344 = vadd.f32 %v1246, %v1312
      %v1345 = vadd.f32 %v1247, %v1313
      %v1346 = vadd.f32 %v1248, %v1314
      %1347 = vst.msk [vmem:[%s204] sm:$0xff] %vm373, %v1315
      %1348 = vst.msk [vmem:[%s204 + $0x8] sm:$0xff] %vm373, %v1316
      %1349 = vst.msk [vmem:[%s204 + $0x10] sm:$0xff] %vm373, %v1317
      %1350 = vst.msk [vmem:[%s204 + $0x18] sm:$0xff] %vm373, %v1318
      %1351 = vst.msk [vmem:[%s204 + $0x20] sm:$0xff] %vm373, %v1319
      %1352 = vst.msk [vmem:[%s204 + $0x28] sm:$0xff] %vm373, %v1320
      %1353 = vst.msk [vmem:[%s204 + $0x30] sm:$0xff] %vm373, %v1321
      %1354 = vst.msk [vmem:[%s204 + $0x38] sm:$0xff] %vm373, %v1322
      %1355 = vst.msk [vmem:[%s204 + $0x40] sm:$0xff] %vm373, %v1323
      %1356 = vst.msk [vmem:[%s204 + $0x48] sm:$0xff] %vm373, %v1324
      %1357 = vst.msk [vmem:[%s204 + $0x50] sm:$0xff] %vm373, %v1325
      %1358 = vst.msk [vmem:[%s204 + $0x58] sm:$0xff] %vm373, %v1326
      %1359 = vst.msk [vmem:[%s204 + $0x60] sm:$0xff] %vm373, %v1327
      %1360 = vst.msk [vmem:[%s204 + $0x68] sm:$0xff] %vm373, %v1328
      %1361 = vst.msk [vmem:[%s204 + $0x70] sm:$0xff] %vm373, %v1329
      %1362 = vst.msk [vmem:[%s204 + $0x78] sm:$0xff] %vm373, %v1330
      %1363 = vst.msk [vmem:[%s204 + $0x80] sm:$0xff] %vm373, %v1331
      %1364 = vst.msk [vmem:[%s204 + $0x88] sm:$0xff] %vm373, %v1332
      %1365 = vst.msk [vmem:[%s204 + $0x90] sm:$0xff] %vm373, %v1333
      %1366 = vst.msk [vmem:[%s204 + $0x98] sm:$0xff] %vm373, %v1334
      %1367 = vst.msk [vmem:[%s204 + $0xa0] sm:$0xff] %vm373, %v1335
      %1368 = vst.msk [vmem:[%s204 + $0xa8] sm:$0xff] %vm373, %v1336
      %1369 = vst.msk [vmem:[%s204 + $0xb0] sm:$0xff] %vm373, %v1337
      %1370 = vst.msk [vmem:[%s204 + $0xb8] sm:$0xff] %vm373, %v1338
      %1371 = vst.msk [vmem:[%s204 + $0xc0] sm:$0xff] %vm373, %v1339
      %1372 = vst.msk [vmem:[%s204 + $0xc8] sm:$0xff] %vm373, %v1340
      %1373 = vst.msk [vmem:[%s204 + $0xd0] sm:$0xff] %vm373, %v1341
      %1374 = vst.msk [vmem:[%s204 + $0xd8] sm:$0xff] %vm373, %v1342
      %1375 = vst.msk [vmem:[%s204 + $0xe0] sm:$0xff] %vm373, %v1343
      %1376 = vst.msk [vmem:[%s204 + $0xe8] sm:$0xff] %vm373, %v1344
      %1377 = vst.msk [vmem:[%s204 + $0xf0] sm:$0xff] %vm373, %v1345
      %1378 = vst.msk [vmem:[%s204 + $0xf8] sm:$0xff] %vm373, %v1346
      %v1379 = vsel %vm373, %v1315, 0.0
      %v1380 = vsel %vm373, %v1316, 0.0
      %v1381 = vadd.f32 %v1379, %v1380
      %v1382 = vrot.slane %v1381, 4
      %v1383 = vadd.f32 %v1381, %v1382
      %v1384 = vrot.slane %v1383, 2
      %v1385 = vadd.f32 %v1383, %v1384
      %v1386 = vrot.slane %v1385, 1
      %v1387 = vadd.f32 %v1385, %v1386
      %v1388 = vsel %vm373, %v1317, 0.0
      %v1389 = vsel %vm373, %v1318, 0.0
      %v1390 = vadd.f32 %v1388, %v1389
      %v1391 = vrot.slane %v1390, 4
      %v1392 = vadd.f32 %v1390, %v1391
      %v1393 = vrot.slane %v1392, 2
      %v1394 = vadd.f32 %v1392, %v1393
      %v1395 = vrot.slane %v1394, 1
      %v1396 = vadd.f32 %v1394, %v1395
      %v1397 = vsel %vm373, %v1319, 0.0
      %v1398 = vsel %vm373, %v1320, 0.0
      %v1399 = vadd.f32 %v1397, %v1398
      %v1400 = vrot.slane %v1399, 4
      %v1401 = vadd.f32 %v1399, %v1400
      %v1402 = vrot.slane %v1401, 2
      %v1403 = vadd.f32 %v1401, %v1402
      %v1404 = vrot.slane %v1403, 1
      %v1405 = vadd.f32 %v1403, %v1404
      %v1406 = vsel %vm373, %v1321, 0.0
      %v1407 = vsel %vm373, %v1322, 0.0
      %v1408 = vadd.f32 %v1406, %v1407
      %v1409 = vrot.slane %v1408, 4
      %v1410 = vadd.f32 %v1408, %v1409
      %v1411 = vrot.slane %v1410, 2
      %v1412 = vadd.f32 %v1410, %v1411
      %v1413 = vrot.slane %v1412, 1
      %v1414 = vadd.f32 %v1412, %v1413
      %v1415 = vsel %vm373, %v1323, 0.0
      %v1416 = vsel %vm373, %v1324, 0.0
      %v1417 = vadd.f32 %v1415, %v1416
      %v1418 = vrot.slane %v1417, 4
      %v1419 = vadd.f32 %v1417, %v1418
      %v1420 = vrot.slane %v1419, 2
      %v1421 = vadd.f32 %v1419, %v1420
      %v1422 = vrot.slane %v1421, 1
      %v1423 = vadd.f32 %v1421, %v1422
      %v1424 = vsel %vm373, %v1325, 0.0
      %v1425 = vsel %vm373, %v1326, 0.0
      %v1426 = vadd.f32 %v1424, %v1425
      %v1427 = vrot.slane %v1426, 4
      %v1428 = vadd.f32 %v1426, %v1427
      %v1429 = vrot.slane %v1428, 2
      %v1430 = vadd.f32 %v1428, %v1429
      %v1431 = vrot.slane %v1430, 1
      %v1432 = vadd.f32 %v1430, %v1431
      %v1433 = vsel %vm373, %v1327, 0.0
      %v1434 = vsel %vm373, %v1328, 0.0
      %v1435 = vadd.f32 %v1433, %v1434
      %v1436 = vrot.slane %v1435, 4
      %v1437 = vadd.f32 %v1435, %v1436
      %v1438 = vrot.slane %v1437, 2
      %v1439 = vadd.f32 %v1437, %v1438
      %v1440 = vrot.slane %v1439, 1
      %v1441 = vadd.f32 %v1439, %v1440
      %v1442 = vsel %vm373, %v1329, 0.0
      %v1443 = vsel %vm373, %v1330, 0.0
      %v1444 = vadd.f32 %v1442, %v1443
      %v1445 = vrot.slane %v1444, 4
      %v1446 = vadd.f32 %v1444, %v1445
      %v1447 = vrot.slane %v1446, 2
      %v1448 = vadd.f32 %v1446, %v1447
      %v1449 = vrot.slane %v1448, 1
      %v1450 = vadd.f32 %v1448, %v1449
      %v1451 = vsel %vm373, %v1331, 0.0
      %v1452 = vsel %vm373, %v1332, 0.0
      %v1453 = vadd.f32 %v1451, %v1452
      %v1454 = vrot.slane %v1453, 4
      %v1455 = vadd.f32 %v1453, %v1454
      %v1456 = vrot.slane %v1455, 2
      %v1457 = vadd.f32 %v1455, %v1456
      %v1458 = vrot.slane %v1457, 1
      %v1459 = vadd.f32 %v1457, %v1458
      %v1460 = vsel %vm373, %v1333, 0.0
      %v1461 = vsel %vm373, %v1334, 0.0
      %v1462 = vadd.f32 %v1460, %v1461
      %v1463 = vrot.slane %v1462, 4
      %v1464 = vadd.f32 %v1462, %v1463
      %v1465 = vrot.slane %v1464, 2
      %v1466 = vadd.f32 %v1464, %v1465
      %v1467 = vrot.slane %v1466, 1
      %v1468 = vadd.f32 %v1466, %v1467
      %v1469 = vsel %vm373, %v1335, 0.0
      %v1470 = vsel %vm373, %v1336, 0.0
      %v1471 = vadd.f32 %v1469, %v1470
      %v1472 = vrot.slane %v1471, 4
      %v1473 = vadd.f32 %v1471, %v1472
      %v1474 = vrot.slane %v1473, 2
      %v1475 = vadd.f32 %v1473, %v1474
      %v1476 = vrot.slane %v1475, 1
      %v1477 = vadd.f32 %v1475, %v1476
      %v1478 = vsel %vm373, %v1337, 0.0
      %v1479 = vsel %vm373, %v1338, 0.0
      %v1480 = vadd.f32 %v1478, %v1479
      %v1481 = vrot.slane %v1480, 4
      %v1482 = vadd.f32 %v1480, %v1481
      %v1483 = vrot.slane %v1482, 2
      %v1484 = vadd.f32 %v1482, %v1483
      %v1485 = vrot.slane %v1484, 1
      %v1486 = vadd.f32 %v1484, %v1485
      %v1487 = vsel %vm373, %v1339, 0.0
      %v1488 = vsel %vm373, %v1340, 0.0
      %v1489 = vadd.f32 %v1487, %v1488
      %v1490 = vrot.slane %v1489, 4
      %v1491 = vadd.f32 %v1489, %v1490
      %v1492 = vrot.slane %v1491, 2
      %v1493 = vadd.f32 %v1491, %v1492
      %v1494 = vrot.slane %v1493, 1
      %v1495 = vadd.f32 %v1493, %v1494
      %v1496 = vsel %vm373, %v1341, 0.0
      %v1497 = vsel %vm373, %v1342, 0.0
      %v1498 = vadd.f32 %v1496, %v1497
      %v1499 = vrot.slane %v1498, 4
      %v1500 = vadd.f32 %v1498, %v1499
      %v1501 = vrot.slane %v1500, 2
      %v1502 = vadd.f32 %v1500, %v1501
      %v1503 = vrot.slane %v1502, 1
      %v1504 = vadd.f32 %v1502, %v1503
      %v1505 = vsel %vm373, %v1343, 0.0
      %v1506 = vsel %vm373, %v1344, 0.0
      %v1507 = vadd.f32 %v1505, %v1506
      %v1508 = vrot.slane %v1507, 4
      %v1509 = vadd.f32 %v1507, %v1508
      %v1510 = vrot.slane %v1509, 2
      %v1511 = vadd.f32 %v1509, %v1510
      %v1512 = vrot.slane %v1511, 1
      %v1513 = vadd.f32 %v1511, %v1512
      %v1514 = vsel %vm373, %v1345, 0.0
      %v1515 = vsel %vm373, %v1346, 0.0
      %v1516 = vadd.f32 %v1514, %v1515
      %v1517 = vrot.slane %v1516, 4
      %v1518 = vadd.f32 %v1516, %v1517
      %v1519 = vrot.slane %v1518, 2
      %v1520 = vadd.f32 %v1518, %v1519
      %v1521 = vrot.slane %v1520, 1
      %v1522 = vadd.f32 %v1520, %v1521
      %v1523 = vsel %vm373, %v1387, 0.0
      %v1524 = vsel %vm373, %v1396, 0.0
      %v1525 = vadd.f32 %v1523, %v1524
      %v1526 = vsel %vm373, %v1405, 0.0
      %v1527 = vadd.f32 %v1525, %v1526
      %v1528 = vsel %vm373, %v1414, 0.0
      %v1529 = vadd.f32 %v1527, %v1528
      %v1530 = vsel %vm373, %v1423, 0.0
      %v1531 = vadd.f32 %v1529, %v1530
      %v1532 = vsel %vm373, %v1432, 0.0
      %v1533 = vadd.f32 %v1531, %v1532
      %v1534 = vsel %vm373, %v1441, 0.0
      %v1535 = vadd.f32 %v1533, %v1534
      %v1536 = vsel %vm373, %v1450, 0.0
      %v1537 = vadd.f32 %v1535, %v1536
      %v1538 = vsel %vm373, %v1459, 0.0
      %v1539 = vadd.f32 %v1537, %v1538
      %v1540 = vsel %vm373, %v1468, 0.0
      %v1541 = vadd.f32 %v1539, %v1540
      %v1542 = vsel %vm373, %v1477, 0.0
      %v1543 = vadd.f32 %v1541, %v1542
      %v1544 = vsel %vm373, %v1486, 0.0
      %v1545 = vadd.f32 %v1543, %v1544
      %v1546 = vsel %vm373, %v1495, 0.0
      %v1547 = vadd.f32 %v1545, %v1546
      %v1548 = vsel %vm373, %v1504, 0.0
      %v1549 = vadd.f32 %v1547, %v1548
      %v1550 = vsel %vm373, %v1513, 0.0
      %v1551 = vadd.f32 %v1549, %v1550
      %v1552 = vsel %vm373, %v1522, 0.0
      %v1553 = vadd.f32 %v1551, %v1552
      %v1554 = vmul.f32 %v1315, %v1315
      %v1555 = vmul.f32 %v1316, %v1316
      %v1556 = vmul.f32 %v1317, %v1317
      %v1557 = vmul.f32 %v1318, %v1318
      %v1558 = vmul.f32 %v1319, %v1319
      %v1559 = vmul.f32 %v1320, %v1320
      %v1560 = vmul.f32 %v1321, %v1321
      %v1561 = vmul.f32 %v1322, %v1322
      %v1562 = vmul.f32 %v1323, %v1323
      %v1563 = vmul.f32 %v1324, %v1324
      %v1564 = vmul.f32 %v1325, %v1325
      %v1565 = vmul.f32 %v1326, %v1326
      %v1566 = vmul.f32 %v1327, %v1327
      %v1567 = vmul.f32 %v1328, %v1328
      %v1568 = vmul.f32 %v1329, %v1329
      %v1569 = vmul.f32 %v1330, %v1330
      %v1570 = vmul.f32 %v1331, %v1331
      %v1571 = vmul.f32 %v1332, %v1332
      %v1572 = vmul.f32 %v1333, %v1333
      %v1573 = vmul.f32 %v1334, %v1334
      %v1574 = vmul.f32 %v1335, %v1335
      %v1575 = vmul.f32 %v1336, %v1336
      %v1576 = vmul.f32 %v1337, %v1337
      %v1577 = vmul.f32 %v1338, %v1338
      %v1578 = vmul.f32 %v1339, %v1339
      %v1579 = vmul.f32 %v1340, %v1340
      %v1580 = vmul.f32 %v1341, %v1341
      %v1581 = vmul.f32 %v1342, %v1342
      %v1582 = vmul.f32 %v1343, %v1343
      %v1583 = vmul.f32 %v1344, %v1344
      %v1584 = vmul.f32 %v1345, %v1345
      %v1585 = vmul.f32 %v1346, %v1346
      %v1586 = vsel %vm373, %v1554, 0.0
      %v1587 = vsel %vm373, %v1555, 0.0
      %v1588 = vadd.f32 %v1586, %v1587
      %v1589 = vrot.slane %v1588, 4
      %v1590 = vadd.f32 %v1588, %v1589
      %v1591 = vrot.slane %v1590, 2
      %v1592 = vadd.f32 %v1590, %v1591
      %v1593 = vrot.slane %v1592, 1
      %v1594 = vadd.f32 %v1592, %v1593
      %v1595 = vsel %vm373, %v1556, 0.0
      %v1596 = vsel %vm373, %v1557, 0.0
      %v1597 = vadd.f32 %v1595, %v1596
      %v1598 = vrot.slane %v1597, 4
      %v1599 = vadd.f32 %v1597, %v1598
      %v1600 = vrot.slane %v1599, 2
      %v1601 = vadd.f32 %v1599, %v1600
      %v1602 = vrot.slane %v1601, 1
      %v1603 = vadd.f32 %v1601, %v1602
      %v1604 = vsel %vm373, %v1558, 0.0
      %v1605 = vsel %vm373, %v1559, 0.0
      %v1606 = vadd.f32 %v1604, %v1605
      %v1607 = vrot.slane %v1606, 4
      %v1608 = vadd.f32 %v1606, %v1607
      %v1609 = vrot.slane %v1608, 2
      %v1610 = vadd.f32 %v1608, %v1609
      %v1611 = vrot.slane %v1610, 1
      %v1612 = vadd.f32 %v1610, %v1611
      %v1613 = vsel %vm373, %v1560, 0.0
      %v1614 = vsel %vm373, %v1561, 0.0
      %v1615 = vadd.f32 %v1613, %v1614
      %v1616 = vrot.slane %v1615, 4
      %v1617 = vadd.f32 %v1615, %v1616
      %v1618 = vrot.slane %v1617, 2
      %v1619 = vadd.f32 %v1617, %v1618
      %v1620 = vrot.slane %v1619, 1
      %v1621 = vadd.f32 %v1619, %v1620
      %v1622 = vsel %vm373, %v1562, 0.0
      %v1623 = vsel %vm373, %v1563, 0.0
      %v1624 = vadd.f32 %v1622, %v1623
      %v1625 = vrot.slane %v1624, 4
      %v1626 = vadd.f32 %v1624, %v1625
      %v1627 = vrot.slane %v1626, 2
      %v1628 = vadd.f32 %v1626, %v1627
      %v1629 = vrot.slane %v1628, 1
      %v1630 = vadd.f32 %v1628, %v1629
      %v1631 = vsel %vm373, %v1564, 0.0
      %v1632 = vsel %vm373, %v1565, 0.0
      %v1633 = vadd.f32 %v1631, %v1632
      %v1634 = vrot.slane %v1633, 4
      %v1635 = vadd.f32 %v1633, %v1634
      %v1636 = vrot.slane %v1635, 2
      %v1637 = vadd.f32 %v1635, %v1636
      %v1638 = vrot.slane %v1637, 1
      %v1639 = vadd.f32 %v1637, %v1638
      %v1640 = vsel %vm373, %v1566, 0.0
      %v1641 = vsel %vm373, %v1567, 0.0
      %v1642 = vadd.f32 %v1640, %v1641
      %v1643 = vrot.slane %v1642, 4
      %v1644 = vadd.f32 %v1642, %v1643
      %v1645 = vrot.slane %v1644, 2
      %v1646 = vadd.f32 %v1644, %v1645
      %v1647 = vrot.slane %v1646, 1
      %v1648 = vadd.f32 %v1646, %v1647
      %v1649 = vsel %vm373, %v1568, 0.0
      %v1650 = vsel %vm373, %v1569, 0.0
      %v1651 = vadd.f32 %v1649, %v1650
      %v1652 = vrot.slane %v1651, 4
      %v1653 = vadd.f32 %v1651, %v1652
      %v1654 = vrot.slane %v1653, 2
      %v1655 = vadd.f32 %v1653, %v1654
      %v1656 = vrot.slane %v1655, 1
      %v1657 = vadd.f32 %v1655, %v1656
      %v1658 = vsel %vm373, %v1570, 0.0
      %v1659 = vsel %vm373, %v1571, 0.0
      %v1660 = vadd.f32 %v1658, %v1659
      %v1661 = vrot.slane %v1660, 4
      %v1662 = vadd.f32 %v1660, %v1661
      %v1663 = vrot.slane %v1662, 2
      %v1664 = vadd.f32 %v1662, %v1663
      %v1665 = vrot.slane %v1664, 1
      %v1666 = vadd.f32 %v1664, %v1665
      %v1667 = vsel %vm373, %v1572, 0.0
      %v1668 = vsel %vm373, %v1573, 0.0
      %v1669 = vadd.f32 %v1667, %v1668
      %v1670 = vrot.slane %v1669, 4
      %v1671 = vadd.f32 %v1669, %v1670
      %v1672 = vrot.slane %v1671, 2
      %v1673 = vadd.f32 %v1671, %v1672
      %v1674 = vrot.slane %v1673, 1
      %v1675 = vadd.f32 %v1673, %v1674
      %v1676 = vsel %vm373, %v1574, 0.0
      %v1677 = vsel %vm373, %v1575, 0.0
      %v1678 = vadd.f32 %v1676, %v1677
      %v1679 = vrot.slane %v1678, 4
      %v1680 = vadd.f32 %v1678, %v1679
      %v1681 = vrot.slane %v1680, 2
      %v1682 = vadd.f32 %v1680, %v1681
      %v1683 = vrot.slane %v1682, 1
      %v1684 = vadd.f32 %v1682, %v1683
      %v1685 = vsel %vm373, %v1576, 0.0
      %v1686 = vsel %vm373, %v1577, 0.0
      %v1687 = vadd.f32 %v1685, %v1686
      %v1688 = vrot.slane %v1687, 4
      %v1689 = vadd.f32 %v1687, %v1688
      %v1690 = vrot.slane %v1689, 2
      %v1691 = vadd.f32 %v1689, %v1690
      %v1692 = vrot.slane %v1691, 1
      %v1693 = vadd.f32 %v1691, %v1692
      %v1694 = vsel %vm373, %v1578, 0.0
      %v1695 = vsel %vm373, %v1579, 0.0
      %v1696 = vadd.f32 %v1694, %v1695
      %v1697 = vrot.slane %v1696, 4
      %v1698 = vadd.f32 %v1696, %v1697
      %v1699 = vrot.slane %v1698, 2
      %v1700 = vadd.f32 %v1698, %v1699
      %v1701 = vrot.slane %v1700, 1
      %v1702 = vadd.f32 %v1700, %v1701
      %v1703 = vsel %vm373, %v1580, 0.0
      %v1704 = vsel %vm373, %v1581, 0.0
      %v1705 = vadd.f32 %v1703, %v1704
      %v1706 = vrot.slane %v1705, 4
      %v1707 = vadd.f32 %v1705, %v1706
      %v1708 = vrot.slane %v1707, 2
      %v1709 = vadd.f32 %v1707, %v1708
      %v1710 = vrot.slane %v1709, 1
      %v1711 = vadd.f32 %v1709, %v1710
      %v1712 = vsel %vm373, %v1582, 0.0
      %v1713 = vsel %vm373, %v1583, 0.0
      %v1714 = vadd.f32 %v1712, %v1713
      %v1715 = vrot.slane %v1714, 4
      %v1716 = vadd.f32 %v1714, %v1715
      %v1717 = vrot.slane %v1716, 2
      %v1718 = vadd.f32 %v1716, %v1717
      %v1719 = vrot.slane %v1718, 1
      %v1720 = vadd.f32 %v1718, %v1719
      %v1721 = vsel %vm373, %v1584, 0.0
      %v1722 = vsel %vm373, %v1585, 0.0
      %v1723 = vadd.f32 %v1721, %v1722
      %v1724 = vrot.slane %v1723, 4
      %v1725 = vadd.f32 %v1723, %v1724
      %v1726 = vrot.slane %v1725, 2
      %v1727 = vadd.f32 %v1725, %v1726
      %v1728 = vrot.slane %v1727, 1
      %v1729 = vadd.f32 %v1727, %v1728
      %v1730 = vsel %vm373, %v1594, 0.0
      %v1731 = vsel %vm373, %v1603, 0.0
      %v1732 = vadd.f32 %v1730, %v1731
      %v1733 = vsel %vm373, %v1612, 0.0
      %v1734 = vadd.f32 %v1732, %v1733
      %v1735 = vsel %vm373, %v1621, 0.0
      %v1736 = vadd.f32 %v1734, %v1735
      %v1737 = vsel %vm373, %v1630, 0.0
      %v1738 = vadd.f32 %v1736, %v1737
      %v1739 = vsel %vm373, %v1639, 0.0
      %v1740 = vadd.f32 %v1738, %v1739
      %v1741 = vsel %vm373, %v1648, 0.0
      %v1742 = vadd.f32 %v1740, %v1741
      %v1743 = vsel %vm373, %v1657, 0.0
      %v1744 = vadd.f32 %v1742, %v1743
      %v1745 = vsel %vm373, %v1666, 0.0
      %v1746 = vadd.f32 %v1744, %v1745
      %v1747 = vsel %vm373, %v1675, 0.0
      %v1748 = vadd.f32 %v1746, %v1747
      %v1749 = vsel %vm373, %v1684, 0.0
      %v1750 = vadd.f32 %v1748, %v1749
      %v1751 = vsel %vm373, %v1693, 0.0
      %v1752 = vadd.f32 %v1750, %v1751
      %v1753 = vsel %vm373, %v1702, 0.0
      %v1754 = vadd.f32 %v1752, %v1753
      %v1755 = vsel %vm373, %v1711, 0.0
      %v1756 = vadd.f32 %v1754, %v1755
      %v1757 = vsel %vm373, %v1720, 0.0
      %v1758 = vadd.f32 %v1756, %v1757
      %v1759 = vsel %vm373, %v1729, 0.0
      %v1760 = vadd.f32 %v1758, %v1759
      %vm1761 = vcmask 188416
      %1762 = vst.msk [vmem:[%s208] sm:$0x1] %vm1761, %v1553
      %1763 = vst.msk [vmem:[%s208 + $0x1] sm:$0x1] %vm1761, %v1760
      %p1764 = scmp.lt.s32.totalorder %s16, 1
      %s1765 = scalar_select %p1764, %s16, 1
      %s1766 = smul.addr %s1765, 32
      %s1767 = smul.addr %s1766, 8
      %s1768 = scalar_lea.vmem %s3, %s1767
      %p1769 = scmp.lt.s32.totalorder %s16, 1
      %s1770 = scalar_select %p1769, %s16, 1
      %s1771 = smul.addr %s1770, 2
      %s1772 = scalar_lea.vmem %s4, %s1771
      // Predicated region
      $region33: #{linear_bottleneck_forward.5} parent=31 // pred_check
        %p1773 = pneg %p102
      $region34: #{linear_bottleneck_forward.5} parent=31 // pred_check_branch
        %1775 = sbr.rel (%p1773) target = $region36
      $region35: #{linear_bottleneck_forward.5} parent=31 // pred_region
        _
      $region36: #{linear_bottleneck_forward.5} parent=31 // pred_fallthru
        _
      // Predicated region
      $region37: #{linear_bottleneck_forward.5} parent=31 // pred_check
        %p1776 = pneg %p128
      $region38: #{linear_bottleneck_forward.5} parent=31 // pred_check_branch
        %1778 = sbr.rel (%p1776) target = $region40
      $region39: #{linear_bottleneck_forward.5} parent=31 // pred_region
        _
      $region40: #{linear_bottleneck_forward.5} parent=31 // pred_fallthru
        _
    $region32: #{linear_bottleneck_forward.5} parent=5 // pred_fallthru
      _
    %p1779 = scmp.le.s32.totalorder 2, %s11
    // Predicated region
    $region41: #{linear_bottleneck_forward.5} parent=5 // pred_check
      %p1780 = pneg %p1779
    $region42: #{linear_bottleneck_forward.5} parent=5 // pred_check_branch
      %1782 = sbr.rel (%p1780) target = $region44
    $region43: #{linear_bottleneck_forward.5} parent=5 // pred_region
      %s1783 = ssub.s32 %s11, 2
      // Predicated region
      $region45: #{linear_bottleneck_forward.5} parent=43 // pred_check
        %p1784 = pneg %p108
      $region46: #{linear_bottleneck_forward.5} parent=43 // pred_check_branch
        %1786 = sbr.rel (%p1784) target = $region48
      $region47: #{linear_bottleneck_forward.5} parent=43 // pred_region
        %p1787 = scmp.lt.s32.totalorder %s17, 1
        %s1788 = scalar_select %p1787, %s17, 1
        %s1789 = smul.addr %s1788, 32
        %s1790 = smul.addr %s1789, 8
        %s1791 = scalar_lea.vmem %s3, %s1790
      $region48: #{linear_bottleneck_forward.5} parent=43 // pred_fallthru
        _
      // Predicated region
      $region49: #{linear_bottleneck_forward.5} parent=43 // pred_check
        %p1792 = pneg %p134
      $region50: #{linear_bottleneck_forward.5} parent=43 // pred_check_branch
        %1794 = sbr.rel (%p1792) target = $region52
      $region51: #{linear_bottleneck_forward.5} parent=43 // pred_region
        %p1795 = scmp.lt.s32.totalorder %s17, 1
        %s1796 = scalar_select %p1795, %s17, 1
        %s1797 = smul.addr %s1796, 2
        %s1798 = scalar_lea.vmem %s4, %s1797
      $region52: #{linear_bottleneck_forward.5} parent=43 // pred_fallthru
        _
    $region44: #{linear_bottleneck_forward.5} parent=5 // pred_fallthru
      _
  $region6: #{linear_bottleneck_forward.5} parent=0 // loop_footer
    %s15 = sadd.s32 1, %s11
  $region7: #{linear_bottleneck_forward.5} parent=0 // loop_footer_branch
    %10 = sbr.rel target = $region3
  $region8: #{linear_bottleneck_forward.5} parent=0 // loop_exit
    _

</llo_original>
